<compile_context>
chip_gen: v7x
topology: tpu7x:2x2x1
jax: 0.10.0
libtpu: 0.0.40
codegen_flags: <defaults>
</compile_context>

<pallas_src>
import numpy as np
import jax
import jax.numpy as jnp
from jax.experimental import pallas as pl
from jax.experimental.pallas import tpu as pltpu

CH1, CH2, CH3 = 64, 128, 256  # fixed by the PyTorch module


def make_stgcn_kernel(T, V, Bp):
    TV = T * V
    ROWS = Bp * TV

    def kernel(x_ref, gs_ref, mp_ref, mn_ref,
               w1_ref, b1_ref, tw1_ref, tb1_ref,
               w2_ref, b2_ref, tw2_ref, tb2_ref,
               w3_ref, b3_ref, tw3_ref, tb3_ref,
               out_ref):
        gs = gs_ref[...]            # (ROWS, 1) f32   per-node graph scale (A column-sum)
        mp = mp_ref[...]            # (ROWS, 1) bf16  1 where a valid t-1 row exists
        mn = mn_ref[...]            # (ROWS, 1) bf16  1 where a valid t+1 row exists

        def block(y, w_ref, b_ref, tw_ref, tb_ref):
            # GraphConv: einsum('vw,bctw->bctw', A, x) == per-node column-sum scale,
            # then the 1x1 conv == channel matmul (+ bias); bf16 operands, f32 acc.
            yb = (y * gs).astype(jnp.bfloat16)
            h = jnp.dot(yb, w_ref[...], preferred_element_type=jnp.float32) + b_ref[...]
            hb = h.astype(jnp.bfloat16)                 # cast once per layer
            # Temporal +/-1 time shifts: roll by one time step (V rows) and zero the
            # rows with no valid neighbour (sequence ends / batch boundaries) using the
            # precomputed 0/1 masks.  jnp.roll == two aligned row slices + concat;
            # (pltpu.roll only accepts non-negative shifts and could replace this
            #  to put the shift on the XLU when compiled).
            h_prev = jnp.roll(hb, V, axis=0) * mp       # value at t-1
            h_next = jnp.roll(hb, -V, axis=0) * mn      # value at t+1
            # Temporal conv kernel_size=(3,1), padding=(1,0): ONE fused matmul with
            # K = 3*C against the (3*C, Cout) weight (no per-tap dots / VPU adds).
            h_cat = jnp.concatenate([h_prev, hb, h_next], axis=1)
            z = (jnp.dot(h_cat, tw_ref[...], preferred_element_type=jnp.float32)
                 + tb_ref[...])
            return jnp.maximum(z, 0.0)                  # ReLU

        y = x_ref[...]
        y = block(y, w1_ref, b1_ref, tw1_ref, tb1_ref)  # Cin (padded to 8) -> 64
        y = block(y, w2_ref, b2_ref, tw2_ref, tb2_ref)  # 64  -> 128
        y = block(y, w3_ref, b3_ref, tw3_ref, tb3_ref)  # 128 -> 256

        # Head (in-kernel part): sum over T only — the 1/T mean and the FC run in the
        # wrapper, keeping this output block lane-dense (last dim 256, no masked vst).
        out_ref[...] = jnp.sum(y.reshape(Bp, T, V, CH3), axis=1)

    return kernel


def _programs_for_batch(B):
    """Batch-parallel grid only pays off on v7x (2 TensorCores per chip)."""
    try:
        kind = jax.devices()[0].device_kind.lower()
    except Exception:  # pragma: no cover - device query is best-effort
        kind = ""
    n_tc = 2 if "v7" in kind else 1
    return n_tc if (n_tc > 1 and B % n_tc == 0) else 1


def stgcn_pallas(x_nchw, params, programs=None):
    B, Cin, T, V = x_nchw.shape
    NC = params["FCB"].shape[0]
    TV = T * V
    cin_pad = ((Cin + 7) // 8) * 8

    G = _programs_for_batch(B) if programs is None else programs
    assert B % G == 0, "number of programs must divide the batch"
    Bp = B // G
    ROWS = Bp * TV

    # activations -> kernel layout (B*T*V, cin_pad): rows (batch, time, node),
    # channels on the 128-lane minor axis
    x2 = jnp.transpose(x_nchw, (0, 2, 3, 1)).reshape(B * TV, Cin)
    x2 = jnp.pad(x2, ((0, 0), (0, cin_pad - Cin)))

    # per-row graph scale (A column sum per node) and temporal-shift validity masks;
    # identical for every program since the (batch, time, node) row pattern repeats.
    colsum = params["A"].sum(axis=0)                    # (V,)
    gscale = jnp.tile(colsum, Bp * T).reshape(ROWS, 1)
    t_idx = (jnp.arange(ROWS) // V) % T
    m_prev = (t_idx > 0).astype(jnp.bfloat16).reshape(ROWS, 1)
    m_next = (t_idx < T - 1).astype(jnp.bfloat16).reshape(ROWS, 1)

    def conv1x1(Wpt, bpt, cin_p=None):                  # Wpt: (Cout, Cin)
        w = Wpt.T
        if cin_p is not None:
            w = jnp.pad(w, ((0, cin_p - w.shape[0]), (0, 0)))
        return w.astype(jnp.bfloat16), bpt.reshape(1, -1)

    def tconv(Wpt, bpt):                                # Wpt: (Cout, Cin, 3) -> (3*Cin, Cout)
        cout, cin, _ = Wpt.shape
        w = jnp.transpose(Wpt, (2, 1, 0)).reshape(3 * cin, cout)   # rows: k*Cin + cin
        return w.astype(jnp.bfloat16), bpt.reshape(1, -1)

    w1, b1 = conv1x1(params["W1"], params["b1"], cin_pad)
    w2, b2 = conv1x1(params["W2"], params["b2"])
    w3, b3 = conv1x1(params["W3"], params["b3"])
    tw1, tb1 = tconv(params["TW1"], params["tb1"])
    tw2, tb2 = tconv(params["TW2"], params["tb2"])
    tw3, tb3 = tconv(params["TW3"], params["tb3"])

    weights = [w1, b1, tw1, tb1, w2, b2, tw2, tb2, w3, b3, tw3, tb3]

    def resident(a):                                    # whole array, same block every step
        nd = a.ndim
        return pl.BlockSpec(a.shape, lambda g: (0,) * nd)

    in_specs = ([pl.BlockSpec((ROWS, cin_pad), lambda g: (g, 0)),   # per-program batch slab
                 pl.BlockSpec((ROWS, 1), lambda g: (0, 0)),         # graph scale
                 pl.BlockSpec((ROWS, 1), lambda g: (0, 0)),         # t-1 validity mask
                 pl.BlockSpec((ROWS, 1), lambda g: (0, 0))]         # t+1 validity mask
                + [resident(a) for a in weights])

    hsum = pl.pallas_call(
        make_stgcn_kernel(T, V, Bp),
        grid=(G,),
        out_shape=jax.ShapeDtypeStruct((B, V, CH3), jnp.float32),
        in_specs=in_specs,
        out_specs=pl.BlockSpec((Bp, V, CH3), lambda g: (g, 0, 0)),
        compiler_params=pltpu.CompilerParams(
            dimension_semantics=("parallel",),          # v7x: shard batches across TCs
            vmem_limit_bytes=32 * 1024 * 1024),
    )(x2, gscale, m_prev, m_next, *weights)

    # FC head in the wrapper (lane-dense XLA GEMM).  The kernel emits the T-sum in
    # (batch, node, channel) order; PyTorch flattens (channel, node) before its fc,
    # so permute the FC weight accordingly and fold the 1/T mean scale into it.
    flat = hsum.reshape(B, V * CH3)                     # (v, c) flatten order
    fcw = (params["FCW"].reshape(NC, CH3, V).transpose(2, 1, 0).reshape(V * CH3, NC)
           * (1.0 / T))
    return flat @ fcw + params["FCB"]


def stgcn_reference(x, p):
    """Plain-JAX reference mirroring the PyTorch forward exactly (f32)."""
    B, Cin, T, V = x.shape
    colsum = p["A"].sum(axis=0)

    def gconv(x, Wpt, bpt):
        x = x * colsum[None, None, None, :]
        return jnp.einsum("oc,bctv->botv", Wpt, x) + bpt[None, :, None, None]

    def tconv(x, Wpt, bpt):
        xp = jnp.pad(x, ((0, 0), (0, 0), (1, 1), (0, 0)))
        out = (jnp.einsum("oc,bctv->botv", Wpt[:, :, 0], xp[:, :, 0:T])
               + jnp.einsum("oc,bctv->botv", Wpt[:, :, 1], xp[:, :, 1:T + 1])
               + jnp.einsum("oc,bctv->botv", Wpt[:, :, 2], xp[:, :, 2:T + 2])
               + bpt[None, :, None, None])
        return jax.nn.relu(out)

    x = gconv(x, p["W1"], p["b1"]); x = tconv(x, p["TW1"], p["tb1"])
    x = gconv(x, p["W2"], p["b2"]); x = tconv(x, p["TW2"], p["tb2"])
    x = gconv(x, p["W3"], p["b3"]); x = tconv(x, p["TW3"], p["tb3"])
    h = x.mean(axis=2).reshape(B, -1)   # (B, C*V) channel-major, like torch .view
    return h @ p["FCW"].T + p["FCB"]


def init_params(key, Cin, V, NC):
    ks = jax.random.split(key, 14)

    def u(k, shape, fan_in):
        bound = 1.0 / np.sqrt(fan_in)
        return jax.random.uniform(k, shape, jnp.float32, -bound, bound)

    p = {"A": jnp.eye(V, dtype=jnp.float32)}            # STGCN uses A = eye(num_nodes)
    p["W1"], p["b1"] = u(ks[0], (CH1, Cin), Cin), u(ks[1], (CH1,), Cin)
    p["TW1"], p["tb1"] = u(ks[2], (CH1, CH1, 3), CH1 * 3), u(ks[3], (CH1,), CH1 * 3)
    p["W2"], p["b2"] = u(ks[4], (CH2, CH1), CH1), u(ks[5], (CH2,), CH1)
    p["TW2"], p["tb2"] = u(ks[6], (CH2, CH2, 3), CH2 * 3), u(ks[7], (CH2,), CH2 * 3)
    p["W3"], p["b3"] = u(ks[8], (CH3, CH2), CH2), u(ks[9], (CH3,), CH2)
    p["TW3"], p["tb3"] = u(ks[10], (CH3, CH3, 3), CH3 * 3), u(ks[11], (CH3,), CH3 * 3)
    p["FCW"] = u(ks[12], (NC, CH3 * V), CH3 * V)
    p["FCB"] = u(ks[13], (NC,), CH3 * V)
    return p


if __name__ == "__main__":
    # Small shapes: STGCN(in_channels=3, num_nodes=16, num_classes=10, num_frames=8)
    B, Cin, T, V, NC = 2, 3, 8, 16, 10
    key = jax.random.PRNGKey(0)
    kx, kp = jax.random.split(key)
    x = jax.random.normal(kx, (B, Cin, T, V), jnp.float32)   # NCHW like the PyTorch module
    params = init_params(kp, Cin, V, NC)

    out = jax.jit(stgcn_pallas)(x, params)
    out = jax.block_until_ready(out)

    ref = stgcn_reference(x, params)
    # kernel matmul operands are bf16 (f32 accumulation); tolerance reflects that
    if not jnp.allclose(out, ref, atol=2e-2, rtol=2e-2):
        raise AssertionError(
            f"mismatch vs reference, max abs err = {float(jnp.max(jnp.abs(out - ref)))}")
    print("KERNEL_OK")
</pallas_src>

<mosaic_0001>
module attributes {stable_mosaic.version = 11 : i64} {
  func.func @kernel(%arg0: i32, %arg1: memref<256x8xf32, #tpu.memory_space<vmem>>, %arg2: memref<256x1xf32, #tpu.memory_space<vmem>>, %arg3: memref<256x1xbf16, #tpu.memory_space<vmem>>, %arg4: memref<256x1xbf16, #tpu.memory_space<vmem>>, %arg5: memref<8x64xbf16, #tpu.memory_space<vmem>>, %arg6: memref<1x64xf32, #tpu.memory_space<vmem>>, %arg7: memref<192x64xbf16, #tpu.memory_space<vmem>>, %arg8: memref<1x64xf32, #tpu.memory_space<vmem>>, %arg9: memref<64x128xbf16, #tpu.memory_space<vmem>>, %arg10: memref<1x128xf32, #tpu.memory_space<vmem>>, %arg11: memref<384x128xbf16, #tpu.memory_space<vmem>>, %arg12: memref<1x128xf32, #tpu.memory_space<vmem>>, %arg13: memref<128x256xbf16, #tpu.memory_space<vmem>>, %arg14: memref<1x256xf32, #tpu.memory_space<vmem>>, %arg15: memref<768x256xbf16, #tpu.memory_space<vmem>>, %arg16: memref<1x256xf32, #tpu.memory_space<vmem>>, %arg17: memref<2x16x256xf32, #tpu.memory_space<vmem>>) attributes {dimension_semantics = [#tpu.dimension_semantics<parallel>], iteration_bounds = array<i64: 1>, scalar_prefetch = 0 : i64, scratch_operands = 0 : i64, tpu.core_type = #tpu.core_type<tc>, window_params = [{transform_indices = @transform_0, window_bounds = array<i64: 256, 8>}, {pipeline_mode = #tpu.pipeline_mode<synchronous>, transform_indices = @transform_1, window_bounds = array<i64: 256, 1>}, {pipeline_mode = #tpu.pipeline_mode<synchronous>, transform_indices = @transform_2, window_bounds = array<i64: 256, 1>}, {pipeline_mode = #tpu.pipeline_mode<synchronous>, transform_indices = @transform_3, window_bounds = array<i64: 256, 1>}, {pipeline_mode = #tpu.pipeline_mode<synchronous>, transform_indices = @transform_4, window_bounds = array<i64: 8, 64>}, {pipeline_mode = #tpu.pipeline_mode<synchronous>, transform_indices = @transform_5, window_bounds = array<i64: 1, 64>}, {pipeline_mode = #tpu.pipeline_mode<synchronous>, transform_indices = @transform_6, window_bounds = array<i64: 192, 64>}, {pipeline_mode = #tpu.pipeline_mode<synchronous>, transform_indices = @transform_7, window_bounds = array<i64: 1, 64>}, {pipeline_mode = #tpu.pipeline_mode<synchronous>, transform_indices = @transform_8, window_bounds = array<i64: 64, 128>}, {pipeline_mode = #tpu.pipeline_mode<synchronous>, transform_indices = @transform_9, window_bounds = array<i64: 1, 128>}, {pipeline_mode = #tpu.pipeline_mode<synchronous>, transform_indices = @transform_10, window_bounds = array<i64: 384, 128>}, {pipeline_mode = #tpu.pipeline_mode<synchronous>, transform_indices = @transform_11, window_bounds = array<i64: 1, 128>}, {pipeline_mode = #tpu.pipeline_mode<synchronous>, transform_indices = @transform_12, window_bounds = array<i64: 128, 256>}, {pipeline_mode = #tpu.pipeline_mode<synchronous>, transform_indices = @transform_13, window_bounds = array<i64: 1, 256>}, {pipeline_mode = #tpu.pipeline_mode<synchronous>, transform_indices = @transform_14, window_bounds = array<i64: 768, 256>}, {pipeline_mode = #tpu.pipeline_mode<synchronous>, transform_indices = @transform_15, window_bounds = array<i64: 1, 256>}, {transform_indices = @transform_16, window_bounds = array<i64: 2, 16, 256>}]} {
    %c0 = arith.constant 0 : index
    %c0_0 = arith.constant 0 : index
    %0 = vector.load %arg2[%c0, %c0_0] : memref<256x1xf32, #tpu.memory_space<vmem>>, vector<256x1xf32>
    %c0_1 = arith.constant 0 : index
    %c0_2 = arith.constant 0 : index
    %1 = vector.load %arg3[%c0_1, %c0_2] : memref<256x1xbf16, #tpu.memory_space<vmem>>, vector<256x1xbf16>
    %c0_3 = arith.constant 0 : index
    %c0_4 = arith.constant 0 : index
    %2 = vector.load %arg4[%c0_3, %c0_4] : memref<256x1xbf16, #tpu.memory_space<vmem>>, vector<256x1xbf16>
    %c0_5 = arith.constant 0 : index
    %c0_6 = arith.constant 0 : index
    %3 = vector.load %arg1[%c0_5, %c0_6] : memref<256x8xf32, #tpu.memory_space<vmem>>, vector<256x8xf32>
    %4 = vector.broadcast %0 : vector<256x1xf32> to vector<256x8xf32>
    %5 = arith.mulf %3, %4 : vector<256x8xf32>
    %6 = arith.truncf %5 : vector<256x8xf32> to vector<256x8xbf16>
    %c0_7 = arith.constant 0 : index
    %c0_8 = arith.constant 0 : index
    %7 = vector.load %arg5[%c0_7, %c0_8] : memref<8x64xbf16, #tpu.memory_space<vmem>>, vector<8x64xbf16>
    %cst = arith.constant dense<0.000000e+00> : vector<256x64xf32>
    %8 = tpu.matmul %6, %7, %cst {dimension_numbers = #tpu.dot_dimension_numbers<[1], [0], [0], [1], [0, 0, 1, 1], [], []>} : vector<256x8xbf16>, vector<8x64xbf16>, vector<256x64xf32> -> vector<256x64xf32>
    %c0_9 = arith.constant 0 : index
    %c0_10 = arith.constant 0 : index
    %9 = vector.load %arg6[%c0_9, %c0_10] : memref<1x64xf32, #tpu.memory_space<vmem>>, vector<1x64xf32>
    %10 = vector.broadcast %9 : vector<1x64xf32> to vector<256x64xf32>
    %11 = arith.addf %8, %10 : vector<256x64xf32>
    %12 = arith.truncf %11 : vector<256x64xf32> to vector<256x64xbf16>
    %13 = vector.extract_strided_slice %12 {offsets = [240, 0], sizes = [16, 64], strides = [1, 1]} : vector<256x64xbf16> to vector<16x64xbf16>
    %14 = vector.extract_strided_slice %12 {offsets = [0, 0], sizes = [240, 64], strides = [1, 1]} : vector<256x64xbf16> to vector<240x64xbf16>
    %15 = tpu.concatenate %13, %14 in 0 : vector<16x64xbf16>, vector<240x64xbf16> -> vector<256x64xbf16>
    %16 = vector.broadcast %1 : vector<256x1xbf16> to vector<256x64xbf16>
    %17 = arith.mulf %15, %16 : vector<256x64xbf16>
    %18 = vector.extract_strided_slice %12 {offsets = [16, 0], sizes = [240, 64], strides = [1, 1]} : vector<256x64xbf16> to vector<240x64xbf16>
    %19 = vector.extract_strided_slice %12 {offsets = [0, 0], sizes = [16, 64], strides = [1, 1]} : vector<256x64xbf16> to vector<16x64xbf16>
    %20 = tpu.concatenate %18, %19 in 0 : vector<240x64xbf16>, vector<16x64xbf16> -> vector<256x64xbf16>
    %21 = vector.broadcast %2 : vector<256x1xbf16> to vector<256x64xbf16>
    %22 = arith.mulf %20, %21 : vector<256x64xbf16>
    %23 = tpu.concatenate %17, %12, %22 in 1 : vector<256x64xbf16>, vector<256x64xbf16>, vector<256x64xbf16> -> vector<256x192xbf16>
    %c0_11 = arith.constant 0 : index
    %c0_12 = arith.constant 0 : index
    %24 = vector.load %arg7[%c0_11, %c0_12] : memref<192x64xbf16, #tpu.memory_space<vmem>>, vector<192x64xbf16>
    %cst_13 = arith.constant dense<0.000000e+00> : vector<256x64xf32>
    %25 = tpu.matmul %23, %24, %cst_13 {dimension_numbers = #tpu.dot_dimension_numbers<[1], [0], [0], [1], [0, 0, 1, 1], [], []>} : vector<256x192xbf16>, vector<192x64xbf16>, vector<256x64xf32> -> vector<256x64xf32>
    %c0_14 = arith.constant 0 : index
    %c0_15 = arith.constant 0 : index
    %26 = vector.load %arg8[%c0_14, %c0_15] : memref<1x64xf32, #tpu.memory_space<vmem>>, vector<1x64xf32>
    %27 = vector.broadcast %26 : vector<1x64xf32> to vector<256x64xf32>
    %28 = arith.addf %25, %27 : vector<256x64xf32>
    %cst_16 = arith.constant 0.000000e+00 : f32
    %29 = vector.broadcast %cst_16 : f32 to vector<256x64xf32>
    %30 = arith.maximumf %28, %29 : vector<256x64xf32>
    %31 = vector.broadcast %0 : vector<256x1xf32> to vector<256x64xf32>
    %32 = arith.mulf %30, %31 : vector<256x64xf32>
    %33 = arith.truncf %32 : vector<256x64xf32> to vector<256x64xbf16>
    %c0_17 = arith.constant 0 : index
    %c0_18 = arith.constant 0 : index
    %34 = vector.load %arg9[%c0_17, %c0_18] : memref<64x128xbf16, #tpu.memory_space<vmem>>, vector<64x128xbf16>
    %cst_19 = arith.constant dense<0.000000e+00> : vector<256x128xf32>
    %35 = tpu.matmul %33, %34, %cst_19 {dimension_numbers = #tpu.dot_dimension_numbers<[1], [0], [0], [1], [0, 0, 1, 1], [], []>} : vector<256x64xbf16>, vector<64x128xbf16>, vector<256x128xf32> -> vector<256x128xf32>
    %c0_20 = arith.constant 0 : index
    %c0_21 = arith.constant 0 : index
    %36 = vector.load %arg10[%c0_20, %c0_21] : memref<1x128xf32, #tpu.memory_space<vmem>>, vector<1x128xf32>
    %37 = vector.broadcast %36 : vector<1x128xf32> to vector<256x128xf32>
    %38 = arith.addf %35, %37 : vector<256x128xf32>
    %39 = arith.truncf %38 : vector<256x128xf32> to vector<256x128xbf16>
    %40 = vector.extract_strided_slice %39 {offsets = [240, 0], sizes = [16, 128], strides = [1, 1]} : vector<256x128xbf16> to vector<16x128xbf16>
    %41 = vector.extract_strided_slice %39 {offsets = [0, 0], sizes = [240, 128], strides = [1, 1]} : vector<256x128xbf16> to vector<240x128xbf16>
    %42 = tpu.concatenate %40, %41 in 0 : vector<16x128xbf16>, vector<240x128xbf16> -> vector<256x128xbf16>
    %43 = vector.broadcast %1 : vector<256x1xbf16> to vector<256x128xbf16>
    %44 = arith.mulf %42, %43 : vector<256x128xbf16>
    %45 = vector.extract_strided_slice %39 {offsets = [16, 0], sizes = [240, 128], strides = [1, 1]} : vector<256x128xbf16> to vector<240x128xbf16>
    %46 = vector.extract_strided_slice %39 {offsets = [0, 0], sizes = [16, 128], strides = [1, 1]} : vector<256x128xbf16> to vector<16x128xbf16>
    %47 = tpu.concatenate %45, %46 in 0 : vector<240x128xbf16>, vector<16x128xbf16> -> vector<256x128xbf16>
    %48 = vector.broadcast %2 : vector<256x1xbf16> to vector<256x128xbf16>
    %49 = arith.mulf %47, %48 : vector<256x128xbf16>
    %50 = tpu.concatenate %44, %39, %49 in 1 : vector<256x128xbf16>, vector<256x128xbf16>, vector<256x128xbf16> -> vector<256x384xbf16>
    %c0_22 = arith.constant 0 : index
    %c0_23 = arith.constant 0 : index
    %51 = vector.load %arg11[%c0_22, %c0_23] : memref<384x128xbf16, #tpu.memory_space<vmem>>, vector<384x128xbf16>
    %cst_24 = arith.constant dense<0.000000e+00> : vector<256x128xf32>
    %52 = tpu.matmul %50, %51, %cst_24 {dimension_numbers = #tpu.dot_dimension_numbers<[1], [0], [0], [1], [0, 0, 1, 1], [], []>} : vector<256x384xbf16>, vector<384x128xbf16>, vector<256x128xf32> -> vector<256x128xf32>
    %c0_25 = arith.constant 0 : index
    %c0_26 = arith.constant 0 : index
    %53 = vector.load %arg12[%c0_25, %c0_26] : memref<1x128xf32, #tpu.memory_space<vmem>>, vector<1x128xf32>
    %54 = vector.broadcast %53 : vector<1x128xf32> to vector<256x128xf32>
    %55 = arith.addf %52, %54 : vector<256x128xf32>
    %cst_27 = arith.constant 0.000000e+00 : f32
    %56 = vector.broadcast %cst_27 : f32 to vector<256x128xf32>
    %57 = arith.maximumf %55, %56 : vector<256x128xf32>
    %58 = vector.broadcast %0 : vector<256x1xf32> to vector<256x128xf32>
    %59 = arith.mulf %57, %58 : vector<256x128xf32>
    %60 = arith.truncf %59 : vector<256x128xf32> to vector<256x128xbf16>
    %c0_28 = arith.constant 0 : index
    %c0_29 = arith.constant 0 : index
    %61 = vector.load %arg13[%c0_28, %c0_29] : memref<128x256xbf16, #tpu.memory_space<vmem>>, vector<128x256xbf16>
    %cst_30 = arith.constant dense<0.000000e+00> : vector<256x256xf32>
    %62 = tpu.matmul %60, %61, %cst_30 {dimension_numbers = #tpu.dot_dimension_numbers<[1], [0], [0], [1], [0, 0, 1, 1], [], []>} : vector<256x128xbf16>, vector<128x256xbf16>, vector<256x256xf32> -> vector<256x256xf32>
    %c0_31 = arith.constant 0 : index
    %c0_32 = arith.constant 0 : index
    %63 = vector.load %arg14[%c0_31, %c0_32] : memref<1x256xf32, #tpu.memory_space<vmem>>, vector<1x256xf32>
    %64 = vector.broadcast %63 : vector<1x256xf32> to vector<256x256xf32>
    %65 = arith.addf %62, %64 : vector<256x256xf32>
    %66 = arith.truncf %65 : vector<256x256xf32> to vector<256x256xbf16>
    %67 = vector.extract_strided_slice %66 {offsets = [240, 0], sizes = [16, 256], strides = [1, 1]} : vector<256x256xbf16> to vector<16x256xbf16>
    %68 = vector.extract_strided_slice %66 {offsets = [0, 0], sizes = [240, 256], strides = [1, 1]} : vector<256x256xbf16> to vector<240x256xbf16>
    %69 = tpu.concatenate %67, %68 in 0 : vector<16x256xbf16>, vector<240x256xbf16> -> vector<256x256xbf16>
    %70 = vector.broadcast %1 : vector<256x1xbf16> to vector<256x256xbf16>
    %71 = arith.mulf %69, %70 : vector<256x256xbf16>
    %72 = vector.extract_strided_slice %66 {offsets = [16, 0], sizes = [240, 256], strides = [1, 1]} : vector<256x256xbf16> to vector<240x256xbf16>
    %73 = vector.extract_strided_slice %66 {offsets = [0, 0], sizes = [16, 256], strides = [1, 1]} : vector<256x256xbf16> to vector<16x256xbf16>
    %74 = tpu.concatenate %72, %73 in 0 : vector<240x256xbf16>, vector<16x256xbf16> -> vector<256x256xbf16>
    %75 = vector.broadcast %2 : vector<256x1xbf16> to vector<256x256xbf16>
    %76 = arith.mulf %74, %75 : vector<256x256xbf16>
    %77 = tpu.concatenate %71, %66, %76 in 1 : vector<256x256xbf16>, vector<256x256xbf16>, vector<256x256xbf16> -> vector<256x768xbf16>
    %c0_33 = arith.constant 0 : index
    %c0_34 = arith.constant 0 : index
    %78 = vector.load %arg15[%c0_33, %c0_34] : memref<768x256xbf16, #tpu.memory_space<vmem>>, vector<768x256xbf16>
    %cst_35 = arith.constant dense<0.000000e+00> : vector<256x256xf32>
    %79 = tpu.matmul %77, %78, %cst_35 {dimension_numbers = #tpu.dot_dimension_numbers<[1], [0], [0], [1], [0, 0, 1, 1], [], []>} : vector<256x768xbf16>, vector<768x256xbf16>, vector<256x256xf32> -> vector<256x256xf32>
    %c0_36 = arith.constant 0 : index
    %c0_37 = arith.constant 0 : index
    %80 = vector.load %arg16[%c0_36, %c0_37] : memref<1x256xf32, #tpu.memory_space<vmem>>, vector<1x256xf32>
    %81 = vector.broadcast %80 : vector<1x256xf32> to vector<256x256xf32>
    %82 = arith.addf %79, %81 : vector<256x256xf32>
    %cst_38 = arith.constant 0.000000e+00 : f32
    %83 = vector.broadcast %cst_38 : f32 to vector<256x256xf32>
    %84 = arith.maximumf %82, %83 : vector<256x256xf32>
    %85 = vector.shape_cast %84 : vector<256x256xf32> to vector<2x8x16x256xf32>
    %cst_39 = arith.constant dense<0.000000e+00> : vector<2x16x256xf32>
    %86 = vector.multi_reduction <add>, %85, %cst_39 [1] : vector<2x8x16x256xf32> to vector<2x16x256xf32>
    %c0_40 = arith.constant 0 : index
    %c0_41 = arith.constant 0 : index
    %c0_42 = arith.constant 0 : index
    %87 = vector.load %arg17[%c0_40, %c0_41, %c0_42] : memref<2x16x256xf32, #tpu.memory_space<vmem>>, vector<2x16x256xf32>
    tpu.vector_store %arg17[%c0_40, %c0_41, %c0_42], %86 {strides = array<i32>} : memref<2x16x256xf32, #tpu.memory_space<vmem>>, vector<2x16x256xf32>,
    return
  }
  func.func @transform_0(%arg0: i32) -> (i32, i32) {
    %c0_i32 = arith.constant 0 : i32
    %c0_i32_0 = arith.constant 0 : i32
    return %arg0, %c0_i32 : i32, i32
  }
  func.func @transform_1(%arg0: i32) -> (i32, i32) {
    %c0_i32 = arith.constant 0 : i32
    %c0_i32_0 = arith.constant 0 : i32
    %c0_i32_1 = arith.constant 0 : i32
    return %c0_i32, %c0_i32_0 : i32, i32
  }
  func.func @transform_2(%arg0: i32) -> (i32, i32) {
    %c0_i32 = arith.constant 0 : i32
    %c0_i32_0 = arith.constant 0 : i32
    %c0_i32_1 = arith.constant 0 : i32
    return %c0_i32, %c0_i32_0 : i32, i32
  }
  func.func @transform_3(%arg0: i32) -> (i32, i32) {
    %c0_i32 = arith.constant 0 : i32
    %c0_i32_0 = arith.constant 0 : i32
    %c0_i32_1 = arith.constant 0 : i32
    return %c0_i32, %c0_i32_0 : i32, i32
  }
  func.func @transform_4(%arg0: i32) -> (i32, i32) {
    %c0_i32 = arith.constant 0 : i32
    %c0_i32_0 = arith.constant 0 : i32
    %c0_i32_1 = arith.constant 0 : i32
    return %c0_i32, %c0_i32_0 : i32, i32
  }
  func.func @transform_5(%arg0: i32) -> (i32, i32) {
    %c0_i32 = arith.constant 0 : i32
    %c0_i32_0 = arith.constant 0 : i32
    %c0_i32_1 = arith.constant 0 : i32
    return %c0_i32, %c0_i32_0 : i32, i32
  }
  func.func @transform_6(%arg0: i32) -> (i32, i32) {
    %c0_i32 = arith.constant 0 : i32
    %c0_i32_0 = arith.constant 0 : i32
    %c0_i32_1 = arith.constant 0 : i32
    return %c0_i32, %c0_i32_0 : i32, i32
  }
  func.func @transform_7(%arg0: i32) -> (i32, i32) {
    %c0_i32 = arith.constant 0 : i32
    %c0_i32_0 = arith.constant 0 : i32
    %c0_i32_1 = arith.constant 0 : i32
    return %c0_i32, %c0_i32_0 : i32, i32
  }
  func.func @transform_8(%arg0: i32) -> (i32, i32) {
    %c0_i32 = arith.constant 0 : i32
    %c0_i32_0 = arith.constant 0 : i32
    %c0_i32_1 = arith.constant 0 : i32
    return %c0_i32, %c0_i32_0 : i32, i32
  }
  func.func @transform_9(%arg0: i32) -> (i32, i32) {
    %c0_i32 = arith.constant 0 : i32
    %c0_i32_0 = arith.constant 0 : i32
    %c0_i32_1 = arith.constant 0 : i32
    return %c0_i32, %c0_i32_0 : i32, i32
  }
  func.func @transform_10(%arg0: i32) -> (i32, i32) {
    %c0_i32 = arith.constant 0 : i32
    %c0_i32_0 = arith.constant 0 : i32
    %c0_i32_1 = arith.constant 0 : i32
    return %c0_i32, %c0_i32_0 : i32, i32
  }
  func.func @transform_11(%arg0: i32) -> (i32, i32) {
    %c0_i32 = arith.constant 0 : i32
    %c0_i32_0 = arith.constant 0 : i32
    %c0_i32_1 = arith.constant 0 : i32
    return %c0_i32, %c0_i32_0 : i32, i32
  }
  func.func @transform_12(%arg0: i32) -> (i32, i32) {
    %c0_i32 = arith.constant 0 : i32
    %c0_i32_0 = arith.constant 0 : i32
    %c0_i32_1 = arith.constant 0 : i32
    return %c0_i32, %c0_i32_0 : i32, i32
  }
  func.func @transform_13(%arg0: i32) -> (i32, i32) {
    %c0_i32 = arith.constant 0 : i32
    %c0_i32_0 = arith.constant 0 : i32
    %c0_i32_1 = arith.constant 0 : i32
    return %c0_i32, %c0_i32_0 : i32, i32
  }
  func.func @transform_14(%arg0: i32) -> (i32, i32) {
    %c0_i32 = arith.constant 0 : i32
    %c0_i32_0 = arith.constant 0 : i32
    %c0_i32_1 = arith.constant 0 : i32
    return %c0_i32, %c0_i32_0 : i32, i32
  }
  func.func @transform_15(%arg0: i32) -> (i32, i32) {
    %c0_i32 = arith.constant 0 : i32
    %c0_i32_0 = arith.constant 0 : i32
    %c0_i32_1 = arith.constant 0 : i32
    return %c0_i32, %c0_i32_0 : i32, i32
  }
  func.func @transform_16(%arg0: i32) -> (i32, i32, i32) {
    %c0_i32 = arith.constant 0 : i32
    %c0_i32_0 = arith.constant 0 : i32
    %c0_i32_1 = arith.constant 0 : i32
    return %arg0, %c0_i32, %c0_i32_0 : i32, i32, i32
  }
}

</mosaic_0001>

<llo_original>
// kernel: tile.8
$region0: #{tile.8}
  #allocation0 [shape = 's32[1]{0}', space=sflag, size = 0x4, scoped, tag = 'scoped memory for tile.8']
  %s0 = inlined_call_operand.vmem [shape: f32[16], index: 0, kind: input, shape index: {}]
  %s1 = inlined_call_operand.vmem [shape: f32[16,16], index: 1, kind: output, shape index: {}]
  // Predicated region
  $region2: #{tile.8} parent=0 // pred_check
    _
  $region3: #{tile.8} parent=0 // pred_check_branch
    %3 = sbr.rel (0) target = $region5
  $region4: #{tile.8} parent=0 // pred_region
    _
  $region5: #{tile.8} parent=0 // pred_fallthru
    _
  %v4 = vld [vmem:[%s0] ss:$0 sm:$0xff]
  %5 = vst [vmem:[%s1] sm:$0xff] %v4
  %s6 = scalar_lea.vmem %s1, 8
  %7 = vst [vmem:[%s6] sm:$0xff] %v4

// kernel: tile.0
$region0: #{tile.0}
  %s0 = inlined_call_operand.vmem [shape: f32[16,16], index: 0, kind: input, shape index: {}]
  %s1 = inlined_call_operand.vmem [shape: f32[256,1], index: 1, kind: output, shape index: {}]
  %v2 = vld [vmem:[%s0] sm:$0xff]
  %vm3 = vcmask 7168
  %4 = vst.msk [vmem:[%s1] ss:$16 sm:$0x3] %vm3, %v2
  %5 = vst.msk [vmem:[%s1] ss:$16 sm:$0xc] %vm3, %v2
  %6 = vst.msk [vmem:[%s1] ss:$16 sm:$0x30] %vm3, %v2
  %7 = vst.msk [vmem:[%s1] ss:$16 sm:$0xc0] %vm3, %v2
  %s8 = scalar_lea.vmem %s0, 8
  %v9 = vld [vmem:[%s8] sm:$0xff]
  %vm10 = vcmask 7168
  %s11 = scalar_lea.vmem %s1, 128
  %12 = vst.msk [vmem:[%s11] ss:$16 sm:$0x3] %vm10, %v9
  %s13 = scalar_lea.vmem %s1, 128
  %14 = vst.msk [vmem:[%s13] ss:$16 sm:$0xc] %vm10, %v9
  %s15 = scalar_lea.vmem %s1, 128
  %16 = vst.msk [vmem:[%s15] ss:$16 sm:$0x30] %vm10, %v9
  %s17 = scalar_lea.vmem %s1, 128
  %18 = vst.msk [vmem:[%s17] ss:$16 sm:$0xc0] %vm10, %v9
  %v19 = vld [vmem:[%s0] sm:$0xff]
  %20 = vrot.lane.b32.xlu0 %v19, 127
  %v21 = vpop.permute.xlu0 %20
  %vm22 = vcmask 7168
  %s23 = scalar_lea.vmem %s1, 1
  %24 = vst.msk [vmem:[%s23] ss:$16 sm:$0x3] %vm22, %v21
  %s25 = scalar_lea.vmem %s1, 1
  %26 = vst.msk [vmem:[%s25] ss:$16 sm:$0xc] %vm22, %v21
  %s27 = scalar_lea.vmem %s1, 1
  %28 = vst.msk [vmem:[%s27] ss:$16 sm:$0x30] %vm22, %v21
  %s29 = scalar_lea.vmem %s1, 1
  %30 = vst.msk [vmem:[%s29] ss:$16 sm:$0xc0] %vm22, %v21
  %s31 = scalar_lea.vmem %s0, 8
  %v32 = vld [vmem:[%s31] sm:$0xff]
  %33 = vrot.lane.b32.xlu0 %v32, 127
  %v34 = vpop.permute.xlu0 %33
  %vm35 = vcmask 7168
  %s36 = scalar_lea.vmem %s1, 129
  %37 = vst.msk [vmem:[%s36] ss:$16 sm:$0x3] %vm35, %v34
  %s38 = scalar_lea.vmem %s1, 129
  %39 = vst.msk [vmem:[%s38] ss:$16 sm:$0xc] %vm35, %v34
  %s40 = scalar_lea.vmem %s1, 129
  %41 = vst.msk [vmem:[%s40] ss:$16 sm:$0x30] %vm35, %v34
  %s42 = scalar_lea.vmem %s1, 129
  %43 = vst.msk [vmem:[%s42] ss:$16 sm:$0xc0] %vm35, %v34
  %v44 = vld [vmem:[%s0] sm:$0xff]
  %45 = vrot.lane.b32.xlu0 %v44, 126
  %v46 = vpop.permute.xlu0 %45
  %vm47 = vcmask 7168
  %s48 = scalar_lea.vmem %s1, 2
  %49 = vst.msk [vmem:[%s48] ss:$16 sm:$0x3] %vm47, %v46
  %s50 = scalar_lea.vmem %s1, 2
  %51 = vst.msk [vmem:[%s50] ss:$16 sm:$0xc] %vm47, %v46
  %s52 = scalar_lea.vmem %s1, 2
  %53 = vst.msk [vmem:[%s52] ss:$16 sm:$0x30] %vm47, %v46
  %s54 = scalar_lea.vmem %s1, 2
  %55 = vst.msk [vmem:[%s54] ss:$16 sm:$0xc0] %vm47, %v46
  %s56 = scalar_lea.vmem %s0, 8
  %v57 = vld [vmem:[%s56] sm:$0xff]
  %58 = vrot.lane.b32.xlu0 %v57, 126
  %v59 = vpop.permute.xlu0 %58
  %vm60 = vcmask 7168
  %s61 = scalar_lea.vmem %s1, 130
  %62 = vst.msk [vmem:[%s61] ss:$16 sm:$0x3] %vm60, %v59
  %s63 = scalar_lea.vmem %s1, 130
  %64 = vst.msk [vmem:[%s63] ss:$16 sm:$0xc] %vm60, %v59
  %s65 = scalar_lea.vmem %s1, 130
  %66 = vst.msk [vmem:[%s65] ss:$16 sm:$0x30] %vm60, %v59
  %s67 = scalar_lea.vmem %s1, 130
  %68 = vst.msk [vmem:[%s67] ss:$16 sm:$0xc0] %vm60, %v59
  %v69 = vld [vmem:[%s0] sm:$0xff]
  %70 = vrot.lane.b32.xlu0 %v69, 125
  %v71 = vpop.permute.xlu0 %70
  %vm72 = vcmask 7168
  %s73 = scalar_lea.vmem %s1, 3
  %74 = vst.msk [vmem:[%s73] ss:$16 sm:$0x3] %vm72, %v71
  %s75 = scalar_lea.vmem %s1, 3
  %76 = vst.msk [vmem:[%s75] ss:$16 sm:$0xc] %vm72, %v71
  %s77 = scalar_lea.vmem %s1, 3
  %78 = vst.msk [vmem:[%s77] ss:$16 sm:$0x30] %vm72, %v71
  %s79 = scalar_lea.vmem %s1, 3
  %80 = vst.msk [vmem:[%s79] ss:$16 sm:$0xc0] %vm72, %v71
  %s81 = scalar_lea.vmem %s0, 8
  %v82 = vld [vmem:[%s81] sm:$0xff]
  %83 = vrot.lane.b32.xlu0 %v82, 125
  %v84 = vpop.permute.xlu0 %83
  %vm85 = vcmask 7168
  %s86 = scalar_lea.vmem %s1, 131
  %87 = vst.msk [vmem:[%s86] ss:$16 sm:$0x3] %vm85, %v84
  %s88 = scalar_lea.vmem %s1, 131
  %89 = vst.msk [vmem:[%s88] ss:$16 sm:$0xc] %vm85, %v84
  %s90 = scalar_lea.vmem %s1, 131
  %91 = vst.msk [vmem:[%s90] ss:$16 sm:$0x30] %vm85, %v84
  %s92 = scalar_lea.vmem %s1, 131
  %93 = vst.msk [vmem:[%s92] ss:$16 sm:$0xc0] %vm85, %v84
  %v94 = vld [vmem:[%s0] sm:$0xff]
  %95 = vrot.lane.b32.xlu0 %v94, 124
  %v96 = vpop.permute.xlu0 %95
  %vm97 = vcmask 7168
  %s98 = scalar_lea.vmem %s1, 4
  %99 = vst.msk [vmem:[%s98] ss:$16 sm:$0x3] %vm97, %v96
  %s100 = scalar_lea.vmem %s1, 4
  %101 = vst.msk [vmem:[%s100] ss:$16 sm:$0xc] %vm97, %v96
  %s102 = scalar_lea.vmem %s1, 4
  %103 = vst.msk [vmem:[%s102] ss:$16 sm:$0x30] %vm97, %v96
  %s104 = scalar_lea.vmem %s1, 4
  %105 = vst.msk [vmem:[%s104] ss:$16 sm:$0xc0] %vm97, %v96
  %s106 = scalar_lea.vmem %s0, 8
  %v107 = vld [vmem:[%s106] sm:$0xff]
  %108 = vrot.lane.b32.xlu0 %v107, 124
  %v109 = vpop.permute.xlu0 %108
  %vm110 = vcmask 7168
  %s111 = scalar_lea.vmem %s1, 132
  %112 = vst.msk [vmem:[%s111] ss:$16 sm:$0x3] %vm110, %v109
  %s113 = scalar_lea.vmem %s1, 132
  %114 = vst.msk [vmem:[%s113] ss:$16 sm:$0xc] %vm110, %v109
  %s115 = scalar_lea.vmem %s1, 132
  %116 = vst.msk [vmem:[%s115] ss:$16 sm:$0x30] %vm110, %v109
  %s117 = scalar_lea.vmem %s1, 132
  %118 = vst.msk [vmem:[%s117] ss:$16 sm:$0xc0] %vm110, %v109
  %v119 = vld [vmem:[%s0] sm:$0xff]
  %120 = vrot.lane.b32.xlu0 %v119, 123
  %v121 = vpop.permute.xlu0 %120
  %vm122 = vcmask 7168
  %s123 = scalar_lea.vmem %s1, 5
  %124 = vst.msk [vmem:[%s123] ss:$16 sm:$0x3] %vm122, %v121
  %s125 = scalar_lea.vmem %s1, 5
  %126 = vst.msk [vmem:[%s125] ss:$16 sm:$0xc] %vm122, %v121
  %s127 = scalar_lea.vmem %s1, 5
  %128 = vst.msk [vmem:[%s127] ss:$16 sm:$0x30] %vm122, %v121
  %s129 = scalar_lea.vmem %s1, 5
  %130 = vst.msk [vmem:[%s129] ss:$16 sm:$0xc0] %vm122, %v121
  %s131 = scalar_lea.vmem %s0, 8
  %v132 = vld [vmem:[%s131] sm:$0xff]
  %133 = vrot.lane.b32.xlu0 %v132, 123
  %v134 = vpop.permute.xlu0 %133
  %vm135 = vcmask 7168
  %s136 = scalar_lea.vmem %s1, 133
  %137 = vst.msk [vmem:[%s136] ss:$16 sm:$0x3] %vm135, %v134
  %s138 = scalar_lea.vmem %s1, 133
  %139 = vst.msk [vmem:[%s138] ss:$16 sm:$0xc] %vm135, %v134
  %s140 = scalar_lea.vmem %s1, 133
  %141 = vst.msk [vmem:[%s140] ss:$16 sm:$0x30] %vm135, %v134
  %s142 = scalar_lea.vmem %s1, 133
  %143 = vst.msk [vmem:[%s142] ss:$16 sm:$0xc0] %vm135, %v134
  %v144 = vld [vmem:[%s0] sm:$0xff]
  %145 = vrot.lane.b32.xlu0 %v144, 122
  %v146 = vpop.permute.xlu0 %145
  %vm147 = vcmask 7168
  %s148 = scalar_lea.vmem %s1, 6
  %149 = vst.msk [vmem:[%s148] ss:$16 sm:$0x3] %vm147, %v146
  %s150 = scalar_lea.vmem %s1, 6
  %151 = vst.msk [vmem:[%s150] ss:$16 sm:$0xc] %vm147, %v146
  %s152 = scalar_lea.vmem %s1, 6
  %153 = vst.msk [vmem:[%s152] ss:$16 sm:$0x30] %vm147, %v146
  %s154 = scalar_lea.vmem %s1, 6
  %155 = vst.msk [vmem:[%s154] ss:$16 sm:$0xc0] %vm147, %v146
  %s156 = scalar_lea.vmem %s0, 8
  %v157 = vld [vmem:[%s156] sm:$0xff]
  %158 = vrot.lane.b32.xlu0 %v157, 122
  %v159 = vpop.permute.xlu0 %158
  %vm160 = vcmask 7168
  %s161 = scalar_lea.vmem %s1, 134
  %162 = vst.msk [vmem:[%s161] ss:$16 sm:$0x3] %vm160, %v159
  %s163 = scalar_lea.vmem %s1, 134
  %164 = vst.msk [vmem:[%s163] ss:$16 sm:$0xc] %vm160, %v159
  %s165 = scalar_lea.vmem %s1, 134
  %166 = vst.msk [vmem:[%s165] ss:$16 sm:$0x30] %vm160, %v159
  %s167 = scalar_lea.vmem %s1, 134
  %168 = vst.msk [vmem:[%s167] ss:$16 sm:$0xc0] %vm160, %v159
  %v169 = vld [vmem:[%s0] sm:$0xff]
  %170 = vrot.lane.b32.xlu0 %v169, 121
  %v171 = vpop.permute.xlu0 %170
  %vm172 = vcmask 7168
  %s173 = scalar_lea.vmem %s1, 7
  %174 = vst.msk [vmem:[%s173] ss:$16 sm:$0x3] %vm172, %v171
  %s175 = scalar_lea.vmem %s1, 7
  %176 = vst.msk [vmem:[%s175] ss:$16 sm:$0xc] %vm172, %v171
  %s177 = scalar_lea.vmem %s1, 7
  %178 = vst.msk [vmem:[%s177] ss:$16 sm:$0x30] %vm172, %v171
  %s179 = scalar_lea.vmem %s1, 7
  %180 = vst.msk [vmem:[%s179] ss:$16 sm:$0xc0] %vm172, %v171
  %s181 = scalar_lea.vmem %s0, 8
  %v182 = vld [vmem:[%s181] sm:$0xff]
  %183 = vrot.lane.b32.xlu0 %v182, 121
  %v184 = vpop.permute.xlu0 %183
  %vm185 = vcmask 7168
  %s186 = scalar_lea.vmem %s1, 135
  %187 = vst.msk [vmem:[%s186] ss:$16 sm:$0x3] %vm185, %v184
  %s188 = scalar_lea.vmem %s1, 135
  %189 = vst.msk [vmem:[%s188] ss:$16 sm:$0xc] %vm185, %v184
  %s190 = scalar_lea.vmem %s1, 135
  %191 = vst.msk [vmem:[%s190] ss:$16 sm:$0x30] %vm185, %v184
  %s192 = scalar_lea.vmem %s1, 135
  %193 = vst.msk [vmem:[%s192] ss:$16 sm:$0xc0] %vm185, %v184
  %v194 = vld [vmem:[%s0] sm:$0xff]
  %195 = vrot.lane.b32.xlu0 %v194, 120
  %v196 = vpop.permute.xlu0 %195
  %vm197 = vcmask 7168
  %s198 = scalar_lea.vmem %s1, 8
  %199 = vst.msk [vmem:[%s198] ss:$16 sm:$0x3] %vm197, %v196
  %s200 = scalar_lea.vmem %s1, 8
  %201 = vst.msk [vmem:[%s200] ss:$16 sm:$0xc] %vm197, %v196
  %s202 = scalar_lea.vmem %s1, 8
  %203 = vst.msk [vmem:[%s202] ss:$16 sm:$0x30] %vm197, %v196
  %s204 = scalar_lea.vmem %s1, 8
  %205 = vst.msk [vmem:[%s204] ss:$16 sm:$0xc0] %vm197, %v196
  %s206 = scalar_lea.vmem %s0, 8
  %v207 = vld [vmem:[%s206] sm:$0xff]
  %208 = vrot.lane.b32.xlu0 %v207, 120
  %v209 = vpop.permute.xlu0 %208
  %vm210 = vcmask 7168
  %s211 = scalar_lea.vmem %s1, 136
  %212 = vst.msk [vmem:[%s211] ss:$16 sm:$0x3] %vm210, %v209
  %s213 = scalar_lea.vmem %s1, 136
  %214 = vst.msk [vmem:[%s213] ss:$16 sm:$0xc] %vm210, %v209
  %s215 = scalar_lea.vmem %s1, 136
  %216 = vst.msk [vmem:[%s215] ss:$16 sm:$0x30] %vm210, %v209
  %s217 = scalar_lea.vmem %s1, 136
  %218 = vst.msk [vmem:[%s217] ss:$16 sm:$0xc0] %vm210, %v209
  %v219 = vld [vmem:[%s0] sm:$0xff]
  %220 = vrot.lane.b32.xlu0 %v219, 119
  %v221 = vpop.permute.xlu0 %220
  %vm222 = vcmask 7168
  %s223 = scalar_lea.vmem %s1, 9
  %224 = vst.msk [vmem:[%s223] ss:$16 sm:$0x3] %vm222, %v221
  %s225 = scalar_lea.vmem %s1, 9
  %226 = vst.msk [vmem:[%s225] ss:$16 sm:$0xc] %vm222, %v221
  %s227 = scalar_lea.vmem %s1, 9
  %228 = vst.msk [vmem:[%s227] ss:$16 sm:$0x30] %vm222, %v221
  %s229 = scalar_lea.vmem %s1, 9
  %230 = vst.msk [vmem:[%s229] ss:$16 sm:$0xc0] %vm222, %v221
  %s231 = scalar_lea.vmem %s0, 8
  %v232 = vld [vmem:[%s231] sm:$0xff]
  %233 = vrot.lane.b32.xlu0 %v232, 119
  %v234 = vpop.permute.xlu0 %233
  %vm235 = vcmask 7168
  %s236 = scalar_lea.vmem %s1, 137
  %237 = vst.msk [vmem:[%s236] ss:$16 sm:$0x3] %vm235, %v234
  %s238 = scalar_lea.vmem %s1, 137
  %239 = vst.msk [vmem:[%s238] ss:$16 sm:$0xc] %vm235, %v234
  %s240 = scalar_lea.vmem %s1, 137
  %241 = vst.msk [vmem:[%s240] ss:$16 sm:$0x30] %vm235, %v234
  %s242 = scalar_lea.vmem %s1, 137
  %243 = vst.msk [vmem:[%s242] ss:$16 sm:$0xc0] %vm235, %v234
  %v244 = vld [vmem:[%s0] sm:$0xff]
  %245 = vrot.lane.b32.xlu0 %v244, 118
  %v246 = vpop.permute.xlu0 %245
  %vm247 = vcmask 7168
  %s248 = scalar_lea.vmem %s1, 10
  %249 = vst.msk [vmem:[%s248] ss:$16 sm:$0x3] %vm247, %v246
  %s250 = scalar_lea.vmem %s1, 10
  %251 = vst.msk [vmem:[%s250] ss:$16 sm:$0xc] %vm247, %v246
  %s252 = scalar_lea.vmem %s1, 10
  %253 = vst.msk [vmem:[%s252] ss:$16 sm:$0x30] %vm247, %v246
  %s254 = scalar_lea.vmem %s1, 10
  %255 = vst.msk [vmem:[%s254] ss:$16 sm:$0xc0] %vm247, %v246
  %s256 = scalar_lea.vmem %s0, 8
  %v257 = vld [vmem:[%s256] sm:$0xff]
  %258 = vrot.lane.b32.xlu0 %v257, 118
  %v259 = vpop.permute.xlu0 %258
  %vm260 = vcmask 7168
  %s261 = scalar_lea.vmem %s1, 138
  %262 = vst.msk [vmem:[%s261] ss:$16 sm:$0x3] %vm260, %v259
  %s263 = scalar_lea.vmem %s1, 138
  %264 = vst.msk [vmem:[%s263] ss:$16 sm:$0xc] %vm260, %v259
  %s265 = scalar_lea.vmem %s1, 138
  %266 = vst.msk [vmem:[%s265] ss:$16 sm:$0x30] %vm260, %v259
  %s267 = scalar_lea.vmem %s1, 138
  %268 = vst.msk [vmem:[%s267] ss:$16 sm:$0xc0] %vm260, %v259
  %v269 = vld [vmem:[%s0] sm:$0xff]
  %270 = vrot.lane.b32.xlu0 %v269, 117
  %v271 = vpop.permute.xlu0 %270
  %vm272 = vcmask 7168
  %s273 = scalar_lea.vmem %s1, 11
  %274 = vst.msk [vmem:[%s273] ss:$16 sm:$0x3] %vm272, %v271
  %s275 = scalar_lea.vmem %s1, 11
  %276 = vst.msk [vmem:[%s275] ss:$16 sm:$0xc] %vm272, %v271
  %s277 = scalar_lea.vmem %s1, 11
  %278 = vst.msk [vmem:[%s277] ss:$16 sm:$0x30] %vm272, %v271
  %s279 = scalar_lea.vmem %s1, 11
  %280 = vst.msk [vmem:[%s279] ss:$16 sm:$0xc0] %vm272, %v271
  %s281 = scalar_lea.vmem %s0, 8
  %v282 = vld [vmem:[%s281] sm:$0xff]
  %283 = vrot.lane.b32.xlu0 %v282, 117
  %v284 = vpop.permute.xlu0 %283
  %vm285 = vcmask 7168
  %s286 = scalar_lea.vmem %s1, 139
  %287 = vst.msk [vmem:[%s286] ss:$16 sm:$0x3] %vm285, %v284
  %s288 = scalar_lea.vmem %s1, 139
  %289 = vst.msk [vmem:[%s288] ss:$16 sm:$0xc] %vm285, %v284
  %s290 = scalar_lea.vmem %s1, 139
  %291 = vst.msk [vmem:[%s290] ss:$16 sm:$0x30] %vm285, %v284
  %s292 = scalar_lea.vmem %s1, 139
  %293 = vst.msk [vmem:[%s292] ss:$16 sm:$0xc0] %vm285, %v284
  %v294 = vld [vmem:[%s0] sm:$0xff]
  %295 = vrot.lane.b32.xlu0 %v294, 116
  %v296 = vpop.permute.xlu0 %295
  %vm297 = vcmask 7168
  %s298 = scalar_lea.vmem %s1, 12
  %299 = vst.msk [vmem:[%s298] ss:$16 sm:$0x3] %vm297, %v296
  %s300 = scalar_lea.vmem %s1, 12
  %301 = vst.msk [vmem:[%s300] ss:$16 sm:$0xc] %vm297, %v296
  %s302 = scalar_lea.vmem %s1, 12
  %303 = vst.msk [vmem:[%s302] ss:$16 sm:$0x30] %vm297, %v296
  %s304 = scalar_lea.vmem %s1, 12
  %305 = vst.msk [vmem:[%s304] ss:$16 sm:$0xc0] %vm297, %v296
  %s306 = scalar_lea.vmem %s0, 8
  %v307 = vld [vmem:[%s306] sm:$0xff]
  %308 = vrot.lane.b32.xlu0 %v307, 116
  %v309 = vpop.permute.xlu0 %308
  %vm310 = vcmask 7168
  %s311 = scalar_lea.vmem %s1, 140
  %312 = vst.msk [vmem:[%s311] ss:$16 sm:$0x3] %vm310, %v309
  %s313 = scalar_lea.vmem %s1, 140
  %314 = vst.msk [vmem:[%s313] ss:$16 sm:$0xc] %vm310, %v309
  %s315 = scalar_lea.vmem %s1, 140
  %316 = vst.msk [vmem:[%s315] ss:$16 sm:$0x30] %vm310, %v309
  %s317 = scalar_lea.vmem %s1, 140
  %318 = vst.msk [vmem:[%s317] ss:$16 sm:$0xc0] %vm310, %v309
  %v319 = vld [vmem:[%s0] sm:$0xff]
  %320 = vrot.lane.b32.xlu0 %v319, 115
  %v321 = vpop.permute.xlu0 %320
  %vm322 = vcmask 7168
  %s323 = scalar_lea.vmem %s1, 13
  %324 = vst.msk [vmem:[%s323] ss:$16 sm:$0x3] %vm322, %v321
  %s325 = scalar_lea.vmem %s1, 13
  %326 = vst.msk [vmem:[%s325] ss:$16 sm:$0xc] %vm322, %v321
  %s327 = scalar_lea.vmem %s1, 13
  %328 = vst.msk [vmem:[%s327] ss:$16 sm:$0x30] %vm322, %v321
  %s329 = scalar_lea.vmem %s1, 13
  %330 = vst.msk [vmem:[%s329] ss:$16 sm:$0xc0] %vm322, %v321
  %s331 = scalar_lea.vmem %s0, 8
  %v332 = vld [vmem:[%s331] sm:$0xff]
  %333 = vrot.lane.b32.xlu0 %v332, 115
  %v334 = vpop.permute.xlu0 %333
  %vm335 = vcmask 7168
  %s336 = scalar_lea.vmem %s1, 141
  %337 = vst.msk [vmem:[%s336] ss:$16 sm:$0x3] %vm335, %v334
  %s338 = scalar_lea.vmem %s1, 141
  %339 = vst.msk [vmem:[%s338] ss:$16 sm:$0xc] %vm335, %v334
  %s340 = scalar_lea.vmem %s1, 141
  %341 = vst.msk [vmem:[%s340] ss:$16 sm:$0x30] %vm335, %v334
  %s342 = scalar_lea.vmem %s1, 141
  %343 = vst.msk [vmem:[%s342] ss:$16 sm:$0xc0] %vm335, %v334
  %v344 = vld [vmem:[%s0] sm:$0xff]
  %345 = vrot.lane.b32.xlu0 %v344, 114
  %v346 = vpop.permute.xlu0 %345
  %vm347 = vcmask 7168
  %s348 = scalar_lea.vmem %s1, 14
  %349 = vst.msk [vmem:[%s348] ss:$16 sm:$0x3] %vm347, %v346
  %s350 = scalar_lea.vmem %s1, 14
  %351 = vst.msk [vmem:[%s350] ss:$16 sm:$0xc] %vm347, %v346
  %s352 = scalar_lea.vmem %s1, 14
  %353 = vst.msk [vmem:[%s352] ss:$16 sm:$0x30] %vm347, %v346
  %s354 = scalar_lea.vmem %s1, 14
  %355 = vst.msk [vmem:[%s354] ss:$16 sm:$0xc0] %vm347, %v346
  %s356 = scalar_lea.vmem %s0, 8
  %v357 = vld [vmem:[%s356] sm:$0xff]
  %358 = vrot.lane.b32.xlu0 %v357, 114
  %v359 = vpop.permute.xlu0 %358
  %vm360 = vcmask 7168
  %s361 = scalar_lea.vmem %s1, 142
  %362 = vst.msk [vmem:[%s361] ss:$16 sm:$0x3] %vm360, %v359
  %s363 = scalar_lea.vmem %s1, 142
  %364 = vst.msk [vmem:[%s363] ss:$16 sm:$0xc] %vm360, %v359
  %s365 = scalar_lea.vmem %s1, 142
  %366 = vst.msk [vmem:[%s365] ss:$16 sm:$0x30] %vm360, %v359
  %s367 = scalar_lea.vmem %s1, 142
  %368 = vst.msk [vmem:[%s367] ss:$16 sm:$0xc0] %vm360, %v359
  %v369 = vld [vmem:[%s0] sm:$0xff]
  %370 = vrot.lane.b32.xlu0 %v369, 113
  %v371 = vpop.permute.xlu0 %370
  %vm372 = vcmask 7168
  %s373 = scalar_lea.vmem %s1, 15
  %374 = vst.msk [vmem:[%s373] ss:$16 sm:$0x3] %vm372, %v371
  %s375 = scalar_lea.vmem %s1, 15
  %376 = vst.msk [vmem:[%s375] ss:$16 sm:$0xc] %vm372, %v371
  %s377 = scalar_lea.vmem %s1, 15
  %378 = vst.msk [vmem:[%s377] ss:$16 sm:$0x30] %vm372, %v371
  %s379 = scalar_lea.vmem %s1, 15
  %380 = vst.msk [vmem:[%s379] ss:$16 sm:$0xc0] %vm372, %v371
  %s381 = scalar_lea.vmem %s0, 8
  %v382 = vld [vmem:[%s381] sm:$0xff]
  %383 = vrot.lane.b32.xlu0 %v382, 113
  %v384 = vpop.permute.xlu0 %383
  %vm385 = vcmask 7168
  %s386 = scalar_lea.vmem %s1, 143
  %387 = vst.msk [vmem:[%s386] ss:$16 sm:$0x3] %vm385, %v384
  %s388 = scalar_lea.vmem %s1, 143
  %389 = vst.msk [vmem:[%s388] ss:$16 sm:$0xc] %vm385, %v384
  %s390 = scalar_lea.vmem %s1, 143
  %391 = vst.msk [vmem:[%s390] ss:$16 sm:$0x30] %vm385, %v384
  %s392 = scalar_lea.vmem %s1, 143
  %393 = vst.msk [vmem:[%s392] ss:$16 sm:$0xc0] %vm385, %v384

// kernel: stgcn_pallas.1
$region0: #{stgcn_pallas.1}
  #allocation0 [shape = 'u32[]', space=smem, size = 0x4, offset = 0x4, fixed_abs, tag = 'smem constant byte address 0x4 - core index']
  #allocation1 [shape = 'u32[144,128]{1,0:T(1,128)}', space=vmem, size = 0x12000, scoped, tag = 'internal scratch']
  %s0 = inlined_call_operand.vmem [shape: f32[256,8], index: 0, kind: input, shape index: {}]
  %s1 = inlined_call_operand.vmem [shape: f32[256,1], index: 1, kind: input, shape index: {}]
  %s2 = inlined_call_operand.vmem [shape: bf16[256,1], index: 2, kind: input, shape index: {}]
  %s3 = inlined_call_operand.vmem [shape: bf16[256,1], index: 3, kind: input, shape index: {}]
  %s4 = inlined_call_operand.vmem [shape: bf16[8,64], index: 4, kind: input, shape index: {}]
  %s5 = inlined_call_operand.vmem [shape: f32[1,64], index: 5, kind: input, shape index: {}]
  %s6 = inlined_call_operand.vmem [shape: bf16[192,64], index: 6, kind: input, shape index: {}]
  %s7 = inlined_call_operand.vmem [shape: f32[1,64], index: 7, kind: input, shape index: {}]
  %s8 = inlined_call_operand.vmem [shape: bf16[64,128], index: 8, kind: input, shape index: {}]
  %s9 = inlined_call_operand.vmem [shape: f32[1,128], index: 9, kind: input, shape index: {}]
  %s10 = inlined_call_operand.vmem [shape: bf16[384,128], index: 10, kind: input, shape index: {}]
  %s11 = inlined_call_operand.vmem [shape: f32[1,128], index: 11, kind: input, shape index: {}]
  %s12 = inlined_call_operand.vmem [shape: bf16[128,256], index: 12, kind: input, shape index: {}]
  %s13 = inlined_call_operand.vmem [shape: f32[1,256], index: 13, kind: input, shape index: {}]
  %s14 = inlined_call_operand.vmem [shape: bf16[768,256], index: 14, kind: input, shape index: {}]
  %s15 = inlined_call_operand.vmem [shape: f32[1,256], index: 15, kind: input, shape index: {}]
  %s16 = inlined_call_operand.vmem [shape: f32[2,16,256], index: 16, kind: output, shape index: {}]
  %s17 = sld [smem:[#allocation0]]
  $region74: #{stgcn_pallas.1} parent=0
    _
  %s19 = ssub.s32 1, %s17
  %s20 = scalar_select 0, %s19, %s17
  // Predicated region
  $region2: #{stgcn_pallas.1} parent=0 // pred_check
    _
  $region3: #{stgcn_pallas.1} parent=0 // pred_check_branch
    %22 = sbr.rel (0) target = $region5
  $region4: #{stgcn_pallas.1} parent=0 // pred_region
    _
  $region5: #{stgcn_pallas.1} parent=0 // pred_fallthru
    _
  // Predicated region
  $region6: #{stgcn_pallas.1} parent=0 // pred_check
    _
  $region7: #{stgcn_pallas.1} parent=0 // pred_check_branch
    %24 = sbr.rel (0) target = $region9
  $region8: #{stgcn_pallas.1} parent=0 // pred_region
    _
  $region9: #{stgcn_pallas.1} parent=0 // pred_fallthru
    _
  // Predicated region
  $region10: #{stgcn_pallas.1} parent=0 // pred_check
    _
  $region11: #{stgcn_pallas.1} parent=0 // pred_check_branch
    %26 = sbr.rel (0) target = $region13
  $region12: #{stgcn_pallas.1} parent=0 // pred_region
    _
  $region13: #{stgcn_pallas.1} parent=0 // pred_fallthru
    _
  // Predicated region
  $region14: #{stgcn_pallas.1} parent=0 // pred_check
    _
  $region15: #{stgcn_pallas.1} parent=0 // pred_check_branch
    %28 = sbr.rel (0) target = $region17
  $region16: #{stgcn_pallas.1} parent=0 // pred_region
    _
  $region17: #{stgcn_pallas.1} parent=0 // pred_fallthru
    _
  // Predicated region
  $region18: #{stgcn_pallas.1} parent=0 // pred_check
    _
  $region19: #{stgcn_pallas.1} parent=0 // pred_check_branch
    %30 = sbr.rel (0) target = $region21
  $region20: #{stgcn_pallas.1} parent=0 // pred_region
    _
  $region21: #{stgcn_pallas.1} parent=0 // pred_fallthru
    _
  // Predicated region
  $region22: #{stgcn_pallas.1} parent=0 // pred_check
    _
  $region23: #{stgcn_pallas.1} parent=0 // pred_check_branch
    %32 = sbr.rel (0) target = $region25
  $region24: #{stgcn_pallas.1} parent=0 // pred_region
    _
  $region25: #{stgcn_pallas.1} parent=0 // pred_fallthru
    _
  // Predicated region
  $region26: #{stgcn_pallas.1} parent=0 // pred_check
    _
  $region27: #{stgcn_pallas.1} parent=0 // pred_check_branch
    %34 = sbr.rel (0) target = $region29
  $region28: #{stgcn_pallas.1} parent=0 // pred_region
    _
  $region29: #{stgcn_pallas.1} parent=0 // pred_fallthru
    _
  // Predicated region
  $region30: #{stgcn_pallas.1} parent=0 // pred_check
    _
  $region31: #{stgcn_pallas.1} parent=0 // pred_check_branch
    %36 = sbr.rel (0) target = $region33
  $region32: #{stgcn_pallas.1} parent=0 // pred_region
    _
  $region33: #{stgcn_pallas.1} parent=0 // pred_fallthru
    _
  // Predicated region
  $region34: #{stgcn_pallas.1} parent=0 // pred_check
    _
  $region35: #{stgcn_pallas.1} parent=0 // pred_check_branch
    %38 = sbr.rel (0) target = $region37
  $region36: #{stgcn_pallas.1} parent=0 // pred_region
    _
  $region37: #{stgcn_pallas.1} parent=0 // pred_fallthru
    _
  // Predicated region
  $region38: #{stgcn_pallas.1} parent=0 // pred_check
    _
  $region39: #{stgcn_pallas.1} parent=0 // pred_check_branch
    %40 = sbr.rel (0) target = $region41
  $region40: #{stgcn_pallas.1} parent=0 // pred_region
    _
  $region41: #{stgcn_pallas.1} parent=0 // pred_fallthru
    _
  // Predicated region
  $region42: #{stgcn_pallas.1} parent=0 // pred_check
    _
  $region43: #{stgcn_pallas.1} parent=0 // pred_check_branch
    %42 = sbr.rel (0) target = $region45
  $region44: #{stgcn_pallas.1} parent=0 // pred_region
    _
  $region45: #{stgcn_pallas.1} parent=0 // pred_fallthru
    _
  // Predicated region
  $region46: #{stgcn_pallas.1} parent=0 // pred_check
    _
  $region47: #{stgcn_pallas.1} parent=0 // pred_check_branch
    %44 = sbr.rel (0) target = $region49
  $region48: #{stgcn_pallas.1} parent=0 // pred_region
    _
  $region49: #{stgcn_pallas.1} parent=0 // pred_fallthru
    _
  // Predicated region
  $region50: #{stgcn_pallas.1} parent=0 // pred_check
    _
  $region51: #{stgcn_pallas.1} parent=0 // pred_check_branch
    %46 = sbr.rel (0) target = $region53
  $region52: #{stgcn_pallas.1} parent=0 // pred_region
    _
  $region53: #{stgcn_pallas.1} parent=0 // pred_fallthru
    _
  // Predicated region
  $region54: #{stgcn_pallas.1} parent=0 // pred_check
    _
  $region55: #{stgcn_pallas.1} parent=0 // pred_check_branch
    %48 = sbr.rel (0) target = $region57
  $region56: #{stgcn_pallas.1} parent=0 // pred_region
    _
  $region57: #{stgcn_pallas.1} parent=0 // pred_fallthru
    _
  // Predicated region
  $region58: #{stgcn_pallas.1} parent=0 // pred_check
    _
  $region59: #{stgcn_pallas.1} parent=0 // pred_check_branch
    %50 = sbr.rel (0) target = $region61
  $region60: #{stgcn_pallas.1} parent=0 // pred_region
    _
  $region61: #{stgcn_pallas.1} parent=0 // pred_fallthru
    _
  // Predicated region
  $region62: #{stgcn_pallas.1} parent=0 // pred_check
    _
  $region63: #{stgcn_pallas.1} parent=0 // pred_check_branch
    %52 = sbr.rel (0) target = $region65
  $region64: #{stgcn_pallas.1} parent=0 // pred_region
    _
  $region65: #{stgcn_pallas.1} parent=0 // pred_fallthru
    _
  %v54 = vld [vmem:[%s1] sm:$0xff]
  %v55 = vld [vmem:[%s1 + $0x8] sm:$0xff]
  %v56 = vld [vmem:[%s1 + $0x10] sm:$0xff]
  %v57 = vld [vmem:[%s1 + $0x18] sm:$0xff]
  %v58 = vld [vmem:[%s1 + $0x20] sm:$0xff]
  %v59 = vld [vmem:[%s1 + $0x28] sm:$0xff]
  %v60 = vld [vmem:[%s1 + $0x30] sm:$0xff]
  %v61 = vld [vmem:[%s1 + $0x38] sm:$0xff]
  %v62 = vld [vmem:[%s1 + $0x40] sm:$0xff]
  %v63 = vld [vmem:[%s1 + $0x48] sm:$0xff]
  %v64 = vld [vmem:[%s1 + $0x50] sm:$0xff]
  %v65 = vld [vmem:[%s1 + $0x58] sm:$0xff]
  %v66 = vld [vmem:[%s1 + $0x60] sm:$0xff]
  %v67 = vld [vmem:[%s1 + $0x68] sm:$0xff]
  %v68 = vld [vmem:[%s1 + $0x70] sm:$0xff]
  %v69 = vld [vmem:[%s1 + $0x78] sm:$0xff]
  %v70 = vld [vmem:[%s1 + $0x80] sm:$0xff]
  %v71 = vld [vmem:[%s1 + $0x88] sm:$0xff]
  %v72 = vld [vmem:[%s1 + $0x90] sm:$0xff]
  %v73 = vld [vmem:[%s1 + $0x98] sm:$0xff]
  %v74 = vld [vmem:[%s1 + $0xa0] sm:$0xff]
  %v75 = vld [vmem:[%s1 + $0xa8] sm:$0xff]
  %v76 = vld [vmem:[%s1 + $0xb0] sm:$0xff]
  %v77 = vld [vmem:[%s1 + $0xb8] sm:$0xff]
  %v78 = vld [vmem:[%s1 + $0xc0] sm:$0xff]
  %v79 = vld [vmem:[%s1 + $0xc8] sm:$0xff]
  %v80 = vld [vmem:[%s1 + $0xd0] sm:$0xff]
  %v81 = vld [vmem:[%s1 + $0xd8] sm:$0xff]
  %v82 = vld [vmem:[%s1 + $0xe0] sm:$0xff]
  %v83 = vld [vmem:[%s1 + $0xe8] sm:$0xff]
  %v84 = vld [vmem:[%s1 + $0xf0] sm:$0xff]
  %v85 = vld [vmem:[%s1 + $0xf8] sm:$0xff]
  %v86 = vld [vmem:[%s2] sm:$0xf]
  %v87 = vld [vmem:[%s2 + $0x4] sm:$0xf]
  %v88 = vld [vmem:[%s2 + $0x8] sm:$0xf]
  %v89 = vld [vmem:[%s2 + $0xc] sm:$0xf]
  %v90 = vld [vmem:[%s2 + $0x10] sm:$0xf]
  %v91 = vld [vmem:[%s2 + $0x14] sm:$0xf]
  %v92 = vld [vmem:[%s2 + $0x18] sm:$0xf]
  %v93 = vld [vmem:[%s2 + $0x1c] sm:$0xf]
  %v94 = vld [vmem:[%s2 + $0x20] sm:$0xf]
  %v95 = vld [vmem:[%s2 + $0x24] sm:$0xf]
  %v96 = vld [vmem:[%s2 + $0x28] sm:$0xf]
  %v97 = vld [vmem:[%s2 + $0x2c] sm:$0xf]
  %v98 = vld [vmem:[%s2 + $0x30] sm:$0xf]
  %v99 = vld [vmem:[%s2 + $0x34] sm:$0xf]
  %v100 = vld [vmem:[%s2 + $0x38] sm:$0xf]
  %v101 = vld [vmem:[%s2 + $0x3c] sm:$0xf]
  %v102 = vld [vmem:[%s2 + $0x40] sm:$0xf]
  %v103 = vld [vmem:[%s2 + $0x44] sm:$0xf]
  %v104 = vld [vmem:[%s2 + $0x48] sm:$0xf]
  %v105 = vld [vmem:[%s2 + $0x4c] sm:$0xf]
  %v106 = vld [vmem:[%s2 + $0x50] sm:$0xf]
  %v107 = vld [vmem:[%s2 + $0x54] sm:$0xf]
  %v108 = vld [vmem:[%s2 + $0x58] sm:$0xf]
  %v109 = vld [vmem:[%s2 + $0x5c] sm:$0xf]
  %v110 = vld [vmem:[%s2 + $0x60] sm:$0xf]
  %v111 = vld [vmem:[%s2 + $0x64] sm:$0xf]
  %v112 = vld [vmem:[%s2 + $0x68] sm:$0xf]
  %v113 = vld [vmem:[%s2 + $0x6c] sm:$0xf]
  %v114 = vld [vmem:[%s2 + $0x70] sm:$0xf]
  %v115 = vld [vmem:[%s2 + $0x74] sm:$0xf]
  %v116 = vld [vmem:[%s2 + $0x78] sm:$0xf]
  %v117 = vld [vmem:[%s2 + $0x7c] sm:$0xf]
  %v118 = vld [vmem:[%s3] sm:$0xf]
  %v119 = vld [vmem:[%s3 + $0x4] sm:$0xf]
  %v120 = vld [vmem:[%s3 + $0x8] sm:$0xf]
  %v121 = vld [vmem:[%s3 + $0xc] sm:$0xf]
  %v122 = vld [vmem:[%s3 + $0x10] sm:$0xf]
  %v123 = vld [vmem:[%s3 + $0x14] sm:$0xf]
  %v124 = vld [vmem:[%s3 + $0x18] sm:$0xf]
  %v125 = vld [vmem:[%s3 + $0x1c] sm:$0xf]
  %v126 = vld [vmem:[%s3 + $0x20] sm:$0xf]
  %v127 = vld [vmem:[%s3 + $0x24] sm:$0xf]
  %v128 = vld [vmem:[%s3 + $0x28] sm:$0xf]
  %v129 = vld [vmem:[%s3 + $0x2c] sm:$0xf]
  %v130 = vld [vmem:[%s3 + $0x30] sm:$0xf]
  %v131 = vld [vmem:[%s3 + $0x34] sm:$0xf]
  %v132 = vld [vmem:[%s3 + $0x38] sm:$0xf]
  %v133 = vld [vmem:[%s3 + $0x3c] sm:$0xf]
  %v134 = vld [vmem:[%s3 + $0x40] sm:$0xf]
  %v135 = vld [vmem:[%s3 + $0x44] sm:$0xf]
  %v136 = vld [vmem:[%s3 + $0x48] sm:$0xf]
  %v137 = vld [vmem:[%s3 + $0x4c] sm:$0xf]
  %v138 = vld [vmem:[%s3 + $0x50] sm:$0xf]
  %v139 = vld [vmem:[%s3 + $0x54] sm:$0xf]
  %v140 = vld [vmem:[%s3 + $0x58] sm:$0xf]
  %v141 = vld [vmem:[%s3 + $0x5c] sm:$0xf]
  %v142 = vld [vmem:[%s3 + $0x60] sm:$0xf]
  %v143 = vld [vmem:[%s3 + $0x64] sm:$0xf]
  %v144 = vld [vmem:[%s3 + $0x68] sm:$0xf]
  %v145 = vld [vmem:[%s3 + $0x6c] sm:$0xf]
  %v146 = vld [vmem:[%s3 + $0x70] sm:$0xf]
  %v147 = vld [vmem:[%s3 + $0x74] sm:$0xf]
  %v148 = vld [vmem:[%s3 + $0x78] sm:$0xf]
  %v149 = vld [vmem:[%s3 + $0x7c] sm:$0xf]
  %v150 = vld [vmem:[%s0] sm:$0xff]
  %v151 = vld [vmem:[%s0 + $0x8] sm:$0xff]
  %v152 = vld [vmem:[%s0 + $0x10] sm:$0xff]
  %v153 = vld [vmem:[%s0 + $0x18] sm:$0xff]
  %v154 = vld [vmem:[%s0 + $0x20] sm:$0xff]
  %v155 = vld [vmem:[%s0 + $0x28] sm:$0xff]
  %v156 = vld [vmem:[%s0 + $0x30] sm:$0xff]
  %v157 = vld [vmem:[%s0 + $0x38] sm:$0xff]
  %v158 = vld [vmem:[%s0 + $0x40] sm:$0xff]
  %v159 = vld [vmem:[%s0 + $0x48] sm:$0xff]
  %v160 = vld [vmem:[%s0 + $0x50] sm:$0xff]
  %v161 = vld [vmem:[%s0 + $0x58] sm:$0xff]
  %v162 = vld [vmem:[%s0 + $0x60] sm:$0xff]
  %v163 = vld [vmem:[%s0 + $0x68] sm:$0xff]
  %v164 = vld [vmem:[%s0 + $0x70] sm:$0xff]
  %v165 = vld [vmem:[%s0 + $0x78] sm:$0xff]
  %v166 = vld [vmem:[%s0 + $0x80] sm:$0xff]
  %v167 = vld [vmem:[%s0 + $0x88] sm:$0xff]
  %v168 = vld [vmem:[%s0 + $0x90] sm:$0xff]
  %v169 = vld [vmem:[%s0 + $0x98] sm:$0xff]
  %v170 = vld [vmem:[%s0 + $0xa0] sm:$0xff]
  %v171 = vld [vmem:[%s0 + $0xa8] sm:$0xff]
  %v172 = vld [vmem:[%s0 + $0xb0] sm:$0xff]
  %v173 = vld [vmem:[%s0 + $0xb8] sm:$0xff]
  %v174 = vld [vmem:[%s0 + $0xc0] sm:$0xff]
  %v175 = vld [vmem:[%s0 + $0xc8] sm:$0xff]
  %v176 = vld [vmem:[%s0 + $0xd0] sm:$0xff]
  %v177 = vld [vmem:[%s0 + $0xd8] sm:$0xff]
  %v178 = vld [vmem:[%s0 + $0xe0] sm:$0xff]
  %v179 = vld [vmem:[%s0 + $0xe8] sm:$0xff]
  %v180 = vld [vmem:[%s0 + $0xf0] sm:$0xff]
  %v181 = vld [vmem:[%s0 + $0xf8] sm:$0xff]
  %183 = vset.pattern.permute.xlu0 0
  %184 = vperm.xlu0 %183, %v54
  %v185 = vpop.permute.xlu0 %184
  %188 = vset.pattern.permute.xlu0 0
  %189 = vperm.xlu0 %188, %v55
  %v190 = vpop.permute.xlu0 %189
  %193 = vset.pattern.permute.xlu0 0
  %194 = vperm.xlu0 %193, %v56
  %v195 = vpop.permute.xlu0 %194
  %198 = vset.pattern.permute.xlu0 0
  %199 = vperm.xlu0 %198, %v57
  %v200 = vpop.permute.xlu0 %199
  %203 = vset.pattern.permute.xlu0 0
  %204 = vperm.xlu0 %203, %v58
  %v205 = vpop.permute.xlu0 %204
  %208 = vset.pattern.permute.xlu0 0
  %209 = vperm.xlu0 %208, %v59
  %v210 = vpop.permute.xlu0 %209
  %213 = vset.pattern.permute.xlu0 0
  %214 = vperm.xlu0 %213, %v60
  %v215 = vpop.permute.xlu0 %214
  %218 = vset.pattern.permute.xlu0 0
  %219 = vperm.xlu0 %218, %v61
  %v220 = vpop.permute.xlu0 %219
  %223 = vset.pattern.permute.xlu0 0
  %224 = vperm.xlu0 %223, %v62
  %v225 = vpop.permute.xlu0 %224
  %228 = vset.pattern.permute.xlu0 0
  %229 = vperm.xlu0 %228, %v63
  %v230 = vpop.permute.xlu0 %229
  %233 = vset.pattern.permute.xlu0 0
  %234 = vperm.xlu0 %233, %v64
  %v235 = vpop.permute.xlu0 %234
  %238 = vset.pattern.permute.xlu0 0
  %239 = vperm.xlu0 %238, %v65
  %v240 = vpop.permute.xlu0 %239
  %243 = vset.pattern.permute.xlu0 0
  %244 = vperm.xlu0 %243, %v66
  %v245 = vpop.permute.xlu0 %244
  %248 = vset.pattern.permute.xlu0 0
  %249 = vperm.xlu0 %248, %v67
  %v250 = vpop.permute.xlu0 %249
  %253 = vset.pattern.permute.xlu0 0
  %254 = vperm.xlu0 %253, %v68
  %v255 = vpop.permute.xlu0 %254
  %258 = vset.pattern.permute.xlu0 0
  %259 = vperm.xlu0 %258, %v69
  %v260 = vpop.permute.xlu0 %259
  %263 = vset.pattern.permute.xlu0 0
  %264 = vperm.xlu0 %263, %v70
  %v265 = vpop.permute.xlu0 %264
  %268 = vset.pattern.permute.xlu0 0
  %269 = vperm.xlu0 %268, %v71
  %v270 = vpop.permute.xlu0 %269
  %273 = vset.pattern.permute.xlu0 0
  %274 = vperm.xlu0 %273, %v72
  %v275 = vpop.permute.xlu0 %274
  %278 = vset.pattern.permute.xlu0 0
  %279 = vperm.xlu0 %278, %v73
  %v280 = vpop.permute.xlu0 %279
  %283 = vset.pattern.permute.xlu0 0
  %284 = vperm.xlu0 %283, %v74
  %v285 = vpop.permute.xlu0 %284
  %288 = vset.pattern.permute.xlu0 0
  %289 = vperm.xlu0 %288, %v75
  %v290 = vpop.permute.xlu0 %289
  %293 = vset.pattern.permute.xlu0 0
  %294 = vperm.xlu0 %293, %v76
  %v295 = vpop.permute.xlu0 %294
  %298 = vset.pattern.permute.xlu0 0
  %299 = vperm.xlu0 %298, %v77
  %v300 = vpop.permute.xlu0 %299
  %303 = vset.pattern.permute.xlu0 0
  %304 = vperm.xlu0 %303, %v78
  %v305 = vpop.permute.xlu0 %304
  %308 = vset.pattern.permute.xlu0 0
  %309 = vperm.xlu0 %308, %v79
  %v310 = vpop.permute.xlu0 %309
  %313 = vset.pattern.permute.xlu0 0
  %314 = vperm.xlu0 %313, %v80
  %v315 = vpop.permute.xlu0 %314
  %318 = vset.pattern.permute.xlu0 0
  %319 = vperm.xlu0 %318, %v81
  %v320 = vpop.permute.xlu0 %319
  %323 = vset.pattern.permute.xlu0 0
  %324 = vperm.xlu0 %323, %v82
  %v325 = vpop.permute.xlu0 %324
  %328 = vset.pattern.permute.xlu0 0
  %329 = vperm.xlu0 %328, %v83
  %v330 = vpop.permute.xlu0 %329
  %333 = vset.pattern.permute.xlu0 0
  %334 = vperm.xlu0 %333, %v84
  %v335 = vpop.permute.xlu0 %334
  %338 = vset.pattern.permute.xlu0 0
  %339 = vperm.xlu0 %338, %v85
  %v340 = vpop.permute.xlu0 %339
  %v342 = vmul.f32 %v150, %v185
  %v343 = vmul.f32 %v151, %v190
  %v344 = vmul.f32 %v152, %v195
  %v345 = vmul.f32 %v153, %v200
  %v346 = vmul.f32 %v154, %v205
  %v347 = vmul.f32 %v155, %v210
  %v348 = vmul.f32 %v156, %v215
  %v349 = vmul.f32 %v157, %v220
  %v350 = vmul.f32 %v158, %v225
  %v351 = vmul.f32 %v159, %v230
  %v352 = vmul.f32 %v160, %v235
  %v353 = vmul.f32 %v161, %v240
  %v354 = vmul.f32 %v162, %v245
  %v355 = vmul.f32 %v163, %v250
  %v356 = vmul.f32 %v164, %v255
  %v357 = vmul.f32 %v165, %v260
  %v358 = vmul.f32 %v166, %v265
  %v359 = vmul.f32 %v167, %v270
  %v360 = vmul.f32 %v168, %v275
  %v361 = vmul.f32 %v169, %v280
  %v362 = vmul.f32 %v170, %v285
  %v363 = vmul.f32 %v171, %v290
  %v364 = vmul.f32 %v172, %v295
  %v365 = vmul.f32 %v173, %v300
  %v366 = vmul.f32 %v174, %v305
  %v367 = vmul.f32 %v175, %v310
  %v368 = vmul.f32 %v176, %v315
  %v369 = vmul.f32 %v177, %v320
  %v370 = vmul.f32 %v178, %v325
  %v371 = vmul.f32 %v179, %v330
  %v372 = vmul.f32 %v180, %v335
  %v373 = vmul.f32 %v181, %v340
  %v374 = vpack.c.bf16 %v343, %v342
  %v375 = vpack.c.bf16 %v345, %v344
  %v376 = vpack.c.bf16 %v347, %v346
  %v377 = vpack.c.bf16 %v349, %v348
  %v378 = vpack.c.bf16 %v351, %v350
  %v379 = vpack.c.bf16 %v353, %v352
  %v380 = vpack.c.bf16 %v355, %v354
  %v381 = vpack.c.bf16 %v357, %v356
  %v382 = vpack.c.bf16 %v359, %v358
  %v383 = vpack.c.bf16 %v361, %v360
  %v384 = vpack.c.bf16 %v363, %v362
  %v385 = vpack.c.bf16 %v365, %v364
  %v386 = vpack.c.bf16 %v367, %v366
  %v387 = vpack.c.bf16 %v369, %v368
  %v388 = vpack.c.bf16 %v371, %v370
  %v389 = vpack.c.bf16 %v373, %v372
  %v390 = vld [vmem:[%s4] sm:$0xf]
  %v391 = vld [vmem:[%s5] sm:$0x1]
  %v393 = vlaneseq
  %v394 = vshrl.u32 %v393, 7
  %v395 = vsub.s32 0, %v394
  %v396 = vrot.slane %v391, %v395
  %vm398 = vcmask 64512
  %v400 = vsel %vm398, %v374, 0
  %v403 = vsel %vm398, %v375, 0
  %v406 = vsel %vm398, %v376, 0
  %v409 = vsel %vm398, %v377, 0
  %v412 = vsel %vm398, %v378, 0
  %v415 = vsel %vm398, %v379, 0
  %v418 = vsel %vm398, %v380, 0
  %v421 = vsel %vm398, %v381, 0
  %v424 = vsel %vm398, %v382, 0
  %v427 = vsel %vm398, %v383, 0
  %v430 = vsel %vm398, %v384, 0
  %v433 = vsel %vm398, %v385, 0
  %v436 = vsel %vm398, %v386, 0
  %v439 = vsel %vm398, %v387, 0
  %v442 = vsel %vm398, %v388, 0
  %v445 = vsel %vm398, %v389, 0
  %vm447 = vcmask 1043456
  %v449 = vsel %vm447, %v390, 0
  %451 = vmatprep.subr.bf16.mxu0 0
  %452 = vmatpush1.bf16.msra.mxu0 %v449
  %453 = vmatprep.subr.bf16.mxu0 0
  %454 = vmatpush1.bf16.msra.mxu0 0
  %455 = vmatprep.subr.bf16.mxu0 0
  %456 = vmatpush1.bf16.msra.mxu0 0
  %457 = vmatprep.subr.bf16.mxu0 0
  %458 = vmatpush1.bf16.msra.mxu0 0
  %459 = vmatprep.subr.bf16.mxu0 0
  %460 = vmatpush1.bf16.msra.mxu0 0
  %461 = vmatprep.subr.bf16.mxu0 0
  %462 = vmatpush1.bf16.msra.mxu0 0
  %463 = vmatprep.subr.bf16.mxu0 0
  %464 = vmatpush1.bf16.msra.mxu0 0
  %465 = vmatprep.subr.bf16.mxu0 0
  %466 = vmatpush1.bf16.msra.mxu0 0
  %467 = vmatprep.subr.bf16.mxu0 0
  %468 = vmatpush1.bf16.msra.mxu0 0
  %469 = vmatprep.subr.bf16.mxu0 0
  %470 = vmatpush1.bf16.msra.mxu0 0
  %471 = vmatprep.subr.bf16.mxu0 0
  %472 = vmatpush1.bf16.msra.mxu0 0
  %473 = vmatprep.subr.bf16.mxu0 0
  %474 = vmatpush1.bf16.msra.mxu0 0
  %475 = vmatprep.subr.bf16.mxu0 0
  %476 = vmatpush1.bf16.msra.mxu0 0
  %477 = vmatprep.subr.bf16.mxu0 0
  %478 = vmatpush1.bf16.msra.mxu0 0
  %479 = vmatprep.subr.bf16.mxu0 0
  %480 = vmatpush1.bf16.msra.mxu0 0
  %481 = vmatprep.subr.bf16.mxu0 0
  %482 = vmatpush1.bf16.msra.mxu0 0
  %483 = vmatprep.mubr.bf16.mxu0 0
  %484 = vmatmul.mubr.bf16.gmra.mrb[0].mxu0 %v400
  %v485 = vpop.f32.mrb[0].mxu0
  %v486 = vadd.f32 %v396, %v485
  %v487 = vpop.f32.mrb[0].mxu0
  %v488 = vpop.f32.mrb[0].mxu0
  %v489 = vadd.f32 %v396, %v488
  %v490 = vpop.f32.mrb[0].mxu0
  %491 = vmatprep.mubr.bf16.mxu0 0
  %492 = vmatmul.mubr.bf16.gmra.mrb[0].mxu0 %v403
  %v493 = vpop.f32.mrb[0].mxu0
  %v494 = vadd.f32 %v396, %v493
  %v495 = vpop.f32.mrb[0].mxu0
  %v496 = vpop.f32.mrb[0].mxu0
  %v497 = vadd.f32 %v396, %v496
  %v498 = vpop.f32.mrb[0].mxu0
  %499 = vmatprep.mubr.bf16.mxu0 0
  %500 = vmatmul.mubr.bf16.gmra.mrb[0].mxu0 %v406
  %v501 = vpop.f32.mrb[0].mxu0
  %v502 = vadd.f32 %v396, %v501
  %v503 = vpop.f32.mrb[0].mxu0
  %v504 = vpop.f32.mrb[0].mxu0
  %v505 = vadd.f32 %v396, %v504
  %v506 = vpop.f32.mrb[0].mxu0
  %507 = vmatprep.mubr.bf16.mxu0 0
  %508 = vmatmul.mubr.bf16.gmra.mrb[0].mxu0 %v409
  %v509 = vpop.f32.mrb[0].mxu0
  %v510 = vadd.f32 %v396, %v509
  %v511 = vpop.f32.mrb[0].mxu0
  %v512 = vpop.f32.mrb[0].mxu0
  %v513 = vadd.f32 %v396, %v512
  %v514 = vpop.f32.mrb[0].mxu0
  %515 = vmatprep.mubr.bf16.mxu0 0
  %516 = vmatmul.mubr.bf16.gmra.mrb[0].mxu0 %v412
  %v517 = vpop.f32.mrb[0].mxu0
  %v518 = vadd.f32 %v396, %v517
  %v519 = vpop.f32.mrb[0].mxu0
  %v520 = vpop.f32.mrb[0].mxu0
  %v521 = vadd.f32 %v396, %v520
  %v522 = vpop.f32.mrb[0].mxu0
  %523 = vmatprep.mubr.bf16.mxu0 0
  %524 = vmatmul.mubr.bf16.gmra.mrb[0].mxu0 %v415
  %v525 = vpop.f32.mrb[0].mxu0
  %v526 = vadd.f32 %v396, %v525
  %v527 = vpop.f32.mrb[0].mxu0
  %v528 = vpop.f32.mrb[0].mxu0
  %v529 = vadd.f32 %v396, %v528
  %v530 = vpop.f32.mrb[0].mxu0
  %531 = vmatprep.mubr.bf16.mxu0 0
  %532 = vmatmul.mubr.bf16.gmra.mrb[0].mxu0 %v418
  %v533 = vpop.f32.mrb[0].mxu0
  %v534 = vadd.f32 %v396, %v533
  %v535 = vpop.f32.mrb[0].mxu0
  %v536 = vpop.f32.mrb[0].mxu0
  %v537 = vadd.f32 %v396, %v536
  %v538 = vpop.f32.mrb[0].mxu0
  %539 = vmatprep.mubr.bf16.mxu0 0
  %540 = vmatmul.mubr.bf16.gmra.mrb[0].mxu0 %v421
  %v541 = vpop.f32.mrb[0].mxu0
  %v542 = vadd.f32 %v396, %v541
  %v543 = vpop.f32.mrb[0].mxu0
  %v544 = vpop.f32.mrb[0].mxu0
  %v545 = vadd.f32 %v396, %v544
  %v546 = vpop.f32.mrb[0].mxu0
  %547 = vmatprep.mubr.bf16.mxu0 0
  %548 = vmatmul.mubr.bf16.gmra.mrb[0].mxu0 %v424
  %v549 = vpop.f32.mrb[0].mxu0
  %v550 = vadd.f32 %v396, %v549
  %v551 = vpop.f32.mrb[0].mxu0
  %v552 = vpop.f32.mrb[0].mxu0
  %v553 = vadd.f32 %v396, %v552
  %v554 = vpop.f32.mrb[0].mxu0
  %555 = vmatprep.mubr.bf16.mxu0 0
  %556 = vmatmul.mubr.bf16.gmra.mrb[0].mxu0 %v427
  %v557 = vpop.f32.mrb[0].mxu0
  %v558 = vadd.f32 %v396, %v557
  %v559 = vpop.f32.mrb[0].mxu0
  %v560 = vpop.f32.mrb[0].mxu0
  %v561 = vadd.f32 %v396, %v560
  %v562 = vpop.f32.mrb[0].mxu0
  %563 = vmatprep.mubr.bf16.mxu0 0
  %564 = vmatmul.mubr.bf16.gmra.mrb[0].mxu0 %v430
  %v565 = vpop.f32.mrb[0].mxu0
  %v566 = vadd.f32 %v396, %v565
  %v567 = vpop.f32.mrb[0].mxu0
  %v568 = vpop.f32.mrb[0].mxu0
  %v569 = vadd.f32 %v396, %v568
  %v570 = vpop.f32.mrb[0].mxu0
  %571 = vmatprep.mubr.bf16.mxu0 0
  %572 = vmatmul.mubr.bf16.gmra.mrb[0].mxu0 %v433
  %v573 = vpop.f32.mrb[0].mxu0
  %v574 = vadd.f32 %v396, %v573
  %v575 = vpop.f32.mrb[0].mxu0
  %v576 = vpop.f32.mrb[0].mxu0
  %v577 = vadd.f32 %v396, %v576
  %v578 = vpop.f32.mrb[0].mxu0
  %579 = vmatprep.mubr.bf16.mxu0 0
  %580 = vmatmul.mubr.bf16.gmra.mrb[0].mxu0 %v436
  %v581 = vpop.f32.mrb[0].mxu0
  %v582 = vadd.f32 %v396, %v581
  %v583 = vpop.f32.mrb[0].mxu0
  %v584 = vpop.f32.mrb[0].mxu0
  %v585 = vadd.f32 %v396, %v584
  %v586 = vpop.f32.mrb[0].mxu0
  %587 = vmatprep.mubr.bf16.mxu0 0
  %588 = vmatmul.mubr.bf16.gmra.mrb[0].mxu0 %v439
  %v589 = vpop.f32.mrb[0].mxu0
  %v590 = vadd.f32 %v396, %v589
  %v591 = vpop.f32.mrb[0].mxu0
  %v592 = vpop.f32.mrb[0].mxu0
  %v593 = vadd.f32 %v396, %v592
  %v594 = vpop.f32.mrb[0].mxu0
  %595 = vmatprep.mubr.bf16.mxu0 0
  %596 = vmatmul.mubr.bf16.gmra.mrb[0].mxu0 %v442
  %v597 = vpop.f32.mrb[0].mxu0
  %v598 = vadd.f32 %v396, %v597
  %v599 = vpop.f32.mrb[0].mxu0
  %v600 = vpop.f32.mrb[0].mxu0
  %v601 = vadd.f32 %v396, %v600
  %v602 = vpop.f32.mrb[0].mxu0
  %603 = vmatprep.mubr.bf16.mxu0 0
  %604 = vmatmul.mubr.bf16.gmra.mrb[0].mxu0 %v445
  %v605 = vpop.f32.mrb[0].mxu0
  %v606 = vadd.f32 %v396, %v605
  %v607 = vpop.f32.mrb[0].mxu0
  %v608 = vpop.f32.mrb[0].mxu0
  %v609 = vadd.f32 %v396, %v608
  %v610 = vpop.f32.mrb[0].mxu0
  %611 = vdwg.mxu0
  %v612 = vpack.c.bf16 %v489, %v486
  %v613 = vpack.c.bf16 %v497, %v494
  %v614 = vpack.c.bf16 %v505, %v502
  %v615 = vpack.c.bf16 %v513, %v510
  %v616 = vpack.c.bf16 %v521, %v518
  %v617 = vpack.c.bf16 %v529, %v526
  %v618 = vpack.c.bf16 %v537, %v534
  %v619 = vpack.c.bf16 %v545, %v542
  %v620 = vpack.c.bf16 %v553, %v550
  %v621 = vpack.c.bf16 %v561, %v558
  %v622 = vpack.c.bf16 %v569, %v566
  %v623 = vpack.c.bf16 %v577, %v574
  %v624 = vpack.c.bf16 %v585, %v582
  %v625 = vpack.c.bf16 %v593, %v590
  %v626 = vpack.c.bf16 %v601, %v598
  %v627 = vpack.c.bf16 %v609, %v606
  %629 = vset.pattern.permute.xlu0 0
  %630 = vperm.xlu0 %629, %v86
  %v631 = vpop.permute.xlu0 %630
  %v634 = vunpack.c.l.s4 839922192
  %v635 = vunpack.c.0.s8 %v634
  %v636 = vlaneseq
  %v637 = vshrl.u32 %v636, 7
  %v638 = vsub.s32 %v635, %v637
  %v639 = vrot.slane %v631, %v638
  %641 = vset.pattern.permute.xlu0 0
  %642 = vperm.xlu0 %641, %v87
  %v643 = vpop.permute.xlu0 %642
  %v646 = vunpack.c.l.s4 839922192
  %v647 = vunpack.c.0.s8 %v646
  %v648 = vlaneseq
  %v649 = vshrl.u32 %v648, 7
  %v650 = vsub.s32 %v647, %v649
  %v651 = vrot.slane %v643, %v650
  %653 = vset.pattern.permute.xlu0 0
  %654 = vperm.xlu0 %653, %v88
  %v655 = vpop.permute.xlu0 %654
  %v658 = vunpack.c.l.s4 839922192
  %v659 = vunpack.c.0.s8 %v658
  %v660 = vlaneseq
  %v661 = vshrl.u32 %v660, 7
  %v662 = vsub.s32 %v659, %v661
  %v663 = vrot.slane %v655, %v662
  %665 = vset.pattern.permute.xlu0 0
  %666 = vperm.xlu0 %665, %v89
  %v667 = vpop.permute.xlu0 %666
  %v670 = vunpack.c.l.s4 839922192
  %v671 = vunpack.c.0.s8 %v670
  %v672 = vlaneseq
  %v673 = vshrl.u32 %v672, 7
  %v674 = vsub.s32 %v671, %v673
  %v675 = vrot.slane %v667, %v674
  %677 = vset.pattern.permute.xlu0 0
  %678 = vperm.xlu0 %677, %v90
  %v679 = vpop.permute.xlu0 %678
  %v682 = vunpack.c.l.s4 839922192
  %v683 = vunpack.c.0.s8 %v682
  %v684 = vlaneseq
  %v685 = vshrl.u32 %v684, 7
  %v686 = vsub.s32 %v683, %v685
  %v687 = vrot.slane %v679, %v686
  %689 = vset.pattern.permute.xlu0 0
  %690 = vperm.xlu0 %689, %v91
  %v691 = vpop.permute.xlu0 %690
  %v694 = vunpack.c.l.s4 839922192
  %v695 = vunpack.c.0.s8 %v694
  %v696 = vlaneseq
  %v697 = vshrl.u32 %v696, 7
  %v698 = vsub.s32 %v695, %v697
  %v699 = vrot.slane %v691, %v698
  %701 = vset.pattern.permute.xlu0 0
  %702 = vperm.xlu0 %701, %v92
  %v703 = vpop.permute.xlu0 %702
  %v706 = vunpack.c.l.s4 839922192
  %v707 = vunpack.c.0.s8 %v706
  %v708 = vlaneseq
  %v709 = vshrl.u32 %v708, 7
  %v710 = vsub.s32 %v707, %v709
  %v711 = vrot.slane %v703, %v710
  %713 = vset.pattern.permute.xlu0 0
  %714 = vperm.xlu0 %713, %v93
  %v715 = vpop.permute.xlu0 %714
  %v718 = vunpack.c.l.s4 839922192
  %v719 = vunpack.c.0.s8 %v718
  %v720 = vlaneseq
  %v721 = vshrl.u32 %v720, 7
  %v722 = vsub.s32 %v719, %v721
  %v723 = vrot.slane %v715, %v722
  %725 = vset.pattern.permute.xlu0 0
  %726 = vperm.xlu0 %725, %v94
  %v727 = vpop.permute.xlu0 %726
  %v730 = vunpack.c.l.s4 839922192
  %v731 = vunpack.c.0.s8 %v730
  %v732 = vlaneseq
  %v733 = vshrl.u32 %v732, 7
  %v734 = vsub.s32 %v731, %v733
  %v735 = vrot.slane %v727, %v734
  %737 = vset.pattern.permute.xlu0 0
  %738 = vperm.xlu0 %737, %v95
  %v739 = vpop.permute.xlu0 %738
  %v742 = vunpack.c.l.s4 839922192
  %v743 = vunpack.c.0.s8 %v742
  %v744 = vlaneseq
  %v745 = vshrl.u32 %v744, 7
  %v746 = vsub.s32 %v743, %v745
  %v747 = vrot.slane %v739, %v746
  %749 = vset.pattern.permute.xlu0 0
  %750 = vperm.xlu0 %749, %v96
  %v751 = vpop.permute.xlu0 %750
  %v754 = vunpack.c.l.s4 839922192
  %v755 = vunpack.c.0.s8 %v754
  %v756 = vlaneseq
  %v757 = vshrl.u32 %v756, 7
  %v758 = vsub.s32 %v755, %v757
  %v759 = vrot.slane %v751, %v758
  %761 = vset.pattern.permute.xlu0 0
  %762 = vperm.xlu0 %761, %v97
  %v763 = vpop.permute.xlu0 %762
  %v766 = vunpack.c.l.s4 839922192
  %v767 = vunpack.c.0.s8 %v766
  %v768 = vlaneseq
  %v769 = vshrl.u32 %v768, 7
  %v770 = vsub.s32 %v767, %v769
  %v771 = vrot.slane %v763, %v770
  %773 = vset.pattern.permute.xlu0 0
  %774 = vperm.xlu0 %773, %v98
  %v775 = vpop.permute.xlu0 %774
  %v778 = vunpack.c.l.s4 839922192
  %v779 = vunpack.c.0.s8 %v778
  %v780 = vlaneseq
  %v781 = vshrl.u32 %v780, 7
  %v782 = vsub.s32 %v779, %v781
  %v783 = vrot.slane %v775, %v782
  %785 = vset.pattern.permute.xlu0 0
  %786 = vperm.xlu0 %785, %v99
  %v787 = vpop.permute.xlu0 %786
  %v790 = vunpack.c.l.s4 839922192
  %v791 = vunpack.c.0.s8 %v790
  %v792 = vlaneseq
  %v793 = vshrl.u32 %v792, 7
  %v794 = vsub.s32 %v791, %v793
  %v795 = vrot.slane %v787, %v794
  %797 = vset.pattern.permute.xlu0 0
  %798 = vperm.xlu0 %797, %v100
  %v799 = vpop.permute.xlu0 %798
  %v802 = vunpack.c.l.s4 839922192
  %v803 = vunpack.c.0.s8 %v802
  %v804 = vlaneseq
  %v805 = vshrl.u32 %v804, 7
  %v806 = vsub.s32 %v803, %v805
  %v807 = vrot.slane %v799, %v806
  %809 = vset.pattern.permute.xlu0 0
  %810 = vperm.xlu0 %809, %v101
  %v811 = vpop.permute.xlu0 %810
  %v814 = vunpack.c.l.s4 839922192
  %v815 = vunpack.c.0.s8 %v814
  %v816 = vlaneseq
  %v817 = vshrl.u32 %v816, 7
  %v818 = vsub.s32 %v815, %v817
  %v819 = vrot.slane %v811, %v818
  %821 = vset.pattern.permute.xlu0 0
  %822 = vperm.xlu0 %821, %v102
  %v823 = vpop.permute.xlu0 %822
  %v826 = vunpack.c.l.s4 839922192
  %v827 = vunpack.c.0.s8 %v826
  %v828 = vlaneseq
  %v829 = vshrl.u32 %v828, 7
  %v830 = vsub.s32 %v827, %v829
  %v831 = vrot.slane %v823, %v830
  %833 = vset.pattern.permute.xlu0 0
  %834 = vperm.xlu0 %833, %v103
  %v835 = vpop.permute.xlu0 %834
  %v838 = vunpack.c.l.s4 839922192
  %v839 = vunpack.c.0.s8 %v838
  %v840 = vlaneseq
  %v841 = vshrl.u32 %v840, 7
  %v842 = vsub.s32 %v839, %v841
  %v843 = vrot.slane %v835, %v842
  %845 = vset.pattern.permute.xlu0 0
  %846 = vperm.xlu0 %845, %v104
  %v847 = vpop.permute.xlu0 %846
  %v850 = vunpack.c.l.s4 839922192
  %v851 = vunpack.c.0.s8 %v850
  %v852 = vlaneseq
  %v853 = vshrl.u32 %v852, 7
  %v854 = vsub.s32 %v851, %v853
  %v855 = vrot.slane %v847, %v854
  %857 = vset.pattern.permute.xlu0 0
  %858 = vperm.xlu0 %857, %v105
  %v859 = vpop.permute.xlu0 %858
  %v862 = vunpack.c.l.s4 839922192
  %v863 = vunpack.c.0.s8 %v862
  %v864 = vlaneseq
  %v865 = vshrl.u32 %v864, 7
  %v866 = vsub.s32 %v863, %v865
  %v867 = vrot.slane %v859, %v866
  %869 = vset.pattern.permute.xlu0 0
  %870 = vperm.xlu0 %869, %v106
  %v871 = vpop.permute.xlu0 %870
  %v874 = vunpack.c.l.s4 839922192
  %v875 = vunpack.c.0.s8 %v874
  %v876 = vlaneseq
  %v877 = vshrl.u32 %v876, 7
  %v878 = vsub.s32 %v875, %v877
  %v879 = vrot.slane %v871, %v878
  %881 = vset.pattern.permute.xlu0 0
  %882 = vperm.xlu0 %881, %v107
  %v883 = vpop.permute.xlu0 %882
  %v886 = vunpack.c.l.s4 839922192
  %v887 = vunpack.c.0.s8 %v886
  %v888 = vlaneseq
  %v889 = vshrl.u32 %v888, 7
  %v890 = vsub.s32 %v887, %v889
  %v891 = vrot.slane %v883, %v890
  %893 = vset.pattern.permute.xlu0 0
  %894 = vperm.xlu0 %893, %v108
  %v895 = vpop.permute.xlu0 %894
  %v898 = vunpack.c.l.s4 839922192
  %v899 = vunpack.c.0.s8 %v898
  %v900 = vlaneseq
  %v901 = vshrl.u32 %v900, 7
  %v902 = vsub.s32 %v899, %v901
  %v903 = vrot.slane %v895, %v902
  %905 = vset.pattern.permute.xlu0 0
  %906 = vperm.xlu0 %905, %v109
  %v907 = vpop.permute.xlu0 %906
  %v910 = vunpack.c.l.s4 839922192
  %v911 = vunpack.c.0.s8 %v910
  %v912 = vlaneseq
  %v913 = vshrl.u32 %v912, 7
  %v914 = vsub.s32 %v911, %v913
  %v915 = vrot.slane %v907, %v914
  %917 = vset.pattern.permute.xlu0 0
  %918 = vperm.xlu0 %917, %v110
  %v919 = vpop.permute.xlu0 %918
  %v922 = vunpack.c.l.s4 839922192
  %v923 = vunpack.c.0.s8 %v922
  %v924 = vlaneseq
  %v925 = vshrl.u32 %v924, 7
  %v926 = vsub.s32 %v923, %v925
  %v927 = vrot.slane %v919, %v926
  %929 = vset.pattern.permute.xlu0 0
  %930 = vperm.xlu0 %929, %v111
  %v931 = vpop.permute.xlu0 %930
  %v934 = vunpack.c.l.s4 839922192
  %v935 = vunpack.c.0.s8 %v934
  %v936 = vlaneseq
  %v937 = vshrl.u32 %v936, 7
  %v938 = vsub.s32 %v935, %v937
  %v939 = vrot.slane %v931, %v938
  %941 = vset.pattern.permute.xlu0 0
  %942 = vperm.xlu0 %941, %v112
  %v943 = vpop.permute.xlu0 %942
  %v946 = vunpack.c.l.s4 839922192
  %v947 = vunpack.c.0.s8 %v946
  %v948 = vlaneseq
  %v949 = vshrl.u32 %v948, 7
  %v950 = vsub.s32 %v947, %v949
  %v951 = vrot.slane %v943, %v950
  %953 = vset.pattern.permute.xlu0 0
  %954 = vperm.xlu0 %953, %v113
  %v955 = vpop.permute.xlu0 %954
  %v958 = vunpack.c.l.s4 839922192
  %v959 = vunpack.c.0.s8 %v958
  %v960 = vlaneseq
  %v961 = vshrl.u32 %v960, 7
  %v962 = vsub.s32 %v959, %v961
  %v963 = vrot.slane %v955, %v962
  %965 = vset.pattern.permute.xlu0 0
  %966 = vperm.xlu0 %965, %v114
  %v967 = vpop.permute.xlu0 %966
  %v970 = vunpack.c.l.s4 839922192
  %v971 = vunpack.c.0.s8 %v970
  %v972 = vlaneseq
  %v973 = vshrl.u32 %v972, 7
  %v974 = vsub.s32 %v971, %v973
  %v975 = vrot.slane %v967, %v974
  %977 = vset.pattern.permute.xlu0 0
  %978 = vperm.xlu0 %977, %v115
  %v979 = vpop.permute.xlu0 %978
  %v982 = vunpack.c.l.s4 839922192
  %v983 = vunpack.c.0.s8 %v982
  %v984 = vlaneseq
  %v985 = vshrl.u32 %v984, 7
  %v986 = vsub.s32 %v983, %v985
  %v987 = vrot.slane %v979, %v986
  %989 = vset.pattern.permute.xlu0 0
  %990 = vperm.xlu0 %989, %v116
  %v991 = vpop.permute.xlu0 %990
  %v994 = vunpack.c.l.s4 839922192
  %v995 = vunpack.c.0.s8 %v994
  %v996 = vlaneseq
  %v997 = vshrl.u32 %v996, 7
  %v998 = vsub.s32 %v995, %v997
  %v999 = vrot.slane %v991, %v998
  %1001 = vset.pattern.permute.xlu0 0
  %1002 = vperm.xlu0 %1001, %v117
  %v1003 = vpop.permute.xlu0 %1002
  %v1006 = vunpack.c.l.s4 839922192
  %v1007 = vunpack.c.0.s8 %v1006
  %v1008 = vlaneseq
  %v1009 = vshrl.u32 %v1008, 7
  %v1010 = vsub.s32 %v1007, %v1009
  %v1011 = vrot.slane %v1003, %v1010
  %v1044 = vunpack.c.l.b16 %v639
  %v1045 = vunpack.c.l.b16 %v651
  %v1046 = vunpack.c.l.b16 %v663
  %v1047 = vunpack.c.l.b16 %v675
  %v1048 = vunpack.c.l.b16 %v687
  %v1049 = vunpack.c.l.b16 %v699
  %v1050 = vunpack.c.l.b16 %v711
  %v1051 = vunpack.c.l.b16 %v723
  %v1052 = vunpack.c.l.b16 %v735
  %v1053 = vunpack.c.l.b16 %v747
  %v1054 = vunpack.c.l.b16 %v759
  %v1055 = vunpack.c.l.b16 %v771
  %v1056 = vunpack.c.l.b16 %v783
  %v1057 = vunpack.c.l.b16 %v795
  %v1058 = vunpack.c.l.b16 %v807
  %v1059 = vunpack.c.l.b16 %v819
  %v1060 = vunpack.c.l.b16 %v831
  %v1061 = vunpack.c.l.b16 %v843
  %v1062 = vunpack.c.l.b16 %v855
  %v1063 = vunpack.c.l.b16 %v867
  %v1064 = vunpack.c.l.b16 %v879
  %v1065 = vunpack.c.l.b16 %v891
  %v1066 = vunpack.c.l.b16 %v903
  %v1067 = vunpack.c.l.b16 %v915
  %v1068 = vunpack.c.l.b16 %v927
  %v1069 = vunpack.c.l.b16 %v939
  %v1070 = vunpack.c.l.b16 %v951
  %v1071 = vunpack.c.l.b16 %v963
  %v1072 = vunpack.c.l.b16 %v975
  %v1073 = vunpack.c.l.b16 %v987
  %v1074 = vunpack.c.l.b16 %v999
  %v1075 = vunpack.c.l.b16 %v1011
  %v1076 = vpack.c.b16 %v1045, %v1044
  %v1077 = vpack.c.b16 %v1047, %v1046
  %v1078 = vpack.c.b16 %v1049, %v1048
  %v1079 = vpack.c.b16 %v1051, %v1050
  %v1080 = vpack.c.b16 %v1053, %v1052
  %v1081 = vpack.c.b16 %v1055, %v1054
  %v1082 = vpack.c.b16 %v1057, %v1056
  %v1083 = vpack.c.b16 %v1059, %v1058
  %v1084 = vpack.c.b16 %v1061, %v1060
  %v1085 = vpack.c.b16 %v1063, %v1062
  %v1086 = vpack.c.b16 %v1065, %v1064
  %v1087 = vpack.c.b16 %v1067, %v1066
  %v1088 = vpack.c.b16 %v1069, %v1068
  %v1089 = vpack.c.b16 %v1071, %v1070
  %v1090 = vpack.c.b16 %v1073, %v1072
  %v1091 = vpack.c.b16 %v1075, %v1074
  %v1108 = vmul.bf16 %v627, %v1076
  %v1109 = vmul.bf16 %v612, %v1077
  %v1110 = vmul.bf16 %v613, %v1078
  %v1111 = vmul.bf16 %v614, %v1079
  %v1112 = vmul.bf16 %v615, %v1080
  %v1113 = vmul.bf16 %v616, %v1081
  %v1114 = vmul.bf16 %v617, %v1082
  %v1115 = vmul.bf16 %v618, %v1083
  %v1116 = vmul.bf16 %v619, %v1084
  %v1117 = vmul.bf16 %v620, %v1085
  %v1118 = vmul.bf16 %v621, %v1086
  %v1119 = vmul.bf16 %v622, %v1087
  %v1120 = vmul.bf16 %v623, %v1088
  %v1121 = vmul.bf16 %v624, %v1089
  %v1122 = vmul.bf16 %v625, %v1090
  %v1123 = vmul.bf16 %v626, %v1091
  %1125 = vset.pattern.permute.xlu0 0
  %1126 = vperm.xlu0 %1125, %v118
  %v1127 = vpop.permute.xlu0 %1126
  %v1130 = vunpack.c.l.s4 839922192
  %v1131 = vunpack.c.0.s8 %v1130
  %v1132 = vlaneseq
  %v1133 = vshrl.u32 %v1132, 7
  %v1134 = vsub.s32 %v1131, %v1133
  %v1135 = vrot.slane %v1127, %v1134
  %1137 = vset.pattern.permute.xlu0 0
  %1138 = vperm.xlu0 %1137, %v119
  %v1139 = vpop.permute.xlu0 %1138
  %v1142 = vunpack.c.l.s4 839922192
  %v1143 = vunpack.c.0.s8 %v1142
  %v1144 = vlaneseq
  %v1145 = vshrl.u32 %v1144, 7
  %v1146 = vsub.s32 %v1143, %v1145
  %v1147 = vrot.slane %v1139, %v1146
  %1149 = vset.pattern.permute.xlu0 0
  %1150 = vperm.xlu0 %1149, %v120
  %v1151 = vpop.permute.xlu0 %1150
  %v1154 = vunpack.c.l.s4 839922192
  %v1155 = vunpack.c.0.s8 %v1154
  %v1156 = vlaneseq
  %v1157 = vshrl.u32 %v1156, 7
  %v1158 = vsub.s32 %v1155, %v1157
  %v1159 = vrot.slane %v1151, %v1158
  %1161 = vset.pattern.permute.xlu0 0
  %1162 = vperm.xlu0 %1161, %v121
  %v1163 = vpop.permute.xlu0 %1162
  %v1166 = vunpack.c.l.s4 839922192
  %v1167 = vunpack.c.0.s8 %v1166
  %v1168 = vlaneseq
  %v1169 = vshrl.u32 %v1168, 7
  %v1170 = vsub.s32 %v1167, %v1169
  %v1171 = vrot.slane %v1163, %v1170
  %1173 = vset.pattern.permute.xlu0 0
  %1174 = vperm.xlu0 %1173, %v122
  %v1175 = vpop.permute.xlu0 %1174
  %v1178 = vunpack.c.l.s4 839922192
  %v1179 = vunpack.c.0.s8 %v1178
  %v1180 = vlaneseq
  %v1181 = vshrl.u32 %v1180, 7
  %v1182 = vsub.s32 %v1179, %v1181
  %v1183 = vrot.slane %v1175, %v1182
  %1185 = vset.pattern.permute.xlu0 0
  %1186 = vperm.xlu0 %1185, %v123
  %v1187 = vpop.permute.xlu0 %1186
  %v1190 = vunpack.c.l.s4 839922192
  %v1191 = vunpack.c.0.s8 %v1190
  %v1192 = vlaneseq
  %v1193 = vshrl.u32 %v1192, 7
  %v1194 = vsub.s32 %v1191, %v1193
  %v1195 = vrot.slane %v1187, %v1194
  %1197 = vset.pattern.permute.xlu0 0
  %1198 = vperm.xlu0 %1197, %v124
  %v1199 = vpop.permute.xlu0 %1198
  %v1202 = vunpack.c.l.s4 839922192
  %v1203 = vunpack.c.0.s8 %v1202
  %v1204 = vlaneseq
  %v1205 = vshrl.u32 %v1204, 7
  %v1206 = vsub.s32 %v1203, %v1205
  %v1207 = vrot.slane %v1199, %v1206
  %1209 = vset.pattern.permute.xlu0 0
  %1210 = vperm.xlu0 %1209, %v125
  %v1211 = vpop.permute.xlu0 %1210
  %v1214 = vunpack.c.l.s4 839922192
  %v1215 = vunpack.c.0.s8 %v1214
  %v1216 = vlaneseq
  %v1217 = vshrl.u32 %v1216, 7
  %v1218 = vsub.s32 %v1215, %v1217
  %v1219 = vrot.slane %v1211, %v1218
  %1221 = vset.pattern.permute.xlu0 0
  %1222 = vperm.xlu0 %1221, %v126
  %v1223 = vpop.permute.xlu0 %1222
  %v1226 = vunpack.c.l.s4 839922192
  %v1227 = vunpack.c.0.s8 %v1226
  %v1228 = vlaneseq
  %v1229 = vshrl.u32 %v1228, 7
  %v1230 = vsub.s32 %v1227, %v1229
  %v1231 = vrot.slane %v1223, %v1230
  %1233 = vset.pattern.permute.xlu0 0
  %1234 = vperm.xlu0 %1233, %v127
  %v1235 = vpop.permute.xlu0 %1234
  %v1238 = vunpack.c.l.s4 839922192
  %v1239 = vunpack.c.0.s8 %v1238
  %v1240 = vlaneseq
  %v1241 = vshrl.u32 %v1240, 7
  %v1242 = vsub.s32 %v1239, %v1241
  %v1243 = vrot.slane %v1235, %v1242
  %1245 = vset.pattern.permute.xlu0 0
  %1246 = vperm.xlu0 %1245, %v128
  %v1247 = vpop.permute.xlu0 %1246
  %v1250 = vunpack.c.l.s4 839922192
  %v1251 = vunpack.c.0.s8 %v1250
  %v1252 = vlaneseq
  %v1253 = vshrl.u32 %v1252, 7
  %v1254 = vsub.s32 %v1251, %v1253
  %v1255 = vrot.slane %v1247, %v1254
  %1257 = vset.pattern.permute.xlu0 0
  %1258 = vperm.xlu0 %1257, %v129
  %v1259 = vpop.permute.xlu0 %1258
  %v1262 = vunpack.c.l.s4 839922192
  %v1263 = vunpack.c.0.s8 %v1262
  %v1264 = vlaneseq
  %v1265 = vshrl.u32 %v1264, 7
  %v1266 = vsub.s32 %v1263, %v1265
  %v1267 = vrot.slane %v1259, %v1266
  %1269 = vset.pattern.permute.xlu0 0
  %1270 = vperm.xlu0 %1269, %v130
  %v1271 = vpop.permute.xlu0 %1270
  %v1274 = vunpack.c.l.s4 839922192
  %v1275 = vunpack.c.0.s8 %v1274
  %v1276 = vlaneseq
  %v1277 = vshrl.u32 %v1276, 7
  %v1278 = vsub.s32 %v1275, %v1277
  %v1279 = vrot.slane %v1271, %v1278
  %1281 = vset.pattern.permute.xlu0 0
  %1282 = vperm.xlu0 %1281, %v131
  %v1283 = vpop.permute.xlu0 %1282
  %v1286 = vunpack.c.l.s4 839922192
  %v1287 = vunpack.c.0.s8 %v1286
  %v1288 = vlaneseq
  %v1289 = vshrl.u32 %v1288, 7
  %v1290 = vsub.s32 %v1287, %v1289
  %v1291 = vrot.slane %v1283, %v1290
  %1293 = vset.pattern.permute.xlu0 0
  %1294 = vperm.xlu0 %1293, %v132
  %v1295 = vpop.permute.xlu0 %1294
  %v1298 = vunpack.c.l.s4 839922192
  %v1299 = vunpack.c.0.s8 %v1298
  %v1300 = vlaneseq
  %v1301 = vshrl.u32 %v1300, 7
  %v1302 = vsub.s32 %v1299, %v1301
  %v1303 = vrot.slane %v1295, %v1302
  %1305 = vset.pattern.permute.xlu0 0
  %1306 = vperm.xlu0 %1305, %v133
  %v1307 = vpop.permute.xlu0 %1306
  %v1310 = vunpack.c.l.s4 839922192
  %v1311 = vunpack.c.0.s8 %v1310
  %v1312 = vlaneseq
  %v1313 = vshrl.u32 %v1312, 7
  %v1314 = vsub.s32 %v1311, %v1313
  %v1315 = vrot.slane %v1307, %v1314
  %1317 = vset.pattern.permute.xlu0 0
  %1318 = vperm.xlu0 %1317, %v134
  %v1319 = vpop.permute.xlu0 %1318
  %v1322 = vunpack.c.l.s4 839922192
  %v1323 = vunpack.c.0.s8 %v1322
  %v1324 = vlaneseq
  %v1325 = vshrl.u32 %v1324, 7
  %v1326 = vsub.s32 %v1323, %v1325
  %v1327 = vrot.slane %v1319, %v1326
  %1329 = vset.pattern.permute.xlu0 0
  %1330 = vperm.xlu0 %1329, %v135
  %v1331 = vpop.permute.xlu0 %1330
  %v1334 = vunpack.c.l.s4 839922192
  %v1335 = vunpack.c.0.s8 %v1334
  %v1336 = vlaneseq
  %v1337 = vshrl.u32 %v1336, 7
  %v1338 = vsub.s32 %v1335, %v1337
  %v1339 = vrot.slane %v1331, %v1338
  %1341 = vset.pattern.permute.xlu0 0
  %1342 = vperm.xlu0 %1341, %v136
  %v1343 = vpop.permute.xlu0 %1342
  %v1346 = vunpack.c.l.s4 839922192
  %v1347 = vunpack.c.0.s8 %v1346
  %v1348 = vlaneseq
  %v1349 = vshrl.u32 %v1348, 7
  %v1350 = vsub.s32 %v1347, %v1349
  %v1351 = vrot.slane %v1343, %v1350
  %1353 = vset.pattern.permute.xlu0 0
  %1354 = vperm.xlu0 %1353, %v137
  %v1355 = vpop.permute.xlu0 %1354
  %v1358 = vunpack.c.l.s4 839922192
  %v1359 = vunpack.c.0.s8 %v1358
  %v1360 = vlaneseq
  %v1361 = vshrl.u32 %v1360, 7
  %v1362 = vsub.s32 %v1359, %v1361
  %v1363 = vrot.slane %v1355, %v1362
  %1365 = vset.pattern.permute.xlu0 0
  %1366 = vperm.xlu0 %1365, %v138
  %v1367 = vpop.permute.xlu0 %1366
  %v1370 = vunpack.c.l.s4 839922192
  %v1371 = vunpack.c.0.s8 %v1370
  %v1372 = vlaneseq
  %v1373 = vshrl.u32 %v1372, 7
  %v1374 = vsub.s32 %v1371, %v1373
  %v1375 = vrot.slane %v1367, %v1374
  %1377 = vset.pattern.permute.xlu0 0
  %1378 = vperm.xlu0 %1377, %v139
  %v1379 = vpop.permute.xlu0 %1378
  %v1382 = vunpack.c.l.s4 839922192
  %v1383 = vunpack.c.0.s8 %v1382
  %v1384 = vlaneseq
  %v1385 = vshrl.u32 %v1384, 7
  %v1386 = vsub.s32 %v1383, %v1385
  %v1387 = vrot.slane %v1379, %v1386
  %1389 = vset.pattern.permute.xlu0 0
  %1390 = vperm.xlu0 %1389, %v140
  %v1391 = vpop.permute.xlu0 %1390
  %v1394 = vunpack.c.l.s4 839922192
  %v1395 = vunpack.c.0.s8 %v1394
  %v1396 = vlaneseq
  %v1397 = vshrl.u32 %v1396, 7
  %v1398 = vsub.s32 %v1395, %v1397
  %v1399 = vrot.slane %v1391, %v1398
  %1401 = vset.pattern.permute.xlu0 0
  %1402 = vperm.xlu0 %1401, %v141
  %v1403 = vpop.permute.xlu0 %1402
  %v1406 = vunpack.c.l.s4 839922192
  %v1407 = vunpack.c.0.s8 %v1406
  %v1408 = vlaneseq
  %v1409 = vshrl.u32 %v1408, 7
  %v1410 = vsub.s32 %v1407, %v1409
  %v1411 = vrot.slane %v1403, %v1410
  %1413 = vset.pattern.permute.xlu0 0
  %1414 = vperm.xlu0 %1413, %v142
  %v1415 = vpop.permute.xlu0 %1414
  %v1418 = vunpack.c.l.s4 839922192
  %v1419 = vunpack.c.0.s8 %v1418
  %v1420 = vlaneseq
  %v1421 = vshrl.u32 %v1420, 7
  %v1422 = vsub.s32 %v1419, %v1421
  %v1423 = vrot.slane %v1415, %v1422
  %1425 = vset.pattern.permute.xlu0 0
  %1426 = vperm.xlu0 %1425, %v143
  %v1427 = vpop.permute.xlu0 %1426
  %v1430 = vunpack.c.l.s4 839922192
  %v1431 = vunpack.c.0.s8 %v1430
  %v1432 = vlaneseq
  %v1433 = vshrl.u32 %v1432, 7
  %v1434 = vsub.s32 %v1431, %v1433
  %v1435 = vrot.slane %v1427, %v1434
  %1437 = vset.pattern.permute.xlu0 0
  %1438 = vperm.xlu0 %1437, %v144
  %v1439 = vpop.permute.xlu0 %1438
  %v1442 = vunpack.c.l.s4 839922192
  %v1443 = vunpack.c.0.s8 %v1442
  %v1444 = vlaneseq
  %v1445 = vshrl.u32 %v1444, 7
  %v1446 = vsub.s32 %v1443, %v1445
  %v1447 = vrot.slane %v1439, %v1446
  %1449 = vset.pattern.permute.xlu0 0
  %1450 = vperm.xlu0 %1449, %v145
  %v1451 = vpop.permute.xlu0 %1450
  %v1454 = vunpack.c.l.s4 839922192
  %v1455 = vunpack.c.0.s8 %v1454
  %v1456 = vlaneseq
  %v1457 = vshrl.u32 %v1456, 7
  %v1458 = vsub.s32 %v1455, %v1457
  %v1459 = vrot.slane %v1451, %v1458
  %1461 = vset.pattern.permute.xlu0 0
  %1462 = vperm.xlu0 %1461, %v146
  %v1463 = vpop.permute.xlu0 %1462
  %v1466 = vunpack.c.l.s4 839922192
  %v1467 = vunpack.c.0.s8 %v1466
  %v1468 = vlaneseq
  %v1469 = vshrl.u32 %v1468, 7
  %v1470 = vsub.s32 %v1467, %v1469
  %v1471 = vrot.slane %v1463, %v1470
  %1473 = vset.pattern.permute.xlu0 0
  %1474 = vperm.xlu0 %1473, %v147
  %v1475 = vpop.permute.xlu0 %1474
  %v1478 = vunpack.c.l.s4 839922192
  %v1479 = vunpack.c.0.s8 %v1478
  %v1480 = vlaneseq
  %v1481 = vshrl.u32 %v1480, 7
  %v1482 = vsub.s32 %v1479, %v1481
  %v1483 = vrot.slane %v1475, %v1482
  %1485 = vset.pattern.permute.xlu0 0
  %1486 = vperm.xlu0 %1485, %v148
  %v1487 = vpop.permute.xlu0 %1486
  %v1490 = vunpack.c.l.s4 839922192
  %v1491 = vunpack.c.0.s8 %v1490
  %v1492 = vlaneseq
  %v1493 = vshrl.u32 %v1492, 7
  %v1494 = vsub.s32 %v1491, %v1493
  %v1495 = vrot.slane %v1487, %v1494
  %1497 = vset.pattern.permute.xlu0 0
  %1498 = vperm.xlu0 %1497, %v149
  %v1499 = vpop.permute.xlu0 %1498
  %v1502 = vunpack.c.l.s4 839922192
  %v1503 = vunpack.c.0.s8 %v1502
  %v1504 = vlaneseq
  %v1505 = vshrl.u32 %v1504, 7
  %v1506 = vsub.s32 %v1503, %v1505
  %v1507 = vrot.slane %v1499, %v1506
  %v1540 = vunpack.c.l.b16 %v1135
  %v1541 = vunpack.c.l.b16 %v1147
  %v1542 = vunpack.c.l.b16 %v1159
  %v1543 = vunpack.c.l.b16 %v1171
  %v1544 = vunpack.c.l.b16 %v1183
  %v1545 = vunpack.c.l.b16 %v1195
  %v1546 = vunpack.c.l.b16 %v1207
  %v1547 = vunpack.c.l.b16 %v1219
  %v1548 = vunpack.c.l.b16 %v1231
  %v1549 = vunpack.c.l.b16 %v1243
  %v1550 = vunpack.c.l.b16 %v1255
  %v1551 = vunpack.c.l.b16 %v1267
  %v1552 = vunpack.c.l.b16 %v1279
  %v1553 = vunpack.c.l.b16 %v1291
  %v1554 = vunpack.c.l.b16 %v1303
  %v1555 = vunpack.c.l.b16 %v1315
  %v1556 = vunpack.c.l.b16 %v1327
  %v1557 = vunpack.c.l.b16 %v1339
  %v1558 = vunpack.c.l.b16 %v1351
  %v1559 = vunpack.c.l.b16 %v1363
  %v1560 = vunpack.c.l.b16 %v1375
  %v1561 = vunpack.c.l.b16 %v1387
  %v1562 = vunpack.c.l.b16 %v1399
  %v1563 = vunpack.c.l.b16 %v1411
  %v1564 = vunpack.c.l.b16 %v1423
  %v1565 = vunpack.c.l.b16 %v1435
  %v1566 = vunpack.c.l.b16 %v1447
  %v1567 = vunpack.c.l.b16 %v1459
  %v1568 = vunpack.c.l.b16 %v1471
  %v1569 = vunpack.c.l.b16 %v1483
  %v1570 = vunpack.c.l.b16 %v1495
  %v1571 = vunpack.c.l.b16 %v1507
  %v1572 = vpack.c.b16 %v1541, %v1540
  %v1573 = vpack.c.b16 %v1543, %v1542
  %v1574 = vpack.c.b16 %v1545, %v1544
  %v1575 = vpack.c.b16 %v1547, %v1546
  %v1576 = vpack.c.b16 %v1549, %v1548
  %v1577 = vpack.c.b16 %v1551, %v1550
  %v1578 = vpack.c.b16 %v1553, %v1552
  %v1579 = vpack.c.b16 %v1555, %v1554
  %v1580 = vpack.c.b16 %v1557, %v1556
  %v1581 = vpack.c.b16 %v1559, %v1558
  %v1582 = vpack.c.b16 %v1561, %v1560
  %v1583 = vpack.c.b16 %v1563, %v1562
  %v1584 = vpack.c.b16 %v1565, %v1564
  %v1585 = vpack.c.b16 %v1567, %v1566
  %v1586 = vpack.c.b16 %v1569, %v1568
  %v1587 = vpack.c.b16 %v1571, %v1570
  %v1604 = vmul.bf16 %v613, %v1572
  %v1605 = vmul.bf16 %v614, %v1573
  %v1606 = vmul.bf16 %v615, %v1574
  %v1607 = vmul.bf16 %v616, %v1575
  %v1608 = vmul.bf16 %v617, %v1576
  %v1609 = vmul.bf16 %v618, %v1577
  %v1610 = vmul.bf16 %v619, %v1578
  %v1611 = vmul.bf16 %v620, %v1579
  %v1612 = vmul.bf16 %v621, %v1580
  %v1613 = vmul.bf16 %v622, %v1581
  %v1614 = vmul.bf16 %v623, %v1582
  %v1615 = vmul.bf16 %v624, %v1583
  %v1616 = vmul.bf16 %v625, %v1584
  %v1617 = vmul.bf16 %v626, %v1585
  %v1618 = vmul.bf16 %v627, %v1586
  %v1619 = vmul.bf16 %v612, %v1587
  %1636 = vrot.lane.b32.xlu0 %v612, 64
  %v1637 = vpop.permute.xlu0 %1636
  %1638 = vrot.lane.b32.xlu0 %v613, 64
  %v1639 = vpop.permute.xlu0 %1638
  %1640 = vrot.lane.b32.xlu0 %v614, 64
  %v1641 = vpop.permute.xlu0 %1640
  %1642 = vrot.lane.b32.xlu0 %v615, 64
  %v1643 = vpop.permute.xlu0 %1642
  %1644 = vrot.lane.b32.xlu0 %v616, 64
  %v1645 = vpop.permute.xlu0 %1644
  %1646 = vrot.lane.b32.xlu0 %v617, 64
  %v1647 = vpop.permute.xlu0 %1646
  %1648 = vrot.lane.b32.xlu0 %v618, 64
  %v1649 = vpop.permute.xlu0 %1648
  %1650 = vrot.lane.b32.xlu0 %v619, 64
  %v1651 = vpop.permute.xlu0 %1650
  %1652 = vrot.lane.b32.xlu0 %v620, 64
  %v1653 = vpop.permute.xlu0 %1652
  %1654 = vrot.lane.b32.xlu0 %v621, 64
  %v1655 = vpop.permute.xlu0 %1654
  %1656 = vrot.lane.b32.xlu0 %v622, 64
  %v1657 = vpop.permute.xlu0 %1656
  %1658 = vrot.lane.b32.xlu0 %v623, 64
  %v1659 = vpop.permute.xlu0 %1658
  %1660 = vrot.lane.b32.xlu0 %v624, 64
  %v1661 = vpop.permute.xlu0 %1660
  %1662 = vrot.lane.b32.xlu0 %v625, 64
  %v1663 = vpop.permute.xlu0 %1662
  %1664 = vrot.lane.b32.xlu0 %v626, 64
  %v1665 = vpop.permute.xlu0 %1664
  %1666 = vrot.lane.b32.xlu0 %v627, 64
  %v1667 = vpop.permute.xlu0 %1666
  %vm1668 = vcmask 523264
  %v1671 = vsel %vm1668, %v1108, %v1637
  %v1675 = vsel %vm1668, %v1109, %v1639
  %v1679 = vsel %vm1668, %v1110, %v1641
  %v1683 = vsel %vm1668, %v1111, %v1643
  %v1687 = vsel %vm1668, %v1112, %v1645
  %v1691 = vsel %vm1668, %v1113, %v1647
  %v1695 = vsel %vm1668, %v1114, %v1649
  %v1699 = vsel %vm1668, %v1115, %v1651
  %v1703 = vsel %vm1668, %v1116, %v1653
  %v1707 = vsel %vm1668, %v1117, %v1655
  %v1711 = vsel %vm1668, %v1118, %v1657
  %v1715 = vsel %vm1668, %v1119, %v1659
  %v1719 = vsel %vm1668, %v1120, %v1661
  %v1723 = vsel %vm1668, %v1121, %v1663
  %v1727 = vsel %vm1668, %v1122, %v1665
  %v1731 = vsel %vm1668, %v1123, %v1667
  %v1733 = vld [vmem:[%s6] sm:$0xf]
  %v1734 = vld [vmem:[%s6 + $0x4] sm:$0xf]
  %v1735 = vld [vmem:[%s6 + $0x8] sm:$0xf]
  %v1736 = vld [vmem:[%s6 + $0xc] sm:$0xf]
  %v1737 = vld [vmem:[%s6 + $0x10] sm:$0xf]
  %v1738 = vld [vmem:[%s6 + $0x14] sm:$0xf]
  %v1739 = vld [vmem:[%s6 + $0x18] sm:$0xf]
  %v1740 = vld [vmem:[%s6 + $0x1c] sm:$0xf]
  %v1741 = vld [vmem:[%s6 + $0x20] sm:$0xf]
  %v1742 = vld [vmem:[%s6 + $0x24] sm:$0xf]
  %v1743 = vld [vmem:[%s6 + $0x28] sm:$0xf]
  %v1744 = vld [vmem:[%s6 + $0x2c] sm:$0xf]
  %v1745 = vld [vmem:[%s6 + $0x30] sm:$0xf]
  %v1746 = vld [vmem:[%s6 + $0x34] sm:$0xf]
  %v1747 = vld [vmem:[%s6 + $0x38] sm:$0xf]
  %v1748 = vld [vmem:[%s6 + $0x3c] sm:$0xf]
  %v1749 = vld [vmem:[%s6 + $0x40] sm:$0xf]
  %v1750 = vld [vmem:[%s6 + $0x44] sm:$0xf]
  %v1751 = vld [vmem:[%s6 + $0x48] sm:$0xf]
  %v1752 = vld [vmem:[%s6 + $0x4c] sm:$0xf]
  %v1753 = vld [vmem:[%s6 + $0x50] sm:$0xf]
  %v1754 = vld [vmem:[%s6 + $0x54] sm:$0xf]
  %v1755 = vld [vmem:[%s6 + $0x58] sm:$0xf]
  %v1756 = vld [vmem:[%s6 + $0x5c] sm:$0xf]
  %v1757 = vld [vmem:[%s7] sm:$0x1]
  %v1759 = vlaneseq
  %v1760 = vshrl.u32 %v1759, 7
  %v1761 = vsub.s32 0, %v1760
  %v1762 = vrot.slane %v1757, %v1761
  %v1788 = vunpack.c.l.b16 %v1733
  %v1789 = vunpack.c.l.b16 %v1734
  %v1790 = vunpack.c.l.b16 %v1735
  %v1791 = vunpack.c.l.b16 %v1736
  %v1792 = vunpack.c.l.b16 %v1737
  %v1793 = vunpack.c.l.b16 %v1738
  %v1794 = vunpack.c.l.b16 %v1739
  %v1795 = vunpack.c.l.b16 %v1740
  %v1796 = vunpack.c.l.b16 %v1741
  %v1797 = vunpack.c.l.b16 %v1742
  %v1798 = vunpack.c.l.b16 %v1743
  %v1799 = vunpack.c.l.b16 %v1744
  %v1800 = vunpack.c.l.b16 %v1745
  %v1801 = vunpack.c.l.b16 %v1746
  %v1802 = vunpack.c.l.b16 %v1747
  %v1803 = vunpack.c.l.b16 %v1748
  %v1804 = vunpack.c.l.b16 %v1749
  %v1805 = vunpack.c.l.b16 %v1750
  %v1806 = vunpack.c.l.b16 %v1751
  %v1807 = vunpack.c.l.b16 %v1752
  %v1808 = vunpack.c.l.b16 %v1753
  %v1809 = vunpack.c.l.b16 %v1754
  %v1810 = vunpack.c.l.b16 %v1755
  %v1811 = vunpack.c.l.b16 %v1756
  %v1812 = vpack.c.b16 %v1789, %v1788
  %v1813 = vpack.c.b16 %v1791, %v1790
  %v1814 = vpack.c.b16 %v1793, %v1792
  %v1815 = vpack.c.b16 %v1795, %v1794
  %v1816 = vpack.c.b16 %v1797, %v1796
  %v1817 = vpack.c.b16 %v1799, %v1798
  %v1818 = vpack.c.b16 %v1801, %v1800
  %v1819 = vpack.c.b16 %v1803, %v1802
  %v1820 = vpack.c.b16 %v1805, %v1804
  %v1821 = vpack.c.b16 %v1807, %v1806
  %v1822 = vpack.c.b16 %v1809, %v1808
  %v1823 = vpack.c.b16 %v1811, %v1810
  %v1837 = vsel %vm1668, %v1604, 0
  %v1840 = vsel %vm1668, %v1605, 0
  %v1843 = vsel %vm1668, %v1606, 0
  %v1846 = vsel %vm1668, %v1607, 0
  %v1849 = vsel %vm1668, %v1608, 0
  %v1852 = vsel %vm1668, %v1609, 0
  %v1855 = vsel %vm1668, %v1610, 0
  %v1858 = vsel %vm1668, %v1611, 0
  %v1861 = vsel %vm1668, %v1612, 0
  %v1864 = vsel %vm1668, %v1613, 0
  %v1867 = vsel %vm1668, %v1614, 0
  %v1870 = vsel %vm1668, %v1615, 0
  %v1873 = vsel %vm1668, %v1616, 0
  %v1876 = vsel %vm1668, %v1617, 0
  %v1879 = vsel %vm1668, %v1618, 0
  %v1882 = vsel %vm1668, %v1619, 0
  %1884 = vmatprep.subr.bf16.mxu0 0
  %1885 = vmatpush1.bf16.msra.mxu0 %v1812
  %1886 = vmatprep.subr.bf16.mxu0 0
  %1887 = vmatpush1.bf16.msra.mxu0 %v1813
  %1888 = vmatprep.subr.bf16.mxu0 0
  %1889 = vmatpush1.bf16.msra.mxu0 %v1814
  %1890 = vmatprep.subr.bf16.mxu0 0
  %1891 = vmatpush1.bf16.msra.mxu0 %v1815
  %1892 = vmatprep.subr.bf16.mxu0 0
  %1893 = vmatpush1.bf16.msra.mxu0 %v1816
  %1894 = vmatprep.subr.bf16.mxu0 0
  %1895 = vmatpush1.bf16.msra.mxu0 %v1817
  %1896 = vmatprep.subr.bf16.mxu0 0
  %1897 = vmatpush1.bf16.msra.mxu0 %v1818
  %1898 = vmatprep.subr.bf16.mxu0 0
  %1899 = vmatpush1.bf16.msra.mxu0 %v1819
  %1900 = vmatprep.subr.bf16.mxu0 0
  %1901 = vmatpush1.bf16.msra.mxu0 %v1820
  %1902 = vmatprep.subr.bf16.mxu0 0
  %1903 = vmatpush1.bf16.msra.mxu0 %v1821
  %1904 = vmatprep.subr.bf16.mxu0 0
  %1905 = vmatpush1.bf16.msra.mxu0 %v1822
  %1906 = vmatprep.subr.bf16.mxu0 0
  %1907 = vmatpush1.bf16.msra.mxu0 %v1823
  %1908 = vmatprep.subr.bf16.mxu0 0
  %1909 = vmatpush1.bf16.msra.mxu0 0
  %1910 = vmatprep.subr.bf16.mxu0 0
  %1911 = vmatpush1.bf16.msra.mxu0 0
  %1912 = vmatprep.subr.bf16.mxu0 0
  %1913 = vmatpush1.bf16.msra.mxu0 0
  %1914 = vmatprep.subr.bf16.mxu0 0
  %1915 = vmatpush1.bf16.msra.mxu0 0
  %1916 = vmatprep.mubr.bf16.mxu0 %v1837
  %1917 = vmatmul.mubr.bf16.gmra.mrb[0].mxu0 %v1671
  %v1918 = vpop.f32.mrb[0].mxu0
  %v1919 = vadd.f32 %v1762, %v1918
  %v1920 = vpop.f32.mrb[0].mxu0
  %v1921 = vpop.f32.mrb[0].mxu0
  %v1922 = vadd.f32 %v1762, %v1921
  %v1923 = vpop.f32.mrb[0].mxu0
  %1924 = vmatprep.mubr.bf16.mxu0 %v1840
  %1925 = vmatmul.mubr.bf16.gmra.mrb[0].mxu0 %v1675
  %v1926 = vpop.f32.mrb[0].mxu0
  %v1927 = vadd.f32 %v1762, %v1926
  %v1928 = vpop.f32.mrb[0].mxu0
  %v1929 = vpop.f32.mrb[0].mxu0
  %v1930 = vadd.f32 %v1762, %v1929
  %v1931 = vpop.f32.mrb[0].mxu0
  %1932 = vmatprep.mubr.bf16.mxu0 %v1843
  %1933 = vmatmul.mubr.bf16.gmra.mrb[0].mxu0 %v1679
  %v1934 = vpop.f32.mrb[0].mxu0
  %v1935 = vadd.f32 %v1762, %v1934
  %v1936 = vpop.f32.mrb[0].mxu0
  %v1937 = vpop.f32.mrb[0].mxu0
  %v1938 = vadd.f32 %v1762, %v1937
  %v1939 = vpop.f32.mrb[0].mxu0
  %1940 = vmatprep.mubr.bf16.mxu0 %v1846
  %1941 = vmatmul.mubr.bf16.gmra.mrb[0].mxu0 %v1683
  %v1942 = vpop.f32.mrb[0].mxu0
  %v1943 = vadd.f32 %v1762, %v1942
  %v1944 = vpop.f32.mrb[0].mxu0
  %v1945 = vpop.f32.mrb[0].mxu0
  %v1946 = vadd.f32 %v1762, %v1945
  %v1947 = vpop.f32.mrb[0].mxu0
  %1948 = vmatprep.mubr.bf16.mxu0 %v1849
  %1949 = vmatmul.mubr.bf16.gmra.mrb[0].mxu0 %v1687
  %v1950 = vpop.f32.mrb[0].mxu0
  %v1951 = vadd.f32 %v1762, %v1950
  %v1952 = vpop.f32.mrb[0].mxu0
  %v1953 = vpop.f32.mrb[0].mxu0
  %v1954 = vadd.f32 %v1762, %v1953
  %v1955 = vpop.f32.mrb[0].mxu0
  %1956 = vmatprep.mubr.bf16.mxu0 %v1852
  %1957 = vmatmul.mubr.bf16.gmra.mrb[0].mxu0 %v1691
  %v1958 = vpop.f32.mrb[0].mxu0
  %v1959 = vadd.f32 %v1762, %v1958
  %v1960 = vpop.f32.mrb[0].mxu0
  %v1961 = vpop.f32.mrb[0].mxu0
  %v1962 = vadd.f32 %v1762, %v1961
  %v1963 = vpop.f32.mrb[0].mxu0
  %1964 = vmatprep.mubr.bf16.mxu0 %v1855
  %1965 = vmatmul.mubr.bf16.gmra.mrb[0].mxu0 %v1695
  %v1966 = vpop.f32.mrb[0].mxu0
  %v1967 = vadd.f32 %v1762, %v1966
  %v1968 = vpop.f32.mrb[0].mxu0
  %v1969 = vpop.f32.mrb[0].mxu0
  %v1970 = vadd.f32 %v1762, %v1969
  %v1971 = vpop.f32.mrb[0].mxu0
  %1972 = vmatprep.mubr.bf16.mxu0 %v1858
  %1973 = vmatmul.mubr.bf16.gmra.mrb[0].mxu0 %v1699
  %v1974 = vpop.f32.mrb[0].mxu0
  %v1975 = vadd.f32 %v1762, %v1974
  %v1976 = vpop.f32.mrb[0].mxu0
  %v1977 = vpop.f32.mrb[0].mxu0
  %v1978 = vadd.f32 %v1762, %v1977
  %v1979 = vpop.f32.mrb[0].mxu0
  %1980 = vmatprep.mubr.bf16.mxu0 %v1861
  %1981 = vmatmul.mubr.bf16.gmra.mrb[0].mxu0 %v1703
  %v1982 = vpop.f32.mrb[0].mxu0
  %v1983 = vadd.f32 %v1762, %v1982
  %v1984 = vpop.f32.mrb[0].mxu0
  %v1985 = vpop.f32.mrb[0].mxu0
  %v1986 = vadd.f32 %v1762, %v1985
  %v1987 = vpop.f32.mrb[0].mxu0
  %1988 = vmatprep.mubr.bf16.mxu0 %v1864
  %1989 = vmatmul.mubr.bf16.gmra.mrb[0].mxu0 %v1707
  %v1990 = vpop.f32.mrb[0].mxu0
  %v1991 = vadd.f32 %v1762, %v1990
  %v1992 = vpop.f32.mrb[0].mxu0
  %v1993 = vpop.f32.mrb[0].mxu0
  %v1994 = vadd.f32 %v1762, %v1993
  %v1995 = vpop.f32.mrb[0].mxu0
  %1996 = vmatprep.mubr.bf16.mxu0 %v1867
  %1997 = vmatmul.mubr.bf16.gmra.mrb[0].mxu0 %v1711
  %v1998 = vpop.f32.mrb[0].mxu0
  %v1999 = vadd.f32 %v1762, %v1998
  %v2000 = vpop.f32.mrb[0].mxu0
  %v2001 = vpop.f32.mrb[0].mxu0
  %v2002 = vadd.f32 %v1762, %v2001
  %v2003 = vpop.f32.mrb[0].mxu0
  %2004 = vmatprep.mubr.bf16.mxu0 %v1870
  %2005 = vmatmul.mubr.bf16.gmra.mrb[0].mxu0 %v1715
  %v2006 = vpop.f32.mrb[0].mxu0
  %v2007 = vadd.f32 %v1762, %v2006
  %v2008 = vpop.f32.mrb[0].mxu0
  %v2009 = vpop.f32.mrb[0].mxu0
  %v2010 = vadd.f32 %v1762, %v2009
  %v2011 = vpop.f32.mrb[0].mxu0
  %2012 = vmatprep.mubr.bf16.mxu0 %v1873
  %2013 = vmatmul.mubr.bf16.gmra.mrb[0].mxu0 %v1719
  %v2014 = vpop.f32.mrb[0].mxu0
  %v2015 = vadd.f32 %v1762, %v2014
  %v2016 = vpop.f32.mrb[0].mxu0
  %v2017 = vpop.f32.mrb[0].mxu0
  %v2018 = vadd.f32 %v1762, %v2017
  %v2019 = vpop.f32.mrb[0].mxu0
  %2020 = vmatprep.mubr.bf16.mxu0 %v1876
  %2021 = vmatmul.mubr.bf16.gmra.mrb[0].mxu0 %v1723
  %v2022 = vpop.f32.mrb[0].mxu0
  %v2023 = vadd.f32 %v1762, %v2022
  %v2024 = vpop.f32.mrb[0].mxu0
  %v2025 = vpop.f32.mrb[0].mxu0
  %v2026 = vadd.f32 %v1762, %v2025
  %v2027 = vpop.f32.mrb[0].mxu0
  %2028 = vmatprep.mubr.bf16.mxu0 %v1879
  %2029 = vmatmul.mubr.bf16.gmra.mrb[0].mxu0 %v1727
  %v2030 = vpop.f32.mrb[0].mxu0
  %v2031 = vadd.f32 %v1762, %v2030
  %v2032 = vpop.f32.mrb[0].mxu0
  %v2033 = vpop.f32.mrb[0].mxu0
  %v2034 = vadd.f32 %v1762, %v2033
  %v2035 = vpop.f32.mrb[0].mxu0
  %2036 = vmatprep.mubr.bf16.mxu0 %v1882
  %2037 = vmatmul.mubr.bf16.gmra.mrb[0].mxu0 %v1731
  %v2038 = vpop.f32.mrb[0].mxu0
  %v2039 = vadd.f32 %v1762, %v2038
  %v2040 = vpop.f32.mrb[0].mxu0
  %v2041 = vpop.f32.mrb[0].mxu0
  %v2042 = vadd.f32 %v1762, %v2041
  %v2043 = vpop.f32.mrb[0].mxu0
  %2044 = vdwg.mxu0
  %v2045 = vmax.f32 %v1919, 0.0
  %v2046 = vmax.f32 %v1922, 0.0
  %v2047 = vmax.f32 %v1927, 0.0
  %v2048 = vmax.f32 %v1930, 0.0
  %v2049 = vmax.f32 %v1935, 0.0
  %v2050 = vmax.f32 %v1938, 0.0
  %v2051 = vmax.f32 %v1943, 0.0
  %v2052 = vmax.f32 %v1946, 0.0
  %v2053 = vmax.f32 %v1951, 0.0
  %v2054 = vmax.f32 %v1954, 0.0
  %v2055 = vmax.f32 %v1959, 0.0
  %v2056 = vmax.f32 %v1962, 0.0
  %v2057 = vmax.f32 %v1967, 0.0
  %v2058 = vmax.f32 %v1970, 0.0
  %v2059 = vmax.f32 %v1975, 0.0
  %v2060 = vmax.f32 %v1978, 0.0
  %v2061 = vmax.f32 %v1983, 0.0
  %v2062 = vmax.f32 %v1986, 0.0
  %v2063 = vmax.f32 %v1991, 0.0
  %v2064 = vmax.f32 %v1994, 0.0
  %v2065 = vmax.f32 %v1999, 0.0
  %v2066 = vmax.f32 %v2002, 0.0
  %v2067 = vmax.f32 %v2007, 0.0
  %v2068 = vmax.f32 %v2010, 0.0
  %v2069 = vmax.f32 %v2015, 0.0
  %v2070 = vmax.f32 %v2018, 0.0
  %v2071 = vmax.f32 %v2023, 0.0
  %v2072 = vmax.f32 %v2026, 0.0
  %v2073 = vmax.f32 %v2031, 0.0
  %v2074 = vmax.f32 %v2034, 0.0
  %v2075 = vmax.f32 %v2039, 0.0
  %v2076 = vmax.f32 %v2042, 0.0
  %v2077 = vmul.f32 %v2045, %v185
  %v2078 = vmul.f32 %v2046, %v190
  %v2079 = vmul.f32 %v2047, %v195
  %v2080 = vmul.f32 %v2048, %v200
  %v2081 = vmul.f32 %v2049, %v205
  %v2082 = vmul.f32 %v2050, %v210
  %v2083 = vmul.f32 %v2051, %v215
  %v2084 = vmul.f32 %v2052, %v220
  %v2085 = vmul.f32 %v2053, %v225
  %v2086 = vmul.f32 %v2054, %v230
  %v2087 = vmul.f32 %v2055, %v235
  %v2088 = vmul.f32 %v2056, %v240
  %v2089 = vmul.f32 %v2057, %v245
  %v2090 = vmul.f32 %v2058, %v250
  %v2091 = vmul.f32 %v2059, %v255
  %v2092 = vmul.f32 %v2060, %v260
  %v2093 = vmul.f32 %v2061, %v265
  %v2094 = vmul.f32 %v2062, %v270
  %v2095 = vmul.f32 %v2063, %v275
  %v2096 = vmul.f32 %v2064, %v280
  %v2097 = vmul.f32 %v2065, %v285
  %v2098 = vmul.f32 %v2066, %v290
  %v2099 = vmul.f32 %v2067, %v295
  %v2100 = vmul.f32 %v2068, %v300
  %v2101 = vmul.f32 %v2069, %v305
  %v2102 = vmul.f32 %v2070, %v310
  %v2103 = vmul.f32 %v2071, %v315
  %v2104 = vmul.f32 %v2072, %v320
  %v2105 = vmul.f32 %v2073, %v325
  %v2106 = vmul.f32 %v2074, %v330
  %v2107 = vmul.f32 %v2075, %v335
  %v2108 = vmul.f32 %v2076, %v340
  %v2109 = vpack.c.bf16 %v2078, %v2077
  %v2110 = vpack.c.bf16 %v2080, %v2079
  %v2111 = vpack.c.bf16 %v2082, %v2081
  %v2112 = vpack.c.bf16 %v2084, %v2083
  %v2113 = vpack.c.bf16 %v2086, %v2085
  %v2114 = vpack.c.bf16 %v2088, %v2087
  %v2115 = vpack.c.bf16 %v2090, %v2089
  %v2116 = vpack.c.bf16 %v2092, %v2091
  %v2117 = vpack.c.bf16 %v2094, %v2093
  %v2118 = vpack.c.bf16 %v2096, %v2095
  %v2119 = vpack.c.bf16 %v2098, %v2097
  %v2120 = vpack.c.bf16 %v2100, %v2099
  %v2121 = vpack.c.bf16 %v2102, %v2101
  %v2122 = vpack.c.bf16 %v2104, %v2103
  %v2123 = vpack.c.bf16 %v2106, %v2105
  %v2124 = vpack.c.bf16 %v2108, %v2107
  %v2125 = vld [vmem:[%s8] sm:$0xf]
  %v2126 = vld [vmem:[%s8 + $0x4] sm:$0xf]
  %v2127 = vld [vmem:[%s8 + $0x8] sm:$0xf]
  %v2128 = vld [vmem:[%s8 + $0xc] sm:$0xf]
  %v2129 = vld [vmem:[%s8 + $0x10] sm:$0xf]
  %v2130 = vld [vmem:[%s8 + $0x14] sm:$0xf]
  %v2131 = vld [vmem:[%s8 + $0x18] sm:$0xf]
  %v2132 = vld [vmem:[%s8 + $0x1c] sm:$0xf]
  %v2133 = vld [vmem:[%s9] sm:$0x1]
  %v2135 = vlaneseq
  %v2136 = vshrl.u32 %v2135, 7
  %v2137 = vsub.s32 0, %v2136
  %v2138 = vrot.slane %v2133, %v2137
  %v2148 = vunpack.c.l.b16 %v2125
  %v2149 = vunpack.c.l.b16 %v2126
  %v2150 = vunpack.c.l.b16 %v2127
  %v2151 = vunpack.c.l.b16 %v2128
  %v2152 = vunpack.c.l.b16 %v2129
  %v2153 = vunpack.c.l.b16 %v2130
  %v2154 = vunpack.c.l.b16 %v2131
  %v2155 = vunpack.c.l.b16 %v2132
  %v2156 = vpack.c.b16 %v2149, %v2148
  %v2157 = vpack.c.b16 %v2151, %v2150
  %v2158 = vpack.c.b16 %v2153, %v2152
  %v2159 = vpack.c.b16 %v2155, %v2154
  %v2165 = vsel %vm1668, %v2109, 0
  %v2168 = vsel %vm1668, %v2110, 0
  %v2171 = vsel %vm1668, %v2111, 0
  %v2174 = vsel %vm1668, %v2112, 0
  %v2177 = vsel %vm1668, %v2113, 0
  %v2180 = vsel %vm1668, %v2114, 0
  %v2183 = vsel %vm1668, %v2115, 0
  %v2186 = vsel %vm1668, %v2116, 0
  %v2189 = vsel %vm1668, %v2117, 0
  %v2192 = vsel %vm1668, %v2118, 0
  %v2195 = vsel %vm1668, %v2119, 0
  %v2198 = vsel %vm1668, %v2120, 0
  %v2201 = vsel %vm1668, %v2121, 0
  %v2204 = vsel %vm1668, %v2122, 0
  %v2207 = vsel %vm1668, %v2123, 0
  %v2210 = vsel %vm1668, %v2124, 0
  %2212 = vmatprep.subr.bf16.mxu0 0
  %2213 = vmatpush1.bf16.msra.mxu0 %v2156
  %2214 = vmatprep.subr.bf16.mxu0 0
  %2215 = vmatpush1.bf16.msra.mxu0 %v2157
  %2216 = vmatprep.subr.bf16.mxu0 0
  %2217 = vmatpush1.bf16.msra.mxu0 %v2158
  %2218 = vmatprep.subr.bf16.mxu0 0
  %2219 = vmatpush1.bf16.msra.mxu0 %v2159
  %2220 = vmatprep.subr.bf16.mxu0 0
  %2221 = vmatpush1.bf16.msra.mxu0 0
  %2222 = vmatprep.subr.bf16.mxu0 0
  %2223 = vmatpush1.bf16.msra.mxu0 0
  %2224 = vmatprep.subr.bf16.mxu0 0
  %2225 = vmatpush1.bf16.msra.mxu0 0
  %2226 = vmatprep.subr.bf16.mxu0 0
  %2227 = vmatpush1.bf16.msra.mxu0 0
  %2228 = vmatprep.subr.bf16.mxu0 0
  %2229 = vmatpush1.bf16.msra.mxu0 0
  %2230 = vmatprep.subr.bf16.mxu0 0
  %2231 = vmatpush1.bf16.msra.mxu0 0
  %2232 = vmatprep.subr.bf16.mxu0 0
  %2233 = vmatpush1.bf16.msra.mxu0 0
  %2234 = vmatprep.subr.bf16.mxu0 0
  %2235 = vmatpush1.bf16.msra.mxu0 0
  %2236 = vmatprep.subr.bf16.mxu0 0
  %2237 = vmatpush1.bf16.msra.mxu0 0
  %2238 = vmatprep.subr.bf16.mxu0 0
  %2239 = vmatpush1.bf16.msra.mxu0 0
  %2240 = vmatprep.subr.bf16.mxu0 0
  %2241 = vmatpush1.bf16.msra.mxu0 0
  %2242 = vmatprep.subr.bf16.mxu0 0
  %2243 = vmatpush1.bf16.msra.mxu0 0
  %2244 = vmatprep.mubr.bf16.mxu0 0
  %2245 = vmatmul.mubr.bf16.gmra.mrb[0].mxu0 %v2165
  %v2246 = vpop.f32.mrb[0].mxu0
  %v2247 = vadd.f32 %v2138, %v2246
  %v2248 = vpop.f32.mrb[0].mxu0
  %v2249 = vpop.f32.mrb[0].mxu0
  %v2250 = vadd.f32 %v2138, %v2249
  %v2251 = vpop.f32.mrb[0].mxu0
  %2252 = vmatprep.mubr.bf16.mxu0 0
  %2253 = vmatmul.mubr.bf16.gmra.mrb[0].mxu0 %v2168
  %v2254 = vpop.f32.mrb[0].mxu0
  %v2255 = vadd.f32 %v2138, %v2254
  %v2256 = vpop.f32.mrb[0].mxu0
  %v2257 = vpop.f32.mrb[0].mxu0
  %v2258 = vadd.f32 %v2138, %v2257
  %v2259 = vpop.f32.mrb[0].mxu0
  %2260 = vmatprep.mubr.bf16.mxu0 0
  %2261 = vmatmul.mubr.bf16.gmra.mrb[0].mxu0 %v2171
  %v2262 = vpop.f32.mrb[0].mxu0
  %v2263 = vadd.f32 %v2138, %v2262
  %v2264 = vpop.f32.mrb[0].mxu0
  %v2265 = vpop.f32.mrb[0].mxu0
  %v2266 = vadd.f32 %v2138, %v2265
  %v2267 = vpop.f32.mrb[0].mxu0
  %2268 = vmatprep.mubr.bf16.mxu0 0
  %2269 = vmatmul.mubr.bf16.gmra.mrb[0].mxu0 %v2174
  %v2270 = vpop.f32.mrb[0].mxu0
  %v2271 = vadd.f32 %v2138, %v2270
  %v2272 = vpop.f32.mrb[0].mxu0
  %v2273 = vpop.f32.mrb[0].mxu0
  %v2274 = vadd.f32 %v2138, %v2273
  %v2275 = vpop.f32.mrb[0].mxu0
  %2276 = vmatprep.mubr.bf16.mxu0 0
  %2277 = vmatmul.mubr.bf16.gmra.mrb[0].mxu0 %v2177
  %v2278 = vpop.f32.mrb[0].mxu0
  %v2279 = vadd.f32 %v2138, %v2278
  %v2280 = vpop.f32.mrb[0].mxu0
  %v2281 = vpop.f32.mrb[0].mxu0
  %v2282 = vadd.f32 %v2138, %v2281
  %v2283 = vpop.f32.mrb[0].mxu0
  %2284 = vmatprep.mubr.bf16.mxu0 0
  %2285 = vmatmul.mubr.bf16.gmra.mrb[0].mxu0 %v2180
  %v2286 = vpop.f32.mrb[0].mxu0
  %v2287 = vadd.f32 %v2138, %v2286
  %v2288 = vpop.f32.mrb[0].mxu0
  %v2289 = vpop.f32.mrb[0].mxu0
  %v2290 = vadd.f32 %v2138, %v2289
  %v2291 = vpop.f32.mrb[0].mxu0
  %2292 = vmatprep.mubr.bf16.mxu0 0
  %2293 = vmatmul.mubr.bf16.gmra.mrb[0].mxu0 %v2183
  %v2294 = vpop.f32.mrb[0].mxu0
  %v2295 = vadd.f32 %v2138, %v2294
  %v2296 = vpop.f32.mrb[0].mxu0
  %v2297 = vpop.f32.mrb[0].mxu0
  %v2298 = vadd.f32 %v2138, %v2297
  %v2299 = vpop.f32.mrb[0].mxu0
  %2300 = vmatprep.mubr.bf16.mxu0 0
  %2301 = vmatmul.mubr.bf16.gmra.mrb[0].mxu0 %v2186
  %v2302 = vpop.f32.mrb[0].mxu0
  %v2303 = vadd.f32 %v2138, %v2302
  %v2304 = vpop.f32.mrb[0].mxu0
  %v2305 = vpop.f32.mrb[0].mxu0
  %v2306 = vadd.f32 %v2138, %v2305
  %v2307 = vpop.f32.mrb[0].mxu0
  %2308 = vmatprep.mubr.bf16.mxu0 0
  %2309 = vmatmul.mubr.bf16.gmra.mrb[0].mxu0 %v2189
  %v2310 = vpop.f32.mrb[0].mxu0
  %v2311 = vadd.f32 %v2138, %v2310
  %v2312 = vpop.f32.mrb[0].mxu0
  %v2313 = vpop.f32.mrb[0].mxu0
  %v2314 = vadd.f32 %v2138, %v2313
  %v2315 = vpop.f32.mrb[0].mxu0
  %2316 = vmatprep.mubr.bf16.mxu0 0
  %2317 = vmatmul.mubr.bf16.gmra.mrb[0].mxu0 %v2192
  %v2318 = vpop.f32.mrb[0].mxu0
  %v2319 = vadd.f32 %v2138, %v2318
  %v2320 = vpop.f32.mrb[0].mxu0
  %v2321 = vpop.f32.mrb[0].mxu0
  %v2322 = vadd.f32 %v2138, %v2321
  %v2323 = vpop.f32.mrb[0].mxu0
  %2324 = vmatprep.mubr.bf16.mxu0 0
  %2325 = vmatmul.mubr.bf16.gmra.mrb[0].mxu0 %v2195
  %v2326 = vpop.f32.mrb[0].mxu0
  %v2327 = vadd.f32 %v2138, %v2326
  %v2328 = vpop.f32.mrb[0].mxu0
  %v2329 = vpop.f32.mrb[0].mxu0
  %v2330 = vadd.f32 %v2138, %v2329
  %v2331 = vpop.f32.mrb[0].mxu0
  %2332 = vmatprep.mubr.bf16.mxu0 0
  %2333 = vmatmul.mubr.bf16.gmra.mrb[0].mxu0 %v2198
  %v2334 = vpop.f32.mrb[0].mxu0
  %v2335 = vadd.f32 %v2138, %v2334
  %v2336 = vpop.f32.mrb[0].mxu0
  %v2337 = vpop.f32.mrb[0].mxu0
  %v2338 = vadd.f32 %v2138, %v2337
  %v2339 = vpop.f32.mrb[0].mxu0
  %2340 = vmatprep.mubr.bf16.mxu0 0
  %2341 = vmatmul.mubr.bf16.gmra.mrb[0].mxu0 %v2201
  %v2342 = vpop.f32.mrb[0].mxu0
  %v2343 = vadd.f32 %v2138, %v2342
  %v2344 = vpop.f32.mrb[0].mxu0
  %v2345 = vpop.f32.mrb[0].mxu0
  %v2346 = vadd.f32 %v2138, %v2345
  %v2347 = vpop.f32.mrb[0].mxu0
  %2348 = vmatprep.mubr.bf16.mxu0 0
  %2349 = vmatmul.mubr.bf16.gmra.mrb[0].mxu0 %v2204
  %v2350 = vpop.f32.mrb[0].mxu0
  %v2351 = vadd.f32 %v2138, %v2350
  %v2352 = vpop.f32.mrb[0].mxu0
  %v2353 = vpop.f32.mrb[0].mxu0
  %v2354 = vadd.f32 %v2138, %v2353
  %v2355 = vpop.f32.mrb[0].mxu0
  %2356 = vmatprep.mubr.bf16.mxu0 0
  %2357 = vmatmul.mubr.bf16.gmra.mrb[0].mxu0 %v2207
  %v2358 = vpop.f32.mrb[0].mxu0
  %v2359 = vadd.f32 %v2138, %v2358
  %v2360 = vpop.f32.mrb[0].mxu0
  %v2361 = vpop.f32.mrb[0].mxu0
  %v2362 = vadd.f32 %v2138, %v2361
  %v2363 = vpop.f32.mrb[0].mxu0
  %2364 = vmatprep.mubr.bf16.mxu0 0
  %2365 = vmatmul.mubr.bf16.gmra.mrb[0].mxu0 %v2210
  %v2366 = vpop.f32.mrb[0].mxu0
  %v2367 = vadd.f32 %v2138, %v2366
  %v2368 = vpop.f32.mrb[0].mxu0
  %v2369 = vpop.f32.mrb[0].mxu0
  %v2370 = vadd.f32 %v2138, %v2369
  %v2371 = vpop.f32.mrb[0].mxu0
  %2372 = vdwg.mxu0
  %v2373 = vpack.c.bf16 %v2250, %v2247
  %v2374 = vpack.c.bf16 %v2258, %v2255
  %v2375 = vpack.c.bf16 %v2266, %v2263
  %v2376 = vpack.c.bf16 %v2274, %v2271
  %v2377 = vpack.c.bf16 %v2282, %v2279
  %v2378 = vpack.c.bf16 %v2290, %v2287
  %v2379 = vpack.c.bf16 %v2298, %v2295
  %v2380 = vpack.c.bf16 %v2306, %v2303
  %v2381 = vpack.c.bf16 %v2314, %v2311
  %v2382 = vpack.c.bf16 %v2322, %v2319
  %v2383 = vpack.c.bf16 %v2330, %v2327
  %v2384 = vpack.c.bf16 %v2338, %v2335
  %v2385 = vpack.c.bf16 %v2346, %v2343
  %v2386 = vpack.c.bf16 %v2354, %v2351
  %v2387 = vpack.c.bf16 %v2362, %v2359
  %v2388 = vpack.c.bf16 %v2370, %v2367
  %v2389 = vmul.bf16 %v2388, %v1076
  %v2390 = vmul.bf16 %v2373, %v1077
  %v2391 = vmul.bf16 %v2374, %v1078
  %v2392 = vmul.bf16 %v2375, %v1079
  %v2393 = vmul.bf16 %v2376, %v1080
  %v2394 = vmul.bf16 %v2377, %v1081
  %v2395 = vmul.bf16 %v2378, %v1082
  %v2396 = vmul.bf16 %v2379, %v1083
  %v2397 = vmul.bf16 %v2380, %v1084
  %v2398 = vmul.bf16 %v2381, %v1085
  %v2399 = vmul.bf16 %v2382, %v1086
  %v2400 = vmul.bf16 %v2383, %v1087
  %v2401 = vmul.bf16 %v2384, %v1088
  %v2402 = vmul.bf16 %v2385, %v1089
  %v2403 = vmul.bf16 %v2386, %v1090
  %v2404 = vmul.bf16 %v2387, %v1091
  %v2405 = vmul.bf16 %v2374, %v1572
  %v2406 = vmul.bf16 %v2375, %v1573
  %v2407 = vmul.bf16 %v2376, %v1574
  %v2408 = vmul.bf16 %v2377, %v1575
  %v2409 = vmul.bf16 %v2378, %v1576
  %v2410 = vmul.bf16 %v2379, %v1577
  %v2411 = vmul.bf16 %v2380, %v1578
  %v2412 = vmul.bf16 %v2381, %v1579
  %v2413 = vmul.bf16 %v2382, %v1580
  %v2414 = vmul.bf16 %v2383, %v1581
  %v2415 = vmul.bf16 %v2384, %v1582
  %v2416 = vmul.bf16 %v2385, %v1583
  %v2417 = vmul.bf16 %v2386, %v1584
  %v2418 = vmul.bf16 %v2387, %v1585
  %v2419 = vmul.bf16 %v2388, %v1586
  %v2420 = vmul.bf16 %v2373, %v1587
  %v2421 = vld [vmem:[%s10] sm:$0xf]
  %v2422 = vld [vmem:[%s10 + $0x4] sm:$0xf]
  %v2423 = vld [vmem:[%s10 + $0x8] sm:$0xf]
  %v2424 = vld [vmem:[%s10 + $0xc] sm:$0xf]
  %v2425 = vld [vmem:[%s10 + $0x10] sm:$0xf]
  %v2426 = vld [vmem:[%s10 + $0x14] sm:$0xf]
  %v2427 = vld [vmem:[%s10 + $0x18] sm:$0xf]
  %v2428 = vld [vmem:[%s10 + $0x1c] sm:$0xf]
  %v2429 = vld [vmem:[%s10 + $0x20] sm:$0xf]
  %v2430 = vld [vmem:[%s10 + $0x24] sm:$0xf]
  %v2431 = vld [vmem:[%s10 + $0x28] sm:$0xf]
  %v2432 = vld [vmem:[%s10 + $0x2c] sm:$0xf]
  %v2433 = vld [vmem:[%s10 + $0x30] sm:$0xf]
  %v2434 = vld [vmem:[%s10 + $0x34] sm:$0xf]
  %v2435 = vld [vmem:[%s10 + $0x38] sm:$0xf]
  %v2436 = vld [vmem:[%s10 + $0x3c] sm:$0xf]
  %v2437 = vld [vmem:[%s10 + $0x40] sm:$0xf]
  %v2438 = vld [vmem:[%s10 + $0x44] sm:$0xf]
  %v2439 = vld [vmem:[%s10 + $0x48] sm:$0xf]
  %v2440 = vld [vmem:[%s10 + $0x4c] sm:$0xf]
  %v2441 = vld [vmem:[%s10 + $0x50] sm:$0xf]
  %v2442 = vld [vmem:[%s10 + $0x54] sm:$0xf]
  %v2443 = vld [vmem:[%s10 + $0x58] sm:$0xf]
  %v2444 = vld [vmem:[%s10 + $0x5c] sm:$0xf]
  %v2445 = vld [vmem:[%s10 + $0x60] sm:$0xf]
  %v2446 = vld [vmem:[%s10 + $0x64] sm:$0xf]
  %v2447 = vld [vmem:[%s10 + $0x68] sm:$0xf]
  %v2448 = vld [vmem:[%s10 + $0x6c] sm:$0xf]
  %v2449 = vld [vmem:[%s10 + $0x70] sm:$0xf]
  %v2450 = vld [vmem:[%s10 + $0x74] sm:$0xf]
  %v2451 = vld [vmem:[%s10 + $0x78] sm:$0xf]
  %v2452 = vld [vmem:[%s10 + $0x7c] sm:$0xf]
  %v2453 = vld [vmem:[%s10 + $0x80] sm:$0xf]
  %v2454 = vld [vmem:[%s10 + $0x84] sm:$0xf]
  %v2455 = vld [vmem:[%s10 + $0x88] sm:$0xf]
  %v2456 = vld [vmem:[%s10 + $0x8c] sm:$0xf]
  %v2457 = vld [vmem:[%s10 + $0x90] sm:$0xf]
  %v2458 = vld [vmem:[%s10 + $0x94] sm:$0xf]
  %v2459 = vld [vmem:[%s10 + $0x98] sm:$0xf]
  %v2460 = vld [vmem:[%s10 + $0x9c] sm:$0xf]
  %v2461 = vld [vmem:[%s10 + $0xa0] sm:$0xf]
  %v2462 = vld [vmem:[%s10 + $0xa4] sm:$0xf]
  %v2463 = vld [vmem:[%s10 + $0xa8] sm:$0xf]
  %v2464 = vld [vmem:[%s10 + $0xac] sm:$0xf]
  %v2465 = vld [vmem:[%s10 + $0xb0] sm:$0xf]
  %v2466 = vld [vmem:[%s10 + $0xb4] sm:$0xf]
  %v2467 = vld [vmem:[%s10 + $0xb8] sm:$0xf]
  %v2468 = vld [vmem:[%s10 + $0xbc] sm:$0xf]
  %v2469 = vld [vmem:[%s11] sm:$0x1]
  %v2471 = vlaneseq
  %v2472 = vshrl.u32 %v2471, 7
  %v2473 = vsub.s32 0, %v2472
  %v2474 = vrot.slane %v2469, %v2473
  %v2524 = vunpack.c.l.b16 %v2421
  %v2525 = vunpack.c.l.b16 %v2422
  %v2526 = vunpack.c.l.b16 %v2423
  %v2527 = vunpack.c.l.b16 %v2424
  %v2528 = vunpack.c.l.b16 %v2425
  %v2529 = vunpack.c.l.b16 %v2426
  %v2530 = vunpack.c.l.b16 %v2427
  %v2531 = vunpack.c.l.b16 %v2428
  %v2532 = vunpack.c.l.b16 %v2429
  %v2533 = vunpack.c.l.b16 %v2430
  %v2534 = vunpack.c.l.b16 %v2431
  %v2535 = vunpack.c.l.b16 %v2432
  %v2536 = vunpack.c.l.b16 %v2433
  %v2537 = vunpack.c.l.b16 %v2434
  %v2538 = vunpack.c.l.b16 %v2435
  %v2539 = vunpack.c.l.b16 %v2436
  %v2540 = vunpack.c.l.b16 %v2437
  %v2541 = vunpack.c.l.b16 %v2438
  %v2542 = vunpack.c.l.b16 %v2439
  %v2543 = vunpack.c.l.b16 %v2440
  %v2544 = vunpack.c.l.b16 %v2441
  %v2545 = vunpack.c.l.b16 %v2442
  %v2546 = vunpack.c.l.b16 %v2443
  %v2547 = vunpack.c.l.b16 %v2444
  %v2548 = vunpack.c.l.b16 %v2445
  %v2549 = vunpack.c.l.b16 %v2446
  %v2550 = vunpack.c.l.b16 %v2447
  %v2551 = vunpack.c.l.b16 %v2448
  %v2552 = vunpack.c.l.b16 %v2449
  %v2553 = vunpack.c.l.b16 %v2450
  %v2554 = vunpack.c.l.b16 %v2451
  %v2555 = vunpack.c.l.b16 %v2452
  %v2556 = vunpack.c.l.b16 %v2453
  %v2557 = vunpack.c.l.b16 %v2454
  %v2558 = vunpack.c.l.b16 %v2455
  %v2559 = vunpack.c.l.b16 %v2456
  %v2560 = vunpack.c.l.b16 %v2457
  %v2561 = vunpack.c.l.b16 %v2458
  %v2562 = vunpack.c.l.b16 %v2459
  %v2563 = vunpack.c.l.b16 %v2460
  %v2564 = vunpack.c.l.b16 %v2461
  %v2565 = vunpack.c.l.b16 %v2462
  %v2566 = vunpack.c.l.b16 %v2463
  %v2567 = vunpack.c.l.b16 %v2464
  %v2568 = vunpack.c.l.b16 %v2465
  %v2569 = vunpack.c.l.b16 %v2466
  %v2570 = vunpack.c.l.b16 %v2467
  %v2571 = vunpack.c.l.b16 %v2468
  %v2572 = vpack.c.b16 %v2525, %v2524
  %v2573 = vpack.c.b16 %v2527, %v2526
  %v2574 = vpack.c.b16 %v2529, %v2528
  %v2575 = vpack.c.b16 %v2531, %v2530
  %v2576 = vpack.c.b16 %v2533, %v2532
  %v2577 = vpack.c.b16 %v2535, %v2534
  %v2578 = vpack.c.b16 %v2537, %v2536
  %v2579 = vpack.c.b16 %v2539, %v2538
  %v2580 = vpack.c.b16 %v2541, %v2540
  %v2581 = vpack.c.b16 %v2543, %v2542
  %v2582 = vpack.c.b16 %v2545, %v2544
  %v2583 = vpack.c.b16 %v2547, %v2546
  %v2584 = vpack.c.b16 %v2549, %v2548
  %v2585 = vpack.c.b16 %v2551, %v2550
  %v2586 = vpack.c.b16 %v2553, %v2552
  %v2587 = vpack.c.b16 %v2555, %v2554
  %v2588 = vpack.c.b16 %v2557, %v2556
  %v2589 = vpack.c.b16 %v2559, %v2558
  %v2590 = vpack.c.b16 %v2561, %v2560
  %v2591 = vpack.c.b16 %v2563, %v2562
  %v2592 = vpack.c.b16 %v2565, %v2564
  %v2593 = vpack.c.b16 %v2567, %v2566
  %v2594 = vpack.c.b16 %v2569, %v2568
  %v2595 = vpack.c.b16 %v2571, %v2570
  %2620 = vmatprep.subr.bf16.mxu0 0
  %2621 = vmatpush1.bf16.msra.mxu0 %v2572
  %2622 = vmatprep.subr.bf16.mxu0 0
  %2623 = vmatpush1.bf16.msra.mxu0 %v2573
  %2624 = vmatprep.subr.bf16.mxu0 0
  %2625 = vmatpush1.bf16.msra.mxu0 %v2574
  %2626 = vmatprep.subr.bf16.mxu0 0
  %2627 = vmatpush1.bf16.msra.mxu0 %v2575
  %2628 = vmatprep.subr.bf16.mxu0 0
  %2629 = vmatpush1.bf16.msra.mxu0 %v2576
  %2630 = vmatprep.subr.bf16.mxu0 0
  %2631 = vmatpush1.bf16.msra.mxu0 %v2577
  %2632 = vmatprep.subr.bf16.mxu0 0
  %2633 = vmatpush1.bf16.msra.mxu0 %v2578
  %2634 = vmatprep.subr.bf16.mxu0 0
  %2635 = vmatpush1.bf16.msra.mxu0 %v2579
  %2636 = vmatprep.subr.bf16.mxu0 0
  %2637 = vmatpush1.bf16.msra.mxu0 %v2580
  %2638 = vmatprep.subr.bf16.mxu0 0
  %2639 = vmatpush1.bf16.msra.mxu0 %v2581
  %2640 = vmatprep.subr.bf16.mxu0 0
  %2641 = vmatpush1.bf16.msra.mxu0 %v2582
  %2642 = vmatprep.subr.bf16.mxu0 0
  %2643 = vmatpush1.bf16.msra.mxu0 %v2583
  %2644 = vmatprep.subr.bf16.mxu0 0
  %2645 = vmatpush1.bf16.msra.mxu0 %v2584
  %2646 = vmatprep.subr.bf16.mxu0 0
  %2647 = vmatpush1.bf16.msra.mxu0 %v2585
  %2648 = vmatprep.subr.bf16.mxu0 0
  %2649 = vmatpush1.bf16.msra.mxu0 %v2586
  %2650 = vmatprep.subr.bf16.mxu0 0
  %2651 = vmatpush1.bf16.msra.mxu0 %v2587
  %2652 = vmatprep.mubr.bf16.mxu0 %v2373
  %2653 = vmatmul.mubr.bf16.gmra.mrb[0].mxu0 %v2389
  %v2654 = vpop.f32.mrb[0].mxu0
  %v2655 = vadd.f32 %v2474, %v2654
  %v2656 = vpop.f32.mrb[0].mxu0
  %v2657 = vpop.f32.mrb[0].mxu0
  %v2658 = vadd.f32 %v2474, %v2657
  %v2659 = vpop.f32.mrb[0].mxu0
  %2660 = vmatprep.mubr.bf16.mxu0 %v2374
  %2661 = vmatmul.mubr.bf16.gmra.mrb[0].mxu0 %v2390
  %v2662 = vpop.f32.mrb[0].mxu0
  %v2663 = vadd.f32 %v2474, %v2662
  %v2664 = vpop.f32.mrb[0].mxu0
  %v2665 = vpop.f32.mrb[0].mxu0
  %v2666 = vadd.f32 %v2474, %v2665
  %v2667 = vpop.f32.mrb[0].mxu0
  %2668 = vmatprep.mubr.bf16.mxu0 %v2375
  %2669 = vmatmul.mubr.bf16.gmra.mrb[0].mxu0 %v2391
  %v2670 = vpop.f32.mrb[0].mxu0
  %v2671 = vadd.f32 %v2474, %v2670
  %v2672 = vpop.f32.mrb[0].mxu0
  %v2673 = vpop.f32.mrb[0].mxu0
  %v2674 = vadd.f32 %v2474, %v2673
  %v2675 = vpop.f32.mrb[0].mxu0
  %2676 = vmatprep.mubr.bf16.mxu0 %v2376
  %2677 = vmatmul.mubr.bf16.gmra.mrb[0].mxu0 %v2392
  %v2678 = vpop.f32.mrb[0].mxu0
  %v2679 = vadd.f32 %v2474, %v2678
  %v2680 = vpop.f32.mrb[0].mxu0
  %v2681 = vpop.f32.mrb[0].mxu0
  %v2682 = vadd.f32 %v2474, %v2681
  %v2683 = vpop.f32.mrb[0].mxu0
  %2684 = vmatprep.mubr.bf16.mxu0 %v2377
  %2685 = vmatmul.mubr.bf16.gmra.mrb[0].mxu0 %v2393
  %v2686 = vpop.f32.mrb[0].mxu0
  %v2687 = vadd.f32 %v2474, %v2686
  %v2688 = vpop.f32.mrb[0].mxu0
  %v2689 = vpop.f32.mrb[0].mxu0
  %v2690 = vadd.f32 %v2474, %v2689
  %v2691 = vpop.f32.mrb[0].mxu0
  %2692 = vmatprep.mubr.bf16.mxu0 %v2378
  %2693 = vmatmul.mubr.bf16.gmra.mrb[0].mxu0 %v2394
  %v2694 = vpop.f32.mrb[0].mxu0
  %v2695 = vadd.f32 %v2474, %v2694
  %v2696 = vpop.f32.mrb[0].mxu0
  %v2697 = vpop.f32.mrb[0].mxu0
  %v2698 = vadd.f32 %v2474, %v2697
  %v2699 = vpop.f32.mrb[0].mxu0
  %2700 = vmatprep.mubr.bf16.mxu0 %v2379
  %2701 = vmatmul.mubr.bf16.gmra.mrb[0].mxu0 %v2395
  %v2702 = vpop.f32.mrb[0].mxu0
  %v2703 = vadd.f32 %v2474, %v2702
  %v2704 = vpop.f32.mrb[0].mxu0
  %v2705 = vpop.f32.mrb[0].mxu0
  %v2706 = vadd.f32 %v2474, %v2705
  %v2707 = vpop.f32.mrb[0].mxu0
  %2708 = vmatprep.mubr.bf16.mxu0 %v2380
  %2709 = vmatmul.mubr.bf16.gmra.mrb[0].mxu0 %v2396
  %v2710 = vpop.f32.mrb[0].mxu0
  %v2711 = vadd.f32 %v2474, %v2710
  %v2712 = vpop.f32.mrb[0].mxu0
  %v2713 = vpop.f32.mrb[0].mxu0
  %v2714 = vadd.f32 %v2474, %v2713
  %v2715 = vpop.f32.mrb[0].mxu0
  %2716 = vmatprep.mubr.bf16.mxu0 %v2381
  %2717 = vmatmul.mubr.bf16.gmra.mrb[0].mxu0 %v2397
  %v2718 = vpop.f32.mrb[0].mxu0
  %v2719 = vadd.f32 %v2474, %v2718
  %v2720 = vpop.f32.mrb[0].mxu0
  %v2721 = vpop.f32.mrb[0].mxu0
  %v2722 = vadd.f32 %v2474, %v2721
  %v2723 = vpop.f32.mrb[0].mxu0
  %2724 = vmatprep.mubr.bf16.mxu0 %v2382
  %2725 = vmatmul.mubr.bf16.gmra.mrb[0].mxu0 %v2398
  %v2726 = vpop.f32.mrb[0].mxu0
  %v2727 = vadd.f32 %v2474, %v2726
  %v2728 = vpop.f32.mrb[0].mxu0
  %v2729 = vpop.f32.mrb[0].mxu0
  %v2730 = vadd.f32 %v2474, %v2729
  %v2731 = vpop.f32.mrb[0].mxu0
  %2732 = vmatprep.mubr.bf16.mxu0 %v2383
  %2733 = vmatmul.mubr.bf16.gmra.mrb[0].mxu0 %v2399
  %v2734 = vpop.f32.mrb[0].mxu0
  %v2735 = vadd.f32 %v2474, %v2734
  %v2736 = vpop.f32.mrb[0].mxu0
  %v2737 = vpop.f32.mrb[0].mxu0
  %v2738 = vadd.f32 %v2474, %v2737
  %v2739 = vpop.f32.mrb[0].mxu0
  %2740 = vmatprep.mubr.bf16.mxu0 %v2384
  %2741 = vmatmul.mubr.bf16.gmra.mrb[0].mxu0 %v2400
  %v2742 = vpop.f32.mrb[0].mxu0
  %v2743 = vadd.f32 %v2474, %v2742
  %v2744 = vpop.f32.mrb[0].mxu0
  %v2745 = vpop.f32.mrb[0].mxu0
  %v2746 = vadd.f32 %v2474, %v2745
  %v2747 = vpop.f32.mrb[0].mxu0
  %2748 = vmatprep.mubr.bf16.mxu0 %v2385
  %2749 = vmatmul.mubr.bf16.gmra.mrb[0].mxu0 %v2401
  %v2750 = vpop.f32.mrb[0].mxu0
  %v2751 = vadd.f32 %v2474, %v2750
  %v2752 = vpop.f32.mrb[0].mxu0
  %v2753 = vpop.f32.mrb[0].mxu0
  %v2754 = vadd.f32 %v2474, %v2753
  %v2755 = vpop.f32.mrb[0].mxu0
  %2756 = vmatprep.mubr.bf16.mxu0 %v2386
  %2757 = vmatmul.mubr.bf16.gmra.mrb[0].mxu0 %v2402
  %v2758 = vpop.f32.mrb[0].mxu0
  %v2759 = vadd.f32 %v2474, %v2758
  %v2760 = vpop.f32.mrb[0].mxu0
  %v2761 = vpop.f32.mrb[0].mxu0
  %v2762 = vadd.f32 %v2474, %v2761
  %v2763 = vpop.f32.mrb[0].mxu0
  %2764 = vmatprep.mubr.bf16.mxu0 %v2387
  %2765 = vmatmul.mubr.bf16.gmra.mrb[0].mxu0 %v2403
  %v2766 = vpop.f32.mrb[0].mxu0
  %v2767 = vadd.f32 %v2474, %v2766
  %v2768 = vpop.f32.mrb[0].mxu0
  %v2769 = vpop.f32.mrb[0].mxu0
  %v2770 = vadd.f32 %v2474, %v2769
  %v2771 = vpop.f32.mrb[0].mxu0
  %2772 = vmatprep.mubr.bf16.mxu0 %v2388
  %2773 = vmatmul.mubr.bf16.gmra.mrb[0].mxu0 %v2404
  %v2774 = vpop.f32.mrb[0].mxu0
  %v2775 = vadd.f32 %v2474, %v2774
  %v2776 = vpop.f32.mrb[0].mxu0
  %v2777 = vpop.f32.mrb[0].mxu0
  %v2778 = vadd.f32 %v2474, %v2777
  %v2779 = vpop.f32.mrb[0].mxu0
  %2780 = vdwg.mxu0
  %2781 = vmatprep.subr.bf16.mxu0 0
  %2782 = vmatpush1.bf16.msra.mxu0 %v2588
  %2783 = vmatprep.subr.bf16.mxu0 0
  %2784 = vmatpush1.bf16.msra.mxu0 %v2589
  %2785 = vmatprep.subr.bf16.mxu0 0
  %2786 = vmatpush1.bf16.msra.mxu0 %v2590
  %2787 = vmatprep.subr.bf16.mxu0 0
  %2788 = vmatpush1.bf16.msra.mxu0 %v2591
  %2789 = vmatprep.subr.bf16.mxu0 0
  %2790 = vmatpush1.bf16.msra.mxu0 %v2592
  %2791 = vmatprep.subr.bf16.mxu0 0
  %2792 = vmatpush1.bf16.msra.mxu0 %v2593
  %2793 = vmatprep.subr.bf16.mxu0 0
  %2794 = vmatpush1.bf16.msra.mxu0 %v2594
  %2795 = vmatprep.subr.bf16.mxu0 0
  %2796 = vmatpush1.bf16.msra.mxu0 %v2595
  %2797 = vmatprep.subr.bf16.mxu0 0
  %2798 = vmatpush1.bf16.msra.mxu0 0
  %2799 = vmatprep.subr.bf16.mxu0 0
  %2800 = vmatpush1.bf16.msra.mxu0 0
  %2801 = vmatprep.subr.bf16.mxu0 0
  %2802 = vmatpush1.bf16.msra.mxu0 0
  %2803 = vmatprep.subr.bf16.mxu0 0
  %2804 = vmatpush1.bf16.msra.mxu0 0
  %2805 = vmatprep.subr.bf16.mxu0 0
  %2806 = vmatpush1.bf16.msra.mxu0 0
  %2807 = vmatprep.subr.bf16.mxu0 0
  %2808 = vmatpush1.bf16.msra.mxu0 0
  %2809 = vmatprep.subr.bf16.mxu0 0
  %2810 = vmatpush1.bf16.msra.mxu0 0
  %2811 = vmatprep.subr.bf16.mxu0 0
  %2812 = vmatpush1.bf16.msra.mxu0 0
  %2813 = vmatprep.mubr.bf16.mxu0 0
  %2814 = vmatmul.mubr.bf16.gmra.mrb[0].mxu0 %v2405
  %v2815 = vpop.f32.mrb[0].mxu0
  %v2816 = vadd.f32 %v2655, %v2815
  %v2817 = vpop.f32.mrb[0].mxu0
  %v2818 = vpop.f32.mrb[0].mxu0
  %v2819 = vadd.f32 %v2658, %v2818
  %v2820 = vpop.f32.mrb[0].mxu0
  %2821 = vmatprep.mubr.bf16.mxu0 0
  %2822 = vmatmul.mubr.bf16.gmra.mrb[0].mxu0 %v2406
  %v2823 = vpop.f32.mrb[0].mxu0
  %v2824 = vadd.f32 %v2663, %v2823
  %v2825 = vpop.f32.mrb[0].mxu0
  %v2826 = vpop.f32.mrb[0].mxu0
  %v2827 = vadd.f32 %v2666, %v2826
  %v2828 = vpop.f32.mrb[0].mxu0
  %2829 = vmatprep.mubr.bf16.mxu0 0
  %2830 = vmatmul.mubr.bf16.gmra.mrb[0].mxu0 %v2407
  %v2831 = vpop.f32.mrb[0].mxu0
  %v2832 = vadd.f32 %v2671, %v2831
  %v2833 = vpop.f32.mrb[0].mxu0
  %v2834 = vpop.f32.mrb[0].mxu0
  %v2835 = vadd.f32 %v2674, %v2834
  %v2836 = vpop.f32.mrb[0].mxu0
  %2837 = vmatprep.mubr.bf16.mxu0 0
  %2838 = vmatmul.mubr.bf16.gmra.mrb[0].mxu0 %v2408
  %v2839 = vpop.f32.mrb[0].mxu0
  %v2840 = vadd.f32 %v2679, %v2839
  %v2841 = vpop.f32.mrb[0].mxu0
  %v2842 = vpop.f32.mrb[0].mxu0
  %v2843 = vadd.f32 %v2682, %v2842
  %v2844 = vpop.f32.mrb[0].mxu0
  %2845 = vmatprep.mubr.bf16.mxu0 0
  %2846 = vmatmul.mubr.bf16.gmra.mrb[0].mxu0 %v2409
  %v2847 = vpop.f32.mrb[0].mxu0
  %v2848 = vadd.f32 %v2687, %v2847
  %v2849 = vpop.f32.mrb[0].mxu0
  %v2850 = vpop.f32.mrb[0].mxu0
  %v2851 = vadd.f32 %v2690, %v2850
  %v2852 = vpop.f32.mrb[0].mxu0
  %2853 = vmatprep.mubr.bf16.mxu0 0
  %2854 = vmatmul.mubr.bf16.gmra.mrb[0].mxu0 %v2410
  %v2855 = vpop.f32.mrb[0].mxu0
  %v2856 = vadd.f32 %v2695, %v2855
  %v2857 = vpop.f32.mrb[0].mxu0
  %v2858 = vpop.f32.mrb[0].mxu0
  %v2859 = vadd.f32 %v2698, %v2858
  %v2860 = vpop.f32.mrb[0].mxu0
  %2861 = vmatprep.mubr.bf16.mxu0 0
  %2862 = vmatmul.mubr.bf16.gmra.mrb[0].mxu0 %v2411
  %v2863 = vpop.f32.mrb[0].mxu0
  %v2864 = vadd.f32 %v2703, %v2863
  %v2865 = vpop.f32.mrb[0].mxu0
  %v2866 = vpop.f32.mrb[0].mxu0
  %v2867 = vadd.f32 %v2706, %v2866
  %v2868 = vpop.f32.mrb[0].mxu0
  %2869 = vmatprep.mubr.bf16.mxu0 0
  %2870 = vmatmul.mubr.bf16.gmra.mrb[0].mxu0 %v2412
  %v2871 = vpop.f32.mrb[0].mxu0
  %v2872 = vadd.f32 %v2711, %v2871
  %v2873 = vpop.f32.mrb[0].mxu0
  %v2874 = vpop.f32.mrb[0].mxu0
  %v2875 = vadd.f32 %v2714, %v2874
  %v2876 = vpop.f32.mrb[0].mxu0
  %2877 = vmatprep.mubr.bf16.mxu0 0
  %2878 = vmatmul.mubr.bf16.gmra.mrb[0].mxu0 %v2413
  %v2879 = vpop.f32.mrb[0].mxu0
  %v2880 = vadd.f32 %v2719, %v2879
  %v2881 = vpop.f32.mrb[0].mxu0
  %v2882 = vpop.f32.mrb[0].mxu0
  %v2883 = vadd.f32 %v2722, %v2882
  %v2884 = vpop.f32.mrb[0].mxu0
  %2885 = vmatprep.mubr.bf16.mxu0 0
  %2886 = vmatmul.mubr.bf16.gmra.mrb[0].mxu0 %v2414
  %v2887 = vpop.f32.mrb[0].mxu0
  %v2888 = vadd.f32 %v2727, %v2887
  %v2889 = vpop.f32.mrb[0].mxu0
  %v2890 = vpop.f32.mrb[0].mxu0
  %v2891 = vadd.f32 %v2730, %v2890
  %v2892 = vpop.f32.mrb[0].mxu0
  %2893 = vmatprep.mubr.bf16.mxu0 0
  %2894 = vmatmul.mubr.bf16.gmra.mrb[0].mxu0 %v2415
  %v2895 = vpop.f32.mrb[0].mxu0
  %v2896 = vadd.f32 %v2735, %v2895
  %v2897 = vpop.f32.mrb[0].mxu0
  %v2898 = vpop.f32.mrb[0].mxu0
  %v2899 = vadd.f32 %v2738, %v2898
  %v2900 = vpop.f32.mrb[0].mxu0
  %2901 = vmatprep.mubr.bf16.mxu0 0
  %2902 = vmatmul.mubr.bf16.gmra.mrb[0].mxu0 %v2416
  %v2903 = vpop.f32.mrb[0].mxu0
  %v2904 = vadd.f32 %v2743, %v2903
  %v2905 = vpop.f32.mrb[0].mxu0
  %v2906 = vpop.f32.mrb[0].mxu0
  %v2907 = vadd.f32 %v2746, %v2906
  %v2908 = vpop.f32.mrb[0].mxu0
  %2909 = vmatprep.mubr.bf16.mxu0 0
  %2910 = vmatmul.mubr.bf16.gmra.mrb[0].mxu0 %v2417
  %v2911 = vpop.f32.mrb[0].mxu0
  %v2912 = vadd.f32 %v2751, %v2911
  %v2913 = vpop.f32.mrb[0].mxu0
  %v2914 = vpop.f32.mrb[0].mxu0
  %v2915 = vadd.f32 %v2754, %v2914
  %v2916 = vpop.f32.mrb[0].mxu0
  %2917 = vmatprep.mubr.bf16.mxu0 0
  %2918 = vmatmul.mubr.bf16.gmra.mrb[0].mxu0 %v2418
  %v2919 = vpop.f32.mrb[0].mxu0
  %v2920 = vadd.f32 %v2759, %v2919
  %v2921 = vpop.f32.mrb[0].mxu0
  %v2922 = vpop.f32.mrb[0].mxu0
  %v2923 = vadd.f32 %v2762, %v2922
  %v2924 = vpop.f32.mrb[0].mxu0
  %2925 = vmatprep.mubr.bf16.mxu0 0
  %2926 = vmatmul.mubr.bf16.gmra.mrb[0].mxu0 %v2419
  %v2927 = vpop.f32.mrb[0].mxu0
  %v2928 = vadd.f32 %v2767, %v2927
  %v2929 = vpop.f32.mrb[0].mxu0
  %v2930 = vpop.f32.mrb[0].mxu0
  %v2931 = vadd.f32 %v2770, %v2930
  %v2932 = vpop.f32.mrb[0].mxu0
  %2933 = vmatprep.mubr.bf16.mxu0 0
  %2934 = vmatmul.mubr.bf16.gmra.mrb[0].mxu0 %v2420
  %v2935 = vpop.f32.mrb[0].mxu0
  %v2936 = vadd.f32 %v2775, %v2935
  %v2937 = vpop.f32.mrb[0].mxu0
  %v2938 = vpop.f32.mrb[0].mxu0
  %v2939 = vadd.f32 %v2778, %v2938
  %v2940 = vpop.f32.mrb[0].mxu0
  %2941 = vdwg.mxu0
  %v2942 = vmax.f32 %v2816, 0.0
  %v2943 = vmax.f32 %v2819, 0.0
  %v2944 = vmax.f32 %v2824, 0.0
  %v2945 = vmax.f32 %v2827, 0.0
  %v2946 = vmax.f32 %v2832, 0.0
  %v2947 = vmax.f32 %v2835, 0.0
  %v2948 = vmax.f32 %v2840, 0.0
  %v2949 = vmax.f32 %v2843, 0.0
  %v2950 = vmax.f32 %v2848, 0.0
  %v2951 = vmax.f32 %v2851, 0.0
  %v2952 = vmax.f32 %v2856, 0.0
  %v2953 = vmax.f32 %v2859, 0.0
  %v2954 = vmax.f32 %v2864, 0.0
  %v2955 = vmax.f32 %v2867, 0.0
  %v2956 = vmax.f32 %v2872, 0.0
  %v2957 = vmax.f32 %v2875, 0.0
  %v2958 = vmax.f32 %v2880, 0.0
  %v2959 = vmax.f32 %v2883, 0.0
  %v2960 = vmax.f32 %v2888, 0.0
  %v2961 = vmax.f32 %v2891, 0.0
  %v2962 = vmax.f32 %v2896, 0.0
  %v2963 = vmax.f32 %v2899, 0.0
  %v2964 = vmax.f32 %v2904, 0.0
  %v2965 = vmax.f32 %v2907, 0.0
  %v2966 = vmax.f32 %v2912, 0.0
  %v2967 = vmax.f32 %v2915, 0.0
  %v2968 = vmax.f32 %v2920, 0.0
  %v2969 = vmax.f32 %v2923, 0.0
  %v2970 = vmax.f32 %v2928, 0.0
  %v2971 = vmax.f32 %v2931, 0.0
  %v2972 = vmax.f32 %v2936, 0.0
  %v2973 = vmax.f32 %v2939, 0.0
  %v2974 = vmul.f32 %v2942, %v185
  %v2975 = vmul.f32 %v2943, %v190
  %v2976 = vmul.f32 %v2944, %v195
  %v2977 = vmul.f32 %v2945, %v200
  %v2978 = vmul.f32 %v2946, %v205
  %v2979 = vmul.f32 %v2947, %v210
  %v2980 = vmul.f32 %v2948, %v215
  %v2981 = vmul.f32 %v2949, %v220
  %v2982 = vmul.f32 %v2950, %v225
  %v2983 = vmul.f32 %v2951, %v230
  %v2984 = vmul.f32 %v2952, %v235
  %v2985 = vmul.f32 %v2953, %v240
  %v2986 = vmul.f32 %v2954, %v245
  %v2987 = vmul.f32 %v2955, %v250
  %v2988 = vmul.f32 %v2956, %v255
  %v2989 = vmul.f32 %v2957, %v260
  %v2990 = vmul.f32 %v2958, %v265
  %v2991 = vmul.f32 %v2959, %v270
  %v2992 = vmul.f32 %v2960, %v275
  %v2993 = vmul.f32 %v2961, %v280
  %v2994 = vmul.f32 %v2962, %v285
  %v2995 = vmul.f32 %v2963, %v290
  %v2996 = vmul.f32 %v2964, %v295
  %v2997 = vmul.f32 %v2965, %v300
  %v2998 = vmul.f32 %v2966, %v305
  %v2999 = vmul.f32 %v2967, %v310
  %v3000 = vmul.f32 %v2968, %v315
  %v3001 = vmul.f32 %v2969, %v320
  %v3002 = vmul.f32 %v2970, %v325
  %v3003 = vmul.f32 %v2971, %v330
  %v3004 = vmul.f32 %v2972, %v335
  %v3005 = vmul.f32 %v2973, %v340
  %v3006 = vpack.c.bf16 %v2975, %v2974
  %v3007 = vpack.c.bf16 %v2977, %v2976
  %v3008 = vpack.c.bf16 %v2979, %v2978
  %v3009 = vpack.c.bf16 %v2981, %v2980
  %v3010 = vpack.c.bf16 %v2983, %v2982
  %v3011 = vpack.c.bf16 %v2985, %v2984
  %v3012 = vpack.c.bf16 %v2987, %v2986
  %v3013 = vpack.c.bf16 %v2989, %v2988
  %v3014 = vpack.c.bf16 %v2991, %v2990
  %v3015 = vpack.c.bf16 %v2993, %v2992
  %v3016 = vpack.c.bf16 %v2995, %v2994
  %v3017 = vpack.c.bf16 %v2997, %v2996
  %v3018 = vpack.c.bf16 %v2999, %v2998
  %v3019 = vpack.c.bf16 %v3001, %v3000
  %v3020 = vpack.c.bf16 %v3003, %v3002
  %v3021 = vpack.c.bf16 %v3005, %v3004
  %v3022 = vld [vmem:[%s12] sm:$0xff]
  %v3023 = vld [vmem:[%s12 + $0x8] sm:$0xff]
  %v3024 = vld [vmem:[%s12 + $0x10] sm:$0xff]
  %v3025 = vld [vmem:[%s12 + $0x18] sm:$0xff]
  %v3026 = vld [vmem:[%s12 + $0x20] sm:$0xff]
  %v3027 = vld [vmem:[%s12 + $0x28] sm:$0xff]
  %v3028 = vld [vmem:[%s12 + $0x30] sm:$0xff]
  %v3029 = vld [vmem:[%s12 + $0x38] sm:$0xff]
  %v3030 = vld [vmem:[%s12 + $0x40] sm:$0xff]
  %v3031 = vld [vmem:[%s12 + $0x48] sm:$0xff]
  %v3032 = vld [vmem:[%s12 + $0x50] sm:$0xff]
  %v3033 = vld [vmem:[%s12 + $0x58] sm:$0xff]
  %v3034 = vld [vmem:[%s12 + $0x60] sm:$0xff]
  %v3035 = vld [vmem:[%s12 + $0x68] sm:$0xff]
  %v3036 = vld [vmem:[%s12 + $0x70] sm:$0xff]
  %v3037 = vld [vmem:[%s12 + $0x78] sm:$0xff]
  %v3038 = vld [vmem:[%s13] sm:$0x3]
  %v3040 = vlaneseq
  %v3041 = vshrl.u32 %v3040, 7
  %v3042 = vsub.s32 0, %v3041
  %v3043 = vrot.slane %v3038, %v3042
  %v3044 = vlaneseq
  %v3045 = vshrl.u32 %v3044, 7
  %v3046 = vsub.s32 1, %v3045
  %v3047 = vrot.slane %v3038, %v3046
  %v3066 = vunpack.c.l.b16 %v3022
  %v3067 = vunpack.c.h.b16 %v3022
  %v3068 = vunpack.c.l.b16 %v3023
  %v3069 = vunpack.c.h.b16 %v3023
  %v3070 = vunpack.c.l.b16 %v3024
  %v3071 = vunpack.c.h.b16 %v3024
  %v3072 = vunpack.c.l.b16 %v3025
  %v3073 = vunpack.c.h.b16 %v3025
  %v3074 = vunpack.c.l.b16 %v3026
  %v3075 = vunpack.c.h.b16 %v3026
  %v3076 = vunpack.c.l.b16 %v3027
  %v3077 = vunpack.c.h.b16 %v3027
  %v3078 = vunpack.c.l.b16 %v3028
  %v3079 = vunpack.c.h.b16 %v3028
  %v3080 = vunpack.c.l.b16 %v3029
  %v3081 = vunpack.c.h.b16 %v3029
  %v3082 = vunpack.c.l.b16 %v3030
  %v3083 = vunpack.c.h.b16 %v3030
  %v3084 = vunpack.c.l.b16 %v3031
  %v3085 = vunpack.c.h.b16 %v3031
  %v3086 = vunpack.c.l.b16 %v3032
  %v3087 = vunpack.c.h.b16 %v3032
  %v3088 = vunpack.c.l.b16 %v3033
  %v3089 = vunpack.c.h.b16 %v3033
  %v3090 = vunpack.c.l.b16 %v3034
  %v3091 = vunpack.c.h.b16 %v3034
  %v3092 = vunpack.c.l.b16 %v3035
  %v3093 = vunpack.c.h.b16 %v3035
  %v3094 = vunpack.c.l.b16 %v3036
  %v3095 = vunpack.c.h.b16 %v3036
  %v3096 = vunpack.c.l.b16 %v3037
  %v3097 = vunpack.c.h.b16 %v3037
  %v3098 = vpack.c.b16 %v3068, %v3066
  %v3099 = vpack.c.b16 %v3069, %v3067
  %v3100 = vpack.c.b16 %v3072, %v3070
  %v3101 = vpack.c.b16 %v3073, %v3071
  %v3102 = vpack.c.b16 %v3076, %v3074
  %v3103 = vpack.c.b16 %v3077, %v3075
  %v3104 = vpack.c.b16 %v3080, %v3078
  %v3105 = vpack.c.b16 %v3081, %v3079
  %v3106 = vpack.c.b16 %v3084, %v3082
  %v3107 = vpack.c.b16 %v3085, %v3083
  %v3108 = vpack.c.b16 %v3088, %v3086
  %v3109 = vpack.c.b16 %v3089, %v3087
  %v3110 = vpack.c.b16 %v3092, %v3090
  %v3111 = vpack.c.b16 %v3093, %v3091
  %v3112 = vpack.c.b16 %v3096, %v3094
  %v3113 = vpack.c.b16 %v3097, %v3095
  %3130 = vmatprep.subr.bf16.mxu0 %v3099
  %3131 = vmatpush1.bf16.msra.mxu0 %v3098
  %3132 = vmatprep.subr.bf16.mxu0 %v3101
  %3133 = vmatpush1.bf16.msra.mxu0 %v3100
  %3134 = vmatprep.subr.bf16.mxu0 %v3103
  %3135 = vmatpush1.bf16.msra.mxu0 %v3102
  %3136 = vmatprep.subr.bf16.mxu0 %v3105
  %3137 = vmatpush1.bf16.msra.mxu0 %v3104
  %3138 = vmatprep.subr.bf16.mxu0 %v3107
  %3139 = vmatpush1.bf16.msra.mxu0 %v3106
  %3140 = vmatprep.subr.bf16.mxu0 %v3109
  %3141 = vmatpush1.bf16.msra.mxu0 %v3108
  %3142 = vmatprep.subr.bf16.mxu0 %v3111
  %3143 = vmatpush1.bf16.msra.mxu0 %v3110
  %3144 = vmatprep.subr.bf16.mxu0 %v3113
  %3145 = vmatpush1.bf16.msra.mxu0 %v3112
  %3146 = vmatprep.subr.bf16.mxu0 0
  %3147 = vmatpush1.bf16.msra.mxu0 0
  %3148 = vmatprep.subr.bf16.mxu0 0
  %3149 = vmatpush1.bf16.msra.mxu0 0
  %3150 = vmatprep.subr.bf16.mxu0 0
  %3151 = vmatpush1.bf16.msra.mxu0 0
  %3152 = vmatprep.subr.bf16.mxu0 0
  %3153 = vmatpush1.bf16.msra.mxu0 0
  %3154 = vmatprep.subr.bf16.mxu0 0
  %3155 = vmatpush1.bf16.msra.mxu0 0
  %3156 = vmatprep.subr.bf16.mxu0 0
  %3157 = vmatpush1.bf16.msra.mxu0 0
  %3158 = vmatprep.subr.bf16.mxu0 0
  %3159 = vmatpush1.bf16.msra.mxu0 0
  %3160 = vmatprep.subr.bf16.mxu0 0
  %3161 = vmatpush1.bf16.msra.mxu0 0
  %3162 = vmatprep.mubr.bf16.mxu0 0
  %3163 = vmatmul.mubr.bf16.gmra.mrb[0].mxu0 %v3006
  %v3164 = vpop.f32.mrb[0].mxu0
  %v3165 = vadd.f32 %v3043, %v3164
  %v3166 = vpop.f32.mrb[0].mxu0
  %v3167 = vadd.f32 %v3047, %v3166
  %v3168 = vpop.f32.mrb[0].mxu0
  %v3169 = vadd.f32 %v3043, %v3168
  %v3170 = vpop.f32.mrb[0].mxu0
  %v3171 = vadd.f32 %v3047, %v3170
  %3172 = vmatprep.mubr.bf16.mxu0 0
  %3173 = vmatmul.mubr.bf16.gmra.mrb[0].mxu0 %v3007
  %v3174 = vpop.f32.mrb[0].mxu0
  %v3175 = vadd.f32 %v3043, %v3174
  %v3176 = vpop.f32.mrb[0].mxu0
  %v3177 = vadd.f32 %v3047, %v3176
  %v3178 = vpop.f32.mrb[0].mxu0
  %v3179 = vadd.f32 %v3043, %v3178
  %v3180 = vpop.f32.mrb[0].mxu0
  %v3181 = vadd.f32 %v3047, %v3180
  %3182 = vmatprep.mubr.bf16.mxu0 0
  %3183 = vmatmul.mubr.bf16.gmra.mrb[0].mxu0 %v3008
  %v3184 = vpop.f32.mrb[0].mxu0
  %v3185 = vadd.f32 %v3043, %v3184
  %v3186 = vpop.f32.mrb[0].mxu0
  %v3187 = vadd.f32 %v3047, %v3186
  %v3188 = vpop.f32.mrb[0].mxu0
  %v3189 = vadd.f32 %v3043, %v3188
  %v3190 = vpop.f32.mrb[0].mxu0
  %v3191 = vadd.f32 %v3047, %v3190
  %3192 = vmatprep.mubr.bf16.mxu0 0
  %3193 = vmatmul.mubr.bf16.gmra.mrb[0].mxu0 %v3009
  %v3194 = vpop.f32.mrb[0].mxu0
  %v3195 = vadd.f32 %v3043, %v3194
  %v3196 = vpop.f32.mrb[0].mxu0
  %v3197 = vadd.f32 %v3047, %v3196
  %v3198 = vpop.f32.mrb[0].mxu0
  %v3199 = vadd.f32 %v3043, %v3198
  %v3200 = vpop.f32.mrb[0].mxu0
  %v3201 = vadd.f32 %v3047, %v3200
  %3202 = vmatprep.mubr.bf16.mxu0 0
  %3203 = vmatmul.mubr.bf16.gmra.mrb[0].mxu0 %v3010
  %v3204 = vpop.f32.mrb[0].mxu0
  %v3205 = vadd.f32 %v3043, %v3204
  %v3206 = vpop.f32.mrb[0].mxu0
  %v3207 = vadd.f32 %v3047, %v3206
  %v3208 = vpop.f32.mrb[0].mxu0
  %v3209 = vadd.f32 %v3043, %v3208
  %v3210 = vpop.f32.mrb[0].mxu0
  %v3211 = vadd.f32 %v3047, %v3210
  %3212 = vmatprep.mubr.bf16.mxu0 0
  %3213 = vmatmul.mubr.bf16.gmra.mrb[0].mxu0 %v3011
  %v3214 = vpop.f32.mrb[0].mxu0
  %v3215 = vadd.f32 %v3043, %v3214
  %v3216 = vpop.f32.mrb[0].mxu0
  %v3217 = vadd.f32 %v3047, %v3216
  %v3218 = vpop.f32.mrb[0].mxu0
  %v3219 = vadd.f32 %v3043, %v3218
  %v3220 = vpop.f32.mrb[0].mxu0
  %v3221 = vadd.f32 %v3047, %v3220
  %3222 = vmatprep.mubr.bf16.mxu0 0
  %3223 = vmatmul.mubr.bf16.gmra.mrb[0].mxu0 %v3012
  %v3224 = vpop.f32.mrb[0].mxu0
  %v3225 = vadd.f32 %v3043, %v3224
  %v3226 = vpop.f32.mrb[0].mxu0
  %v3227 = vadd.f32 %v3047, %v3226
  %v3228 = vpop.f32.mrb[0].mxu0
  %v3229 = vadd.f32 %v3043, %v3228
  %v3230 = vpop.f32.mrb[0].mxu0
  %v3231 = vadd.f32 %v3047, %v3230
  %3232 = vmatprep.mubr.bf16.mxu0 0
  %3233 = vmatmul.mubr.bf16.gmra.mrb[0].mxu0 %v3013
  %v3234 = vpop.f32.mrb[0].mxu0
  %v3235 = vadd.f32 %v3043, %v3234
  %v3236 = vpop.f32.mrb[0].mxu0
  %v3237 = vadd.f32 %v3047, %v3236
  %v3238 = vpop.f32.mrb[0].mxu0
  %v3239 = vadd.f32 %v3043, %v3238
  %v3240 = vpop.f32.mrb[0].mxu0
  %v3241 = vadd.f32 %v3047, %v3240
  %3242 = vmatprep.mubr.bf16.mxu0 0
  %3243 = vmatmul.mubr.bf16.gmra.mrb[0].mxu0 %v3014
  %v3244 = vpop.f32.mrb[0].mxu0
  %v3245 = vadd.f32 %v3043, %v3244
  %v3246 = vpop.f32.mrb[0].mxu0
  %v3247 = vadd.f32 %v3047, %v3246
  %v3248 = vpop.f32.mrb[0].mxu0
  %v3249 = vadd.f32 %v3043, %v3248
  %v3250 = vpop.f32.mrb[0].mxu0
  %v3251 = vadd.f32 %v3047, %v3250
  %3252 = vmatprep.mubr.bf16.mxu0 0
  %3253 = vmatmul.mubr.bf16.gmra.mrb[0].mxu0 %v3015
  %v3254 = vpop.f32.mrb[0].mxu0
  %v3255 = vadd.f32 %v3043, %v3254
  %v3256 = vpop.f32.mrb[0].mxu0
  %v3257 = vadd.f32 %v3047, %v3256
  %v3258 = vpop.f32.mrb[0].mxu0
  %v3259 = vadd.f32 %v3043, %v3258
  %v3260 = vpop.f32.mrb[0].mxu0
  %v3261 = vadd.f32 %v3047, %v3260
  %3262 = vmatprep.mubr.bf16.mxu0 0
  %3263 = vmatmul.mubr.bf16.gmra.mrb[0].mxu0 %v3016
  %v3264 = vpop.f32.mrb[0].mxu0
  %v3265 = vadd.f32 %v3043, %v3264
  %v3266 = vpop.f32.mrb[0].mxu0
  %v3267 = vadd.f32 %v3047, %v3266
  %v3268 = vpop.f32.mrb[0].mxu0
  %v3269 = vadd.f32 %v3043, %v3268
  %v3270 = vpop.f32.mrb[0].mxu0
  %v3271 = vadd.f32 %v3047, %v3270
  %3272 = vmatprep.mubr.bf16.mxu0 0
  %3273 = vmatmul.mubr.bf16.gmra.mrb[0].mxu0 %v3017
  %v3274 = vpop.f32.mrb[0].mxu0
  %v3275 = vadd.f32 %v3043, %v3274
  %v3276 = vpop.f32.mrb[0].mxu0
  %v3277 = vadd.f32 %v3047, %v3276
  %v3278 = vpop.f32.mrb[0].mxu0
  %v3279 = vadd.f32 %v3043, %v3278
  %v3280 = vpop.f32.mrb[0].mxu0
  %v3281 = vadd.f32 %v3047, %v3280
  %3282 = vmatprep.mubr.bf16.mxu0 0
  %3283 = vmatmul.mubr.bf16.gmra.mrb[0].mxu0 %v3018
  %v3284 = vpop.f32.mrb[0].mxu0
  %v3285 = vadd.f32 %v3043, %v3284
  %v3286 = vpop.f32.mrb[0].mxu0
  %v3287 = vadd.f32 %v3047, %v3286
  %v3288 = vpop.f32.mrb[0].mxu0
  %v3289 = vadd.f32 %v3043, %v3288
  %v3290 = vpop.f32.mrb[0].mxu0
  %v3291 = vadd.f32 %v3047, %v3290
  %3292 = vmatprep.mubr.bf16.mxu0 0
  %3293 = vmatmul.mubr.bf16.gmra.mrb[0].mxu0 %v3019
  %v3294 = vpop.f32.mrb[0].mxu0
  %v3295 = vadd.f32 %v3043, %v3294
  %v3296 = vpop.f32.mrb[0].mxu0
  %v3297 = vadd.f32 %v3047, %v3296
  %v3298 = vpop.f32.mrb[0].mxu0
  %v3299 = vadd.f32 %v3043, %v3298
  %v3300 = vpop.f32.mrb[0].mxu0
  %v3301 = vadd.f32 %v3047, %v3300
  %3302 = vmatprep.mubr.bf16.mxu0 0
  %3303 = vmatmul.mubr.bf16.gmra.mrb[0].mxu0 %v3020
  %v3304 = vpop.f32.mrb[0].mxu0
  %v3305 = vadd.f32 %v3043, %v3304
  %v3306 = vpop.f32.mrb[0].mxu0
  %v3307 = vadd.f32 %v3047, %v3306
  %v3308 = vpop.f32.mrb[0].mxu0
  %v3309 = vadd.f32 %v3043, %v3308
  %v3310 = vpop.f32.mrb[0].mxu0
  %v3311 = vadd.f32 %v3047, %v3310
  %3312 = vmatprep.mubr.bf16.mxu0 0
  %3313 = vmatmul.mubr.bf16.gmra.mrb[0].mxu0 %v3021
  %v3314 = vpop.f32.mrb[0].mxu0
  %v3315 = vadd.f32 %v3043, %v3314
  %v3316 = vpop.f32.mrb[0].mxu0
  %v3317 = vadd.f32 %v3047, %v3316
  %v3318 = vpop.f32.mrb[0].mxu0
  %v3319 = vadd.f32 %v3043, %v3318
  %v3320 = vpop.f32.mrb[0].mxu0
  %v3321 = vadd.f32 %v3047, %v3320
  %3322 = vdwg.mxu0
  %v3323 = vpack.c.bf16 %v3169, %v3165
  %v3324 = vpack.c.bf16 %v3171, %v3167
  %v3325 = vpack.c.bf16 %v3179, %v3175
  %v3326 = vpack.c.bf16 %v3181, %v3177
  %v3327 = vpack.c.bf16 %v3189, %v3185
  %v3328 = vpack.c.bf16 %v3191, %v3187
  %v3329 = vpack.c.bf16 %v3199, %v3195
  %v3330 = vpack.c.bf16 %v3201, %v3197
  %v3331 = vpack.c.bf16 %v3209, %v3205
  %v3332 = vpack.c.bf16 %v3211, %v3207
  %v3333 = vpack.c.bf16 %v3219, %v3215
  %v3334 = vpack.c.bf16 %v3221, %v3217
  %v3335 = vpack.c.bf16 %v3229, %v3225
  %v3336 = vpack.c.bf16 %v3231, %v3227
  %v3337 = vpack.c.bf16 %v3239, %v3235
  %v3338 = vpack.c.bf16 %v3241, %v3237
  %v3339 = vpack.c.bf16 %v3249, %v3245
  %v3340 = vpack.c.bf16 %v3251, %v3247
  %v3341 = vpack.c.bf16 %v3259, %v3255
  %v3342 = vpack.c.bf16 %v3261, %v3257
  %v3343 = vpack.c.bf16 %v3269, %v3265
  %v3344 = vpack.c.bf16 %v3271, %v3267
  %v3345 = vpack.c.bf16 %v3279, %v3275
  %v3346 = vpack.c.bf16 %v3281, %v3277
  %v3347 = vpack.c.bf16 %v3289, %v3285
  %v3348 = vpack.c.bf16 %v3291, %v3287
  %v3349 = vpack.c.bf16 %v3299, %v3295
  %v3350 = vpack.c.bf16 %v3301, %v3297
  %v3351 = vpack.c.bf16 %v3309, %v3305
  %v3352 = vpack.c.bf16 %v3311, %v3307
  %v3353 = vpack.c.bf16 %v3319, %v3315
  %v3354 = vpack.c.bf16 %v3321, %v3317
  %v3355 = vmul.bf16 %v3353, %v1076
  %v3356 = vmul.bf16 %v3354, %v1076
  %v3357 = vmul.bf16 %v3323, %v1077
  %v3358 = vmul.bf16 %v3324, %v1077
  %v3359 = vmul.bf16 %v3325, %v1078
  %v3360 = vmul.bf16 %v3326, %v1078
  %v3361 = vmul.bf16 %v3327, %v1079
  %v3362 = vmul.bf16 %v3328, %v1079
  %v3363 = vmul.bf16 %v3329, %v1080
  %v3364 = vmul.bf16 %v3330, %v1080
  %v3365 = vmul.bf16 %v3331, %v1081
  %v3366 = vmul.bf16 %v3332, %v1081
  %v3367 = vmul.bf16 %v3333, %v1082
  %v3368 = vmul.bf16 %v3334, %v1082
  %v3369 = vmul.bf16 %v3335, %v1083
  %v3370 = vmul.bf16 %v3336, %v1083
  %v3371 = vmul.bf16 %v3337, %v1084
  %v3372 = vmul.bf16 %v3338, %v1084
  %v3373 = vmul.bf16 %v3339, %v1085
  %v3374 = vmul.bf16 %v3340, %v1085
  %v3375 = vmul.bf16 %v3341, %v1086
  %v3376 = vmul.bf16 %v3342, %v1086
  %v3377 = vmul.bf16 %v3343, %v1087
  %v3378 = vmul.bf16 %v3344, %v1087
  %v3379 = vmul.bf16 %v3345, %v1088
  %v3380 = vmul.bf16 %v3346, %v1088
  %v3381 = vmul.bf16 %v3347, %v1089
  %v3382 = vmul.bf16 %v3348, %v1089
  %v3383 = vmul.bf16 %v3349, %v1090
  %v3384 = vmul.bf16 %v3350, %v1090
  %v3385 = vmul.bf16 %v3351, %v1091
  %v3386 = vmul.bf16 %v3352, %v1091
  %v3387 = vmul.bf16 %v3325, %v1572
  %v3388 = vmul.bf16 %v3326, %v1572
  %v3389 = vmul.bf16 %v3327, %v1573
  %v3390 = vmul.bf16 %v3328, %v1573
  %v3391 = vmul.bf16 %v3329, %v1574
  %v3392 = vmul.bf16 %v3330, %v1574
  %v3393 = vmul.bf16 %v3331, %v1575
  %v3394 = vmul.bf16 %v3332, %v1575
  %v3395 = vmul.bf16 %v3333, %v1576
  %v3396 = vmul.bf16 %v3334, %v1576
  %v3397 = vmul.bf16 %v3335, %v1577
  %v3398 = vmul.bf16 %v3336, %v1577
  %v3399 = vmul.bf16 %v3337, %v1578
  %v3400 = vmul.bf16 %v3338, %v1578
  %v3401 = vmul.bf16 %v3339, %v1579
  %v3402 = vmul.bf16 %v3340, %v1579
  %v3403 = vmul.bf16 %v3341, %v1580
  %v3404 = vmul.bf16 %v3342, %v1580
  %v3405 = vmul.bf16 %v3343, %v1581
  %v3406 = vmul.bf16 %v3344, %v1581
  %v3407 = vmul.bf16 %v3345, %v1582
  %v3408 = vmul.bf16 %v3346, %v1582
  %v3409 = vmul.bf16 %v3347, %v1583
  %v3410 = vmul.bf16 %v3348, %v1583
  %v3411 = vmul.bf16 %v3349, %v1584
  %v3412 = vmul.bf16 %v3350, %v1584
  %v3413 = vmul.bf16 %v3351, %v1585
  %v3414 = vmul.bf16 %v3352, %v1585
  %v3415 = vmul.bf16 %v3353, %v1586
  %v3416 = vmul.bf16 %v3354, %v1586
  %v3417 = vmul.bf16 %v3323, %v1587
  %v3418 = vmul.bf16 %v3324, %v1587
  %v3419 = vld [vmem:[%s14] sm:$0xff]
  %v3420 = vld [vmem:[%s14 + $0x8] sm:$0xff]
  %v3421 = vld [vmem:[%s14 + $0x10] sm:$0xff]
  %v3422 = vld [vmem:[%s14 + $0x18] sm:$0xff]
  %v3423 = vld [vmem:[%s14 + $0x20] sm:$0xff]
  %v3424 = vld [vmem:[%s14 + $0x28] sm:$0xff]
  %v3425 = vld [vmem:[%s14 + $0x30] sm:$0xff]
  %v3426 = vld [vmem:[%s14 + $0x38] sm:$0xff]
  %v3427 = vld [vmem:[%s14 + $0x40] sm:$0xff]
  %v3428 = vld [vmem:[%s14 + $0x48] sm:$0xff]
  %v3429 = vld [vmem:[%s14 + $0x50] sm:$0xff]
  %v3430 = vld [vmem:[%s14 + $0x58] sm:$0xff]
  %v3431 = vld [vmem:[%s14 + $0x60] sm:$0xff]
  %v3432 = vld [vmem:[%s14 + $0x68] sm:$0xff]
  %v3433 = vld [vmem:[%s14 + $0x70] sm:$0xff]
  %v3434 = vld [vmem:[%s14 + $0x78] sm:$0xff]
  %v3435 = vld [vmem:[%s14 + $0x80] sm:$0xff]
  %v3436 = vld [vmem:[%s14 + $0x88] sm:$0xff]
  %v3437 = vld [vmem:[%s14 + $0x90] sm:$0xff]
  %v3438 = vld [vmem:[%s14 + $0x98] sm:$0xff]
  %v3439 = vld [vmem:[%s14 + $0xa0] sm:$0xff]
  %v3440 = vld [vmem:[%s14 + $0xa8] sm:$0xff]
  %v3441 = vld [vmem:[%s14 + $0xb0] sm:$0xff]
  %v3442 = vld [vmem:[%s14 + $0xb8] sm:$0xff]
  %v3443 = vld [vmem:[%s14 + $0xc0] sm:$0xff]
  %v3444 = vld [vmem:[%s14 + $0xc8] sm:$0xff]
  %v3445 = vld [vmem:[%s14 + $0xd0] sm:$0xff]
  %v3446 = vld [vmem:[%s14 + $0xd8] sm:$0xff]
  %v3447 = vld [vmem:[%s14 + $0xe0] sm:$0xff]
  %v3448 = vld [vmem:[%s14 + $0xe8] sm:$0xff]
  %v3449 = vld [vmem:[%s14 + $0xf0] sm:$0xff]
  %v3450 = vld [vmem:[%s14 + $0xf8] sm:$0xff]
  %v3451 = vld [vmem:[%s14 + $0x100] sm:$0xff]
  %v3452 = vld [vmem:[%s14 + $0x108] sm:$0xff]
  %v3453 = vld [vmem:[%s14 + $0x110] sm:$0xff]
  %v3454 = vld [vmem:[%s14 + $0x118] sm:$0xff]
  %v3455 = vld [vmem:[%s14 + $0x120] sm:$0xff]
  %v3456 = vld [vmem:[%s14 + $0x128] sm:$0xff]
  %v3457 = vld [vmem:[%s14 + $0x130] sm:$0xff]
  %v3458 = vld [vmem:[%s14 + $0x138] sm:$0xff]
  %v3459 = vld [vmem:[%s14 + $0x140] sm:$0xff]
  %v3460 = vld [vmem:[%s14 + $0x148] sm:$0xff]
  %v3461 = vld [vmem:[%s14 + $0x150] sm:$0xff]
  %v3462 = vld [vmem:[%s14 + $0x158] sm:$0xff]
  %v3463 = vld [vmem:[%s14 + $0x160] sm:$0xff]
  %v3464 = vld [vmem:[%s14 + $0x168] sm:$0xff]
  %v3465 = vld [vmem:[%s14 + $0x170] sm:$0xff]
  %v3466 = vld [vmem:[%s14 + $0x178] sm:$0xff]
  %v3467 = vld [vmem:[%s14 + $0x180] sm:$0xff]
  %v3468 = vld [vmem:[%s14 + $0x188] sm:$0xff]
  %v3469 = vld [vmem:[%s14 + $0x190] sm:$0xff]
  %v3470 = vld [vmem:[%s14 + $0x198] sm:$0xff]
  %v3471 = vld [vmem:[%s14 + $0x1a0] sm:$0xff]
  %v3472 = vld [vmem:[%s14 + $0x1a8] sm:$0xff]
  %v3473 = vld [vmem:[%s14 + $0x1b0] sm:$0xff]
  %v3474 = vld [vmem:[%s14 + $0x1b8] sm:$0xff]
  %v3475 = vld [vmem:[%s14 + $0x1c0] sm:$0xff]
  %v3476 = vld [vmem:[%s14 + $0x1c8] sm:$0xff]
  %v3477 = vld [vmem:[%s14 + $0x1d0] sm:$0xff]
  %v3478 = vld [vmem:[%s14 + $0x1d8] sm:$0xff]
  %v3479 = vld [vmem:[%s14 + $0x1e0] sm:$0xff]
  %v3480 = vld [vmem:[%s14 + $0x1e8] sm:$0xff]
  %v3481 = vld [vmem:[%s14 + $0x1f0] sm:$0xff]
  %v3482 = vld [vmem:[%s14 + $0x1f8] sm:$0xff]
  %v3483 = vld [vmem:[%s14 + $0x200] sm:$0xff]
  %v3484 = vld [vmem:[%s14 + $0x208] sm:$0xff]
  %v3485 = vld [vmem:[%s14 + $0x210] sm:$0xff]
  %v3486 = vld [vmem:[%s14 + $0x218] sm:$0xff]
  %v3487 = vld [vmem:[%s14 + $0x220] sm:$0xff]
  %v3488 = vld [vmem:[%s14 + $0x228] sm:$0xff]
  %v3489 = vld [vmem:[%s14 + $0x230] sm:$0xff]
  %v3490 = vld [vmem:[%s14 + $0x238] sm:$0xff]
  %v3491 = vld [vmem:[%s14 + $0x240] sm:$0xff]
  %v3492 = vld [vmem:[%s14 + $0x248] sm:$0xff]
  %v3493 = vld [vmem:[%s14 + $0x250] sm:$0xff]
  %v3494 = vld [vmem:[%s14 + $0x258] sm:$0xff]
  %v3495 = vld [vmem:[%s14 + $0x260] sm:$0xff]
  %v3496 = vld [vmem:[%s14 + $0x268] sm:$0xff]
  %v3497 = vld [vmem:[%s14 + $0x270] sm:$0xff]
  %v3498 = vld [vmem:[%s14 + $0x278] sm:$0xff]
  %v3499 = vld [vmem:[%s14 + $0x280] sm:$0xff]
  %v3500 = vld [vmem:[%s14 + $0x288] sm:$0xff]
  %v3501 = vld [vmem:[%s14 + $0x290] sm:$0xff]
  %v3502 = vld [vmem:[%s14 + $0x298] sm:$0xff]
  %v3503 = vld [vmem:[%s14 + $0x2a0] sm:$0xff]
  %v3504 = vld [vmem:[%s14 + $0x2a8] sm:$0xff]
  %v3505 = vld [vmem:[%s14 + $0x2b0] sm:$0xff]
  %v3506 = vld [vmem:[%s14 + $0x2b8] sm:$0xff]
  %v3507 = vld [vmem:[%s14 + $0x2c0] sm:$0xff]
  %v3508 = vld [vmem:[%s14 + $0x2c8] sm:$0xff]
  %v3509 = vld [vmem:[%s14 + $0x2d0] sm:$0xff]
  %v3510 = vld [vmem:[%s14 + $0x2d8] sm:$0xff]
  %v3511 = vld [vmem:[%s14 + $0x2e0] sm:$0xff]
  %v3512 = vld [vmem:[%s14 + $0x2e8] sm:$0xff]
  %v3513 = vld [vmem:[%s14 + $0x2f0] sm:$0xff]
  %v3514 = vld [vmem:[%s14 + $0x2f8] sm:$0xff]
  %v3515 = vld [vmem:[%s15] sm:$0x3]
  %v3517 = vlaneseq
  %v3518 = vshrl.u32 %v3517, 7
  %v3519 = vsub.s32 0, %v3518
  %v3520 = vrot.slane %v3515, %v3519
  %v3521 = vlaneseq
  %v3522 = vshrl.u32 %v3521, 7
  %v3523 = vsub.s32 1, %v3522
  %v3524 = vrot.slane %v3515, %v3523
  %v3623 = vunpack.c.l.b16 %v3419
  %v3624 = vunpack.c.h.b16 %v3419
  %v3625 = vunpack.c.l.b16 %v3420
  %v3626 = vunpack.c.h.b16 %v3420
  %v3627 = vunpack.c.l.b16 %v3421
  %v3628 = vunpack.c.h.b16 %v3421
  %v3629 = vunpack.c.l.b16 %v3422
  %v3630 = vunpack.c.h.b16 %v3422
  %v3631 = vunpack.c.l.b16 %v3423
  %v3632 = vunpack.c.h.b16 %v3423
  %v3633 = vunpack.c.l.b16 %v3424
  %v3634 = vunpack.c.h.b16 %v3424
  %v3635 = vunpack.c.l.b16 %v3425
  %v3636 = vunpack.c.h.b16 %v3425
  %v3637 = vunpack.c.l.b16 %v3426
  %v3638 = vunpack.c.h.b16 %v3426
  %v3639 = vunpack.c.l.b16 %v3427
  %v3640 = vunpack.c.h.b16 %v3427
  %v3641 = vunpack.c.l.b16 %v3428
  %v3642 = vunpack.c.h.b16 %v3428
  %v3643 = vunpack.c.l.b16 %v3429
  %v3644 = vunpack.c.h.b16 %v3429
  %v3645 = vunpack.c.l.b16 %v3430
  %v3646 = vunpack.c.h.b16 %v3430
  %v3647 = vunpack.c.l.b16 %v3431
  %v3648 = vunpack.c.h.b16 %v3431
  %v3649 = vunpack.c.l.b16 %v3432
  %v3650 = vunpack.c.h.b16 %v3432
  %v3651 = vunpack.c.l.b16 %v3433
  %v3652 = vunpack.c.h.b16 %v3433
  %v3653 = vunpack.c.l.b16 %v3434
  %v3654 = vunpack.c.h.b16 %v3434
  %v3655 = vunpack.c.l.b16 %v3435
  %v3656 = vunpack.c.h.b16 %v3435
  %v3657 = vunpack.c.l.b16 %v3436
  %v3658 = vunpack.c.h.b16 %v3436
  %v3659 = vunpack.c.l.b16 %v3437
  %v3660 = vunpack.c.h.b16 %v3437
  %v3661 = vunpack.c.l.b16 %v3438
  %v3662 = vunpack.c.h.b16 %v3438
  %v3663 = vunpack.c.l.b16 %v3439
  %v3664 = vunpack.c.h.b16 %v3439
  %v3665 = vunpack.c.l.b16 %v3440
  %v3666 = vunpack.c.h.b16 %v3440
  %v3667 = vunpack.c.l.b16 %v3441
  %v3668 = vunpack.c.h.b16 %v3441
  %v3669 = vunpack.c.l.b16 %v3442
  %v3670 = vunpack.c.h.b16 %v3442
  %v3671 = vunpack.c.l.b16 %v3443
  %v3672 = vunpack.c.h.b16 %v3443
  %v3673 = vunpack.c.l.b16 %v3444
  %v3674 = vunpack.c.h.b16 %v3444
  %v3675 = vunpack.c.l.b16 %v3445
  %v3676 = vunpack.c.h.b16 %v3445
  %v3677 = vunpack.c.l.b16 %v3446
  %v3678 = vunpack.c.h.b16 %v3446
  %v3679 = vunpack.c.l.b16 %v3447
  %v3680 = vunpack.c.h.b16 %v3447
  %v3681 = vunpack.c.l.b16 %v3448
  %v3682 = vunpack.c.h.b16 %v3448
  %v3683 = vunpack.c.l.b16 %v3449
  %v3684 = vunpack.c.h.b16 %v3449
  %v3685 = vunpack.c.l.b16 %v3450
  %v3686 = vunpack.c.h.b16 %v3450
  %v3687 = vunpack.c.l.b16 %v3451
  %v3688 = vunpack.c.h.b16 %v3451
  %v3689 = vunpack.c.l.b16 %v3452
  %v3690 = vunpack.c.h.b16 %v3452
  %v3691 = vunpack.c.l.b16 %v3453
  %v3692 = vunpack.c.h.b16 %v3453
  %v3693 = vunpack.c.l.b16 %v3454
  %v3694 = vunpack.c.h.b16 %v3454
  %v3695 = vunpack.c.l.b16 %v3455
  %v3696 = vunpack.c.h.b16 %v3455
  %v3697 = vunpack.c.l.b16 %v3456
  %v3698 = vunpack.c.h.b16 %v3456
  %v3699 = vunpack.c.l.b16 %v3457
  %v3700 = vunpack.c.h.b16 %v3457
  %v3701 = vunpack.c.l.b16 %v3458
  %v3702 = vunpack.c.h.b16 %v3458
  %v3703 = vunpack.c.l.b16 %v3459
  %v3704 = vunpack.c.h.b16 %v3459
  %v3705 = vunpack.c.l.b16 %v3460
  %v3706 = vunpack.c.h.b16 %v3460
  %v3707 = vunpack.c.l.b16 %v3461
  %v3708 = vunpack.c.h.b16 %v3461
  %v3709 = vunpack.c.l.b16 %v3462
  %v3710 = vunpack.c.h.b16 %v3462
  %v3711 = vunpack.c.l.b16 %v3463
  %v3712 = vunpack.c.h.b16 %v3463
  %v3713 = vunpack.c.l.b16 %v3464
  %v3714 = vunpack.c.h.b16 %v3464
  %v3715 = vunpack.c.l.b16 %v3465
  %v3716 = vunpack.c.h.b16 %v3465
  %v3717 = vunpack.c.l.b16 %v3466
  %v3718 = vunpack.c.h.b16 %v3466
  %v3719 = vunpack.c.l.b16 %v3467
  %v3720 = vunpack.c.h.b16 %v3467
  %v3721 = vunpack.c.l.b16 %v3468
  %v3722 = vunpack.c.h.b16 %v3468
  %v3723 = vunpack.c.l.b16 %v3469
  %v3724 = vunpack.c.h.b16 %v3469
  %v3725 = vunpack.c.l.b16 %v3470
  %v3726 = vunpack.c.h.b16 %v3470
  %v3727 = vunpack.c.l.b16 %v3471
  %v3728 = vunpack.c.h.b16 %v3471
  %v3729 = vunpack.c.l.b16 %v3472
  %v3730 = vunpack.c.h.b16 %v3472
  %v3731 = vunpack.c.l.b16 %v3473
  %v3732 = vunpack.c.h.b16 %v3473
  %v3733 = vunpack.c.l.b16 %v3474
  %v3734 = vunpack.c.h.b16 %v3474
  %v3735 = vunpack.c.l.b16 %v3475
  %v3736 = vunpack.c.h.b16 %v3475
  %v3737 = vunpack.c.l.b16 %v3476
  %v3738 = vunpack.c.h.b16 %v3476
  %v3739 = vunpack.c.l.b16 %v3477
  %v3740 = vunpack.c.h.b16 %v3477
  %v3741 = vunpack.c.l.b16 %v3478
  %v3742 = vunpack.c.h.b16 %v3478
  %v3743 = vunpack.c.l.b16 %v3479
  %v3744 = vunpack.c.h.b16 %v3479
  %v3745 = vunpack.c.l.b16 %v3480
  %v3746 = vunpack.c.h.b16 %v3480
  %v3747 = vunpack.c.l.b16 %v3481
  %v3748 = vunpack.c.h.b16 %v3481
  %v3749 = vunpack.c.l.b16 %v3482
  %v3750 = vunpack.c.h.b16 %v3482
  %v3751 = vunpack.c.l.b16 %v3483
  %v3752 = vunpack.c.h.b16 %v3483
  %v3753 = vunpack.c.l.b16 %v3484
  %v3754 = vunpack.c.h.b16 %v3484
  %v3755 = vunpack.c.l.b16 %v3485
  %v3756 = vunpack.c.h.b16 %v3485
  %v3757 = vunpack.c.l.b16 %v3486
  %v3758 = vunpack.c.h.b16 %v3486
  %v3759 = vunpack.c.l.b16 %v3487
  %v3760 = vunpack.c.h.b16 %v3487
  %v3761 = vunpack.c.l.b16 %v3488
  %v3762 = vunpack.c.h.b16 %v3488
  %v3763 = vunpack.c.l.b16 %v3489
  %v3764 = vunpack.c.h.b16 %v3489
  %v3765 = vunpack.c.l.b16 %v3490
  %v3766 = vunpack.c.h.b16 %v3490
  %v3767 = vunpack.c.l.b16 %v3491
  %v3768 = vunpack.c.h.b16 %v3491
  %v3769 = vunpack.c.l.b16 %v3492
  %v3770 = vunpack.c.h.b16 %v3492
  %v3771 = vunpack.c.l.b16 %v3493
  %v3772 = vunpack.c.h.b16 %v3493
  %v3773 = vunpack.c.l.b16 %v3494
  %v3774 = vunpack.c.h.b16 %v3494
  %v3775 = vunpack.c.l.b16 %v3495
  %v3776 = vunpack.c.h.b16 %v3495
  %v3777 = vunpack.c.l.b16 %v3496
  %v3778 = vunpack.c.h.b16 %v3496
  %v3779 = vunpack.c.l.b16 %v3497
  %v3780 = vunpack.c.h.b16 %v3497
  %v3781 = vunpack.c.l.b16 %v3498
  %v3782 = vunpack.c.h.b16 %v3498
  %v3783 = vunpack.c.l.b16 %v3499
  %v3784 = vunpack.c.h.b16 %v3499
  %v3785 = vunpack.c.l.b16 %v3500
  %v3786 = vunpack.c.h.b16 %v3500
  %v3787 = vunpack.c.l.b16 %v3501
  %v3788 = vunpack.c.h.b16 %v3501
  %v3789 = vunpack.c.l.b16 %v3502
  %v3790 = vunpack.c.h.b16 %v3502
  %v3791 = vunpack.c.l.b16 %v3503
  %v3792 = vunpack.c.h.b16 %v3503
  %v3793 = vunpack.c.l.b16 %v3504
  %v3794 = vunpack.c.h.b16 %v3504
  %v3795 = vunpack.c.l.b16 %v3505
  %v3796 = vunpack.c.h.b16 %v3505
  %v3797 = vunpack.c.l.b16 %v3506
  %v3798 = vunpack.c.h.b16 %v3506
  %v3799 = vunpack.c.l.b16 %v3507
  %v3800 = vunpack.c.h.b16 %v3507
  %v3801 = vunpack.c.l.b16 %v3508
  %v3802 = vunpack.c.h.b16 %v3508
  %v3803 = vunpack.c.l.b16 %v3509
  %v3804 = vunpack.c.h.b16 %v3509
  %v3805 = vunpack.c.l.b16 %v3510
  %v3806 = vunpack.c.h.b16 %v3510
  %v3807 = vunpack.c.l.b16 %v3511
  %v3808 = vunpack.c.h.b16 %v3511
  %v3809 = vunpack.c.l.b16 %v3512
  %v3810 = vunpack.c.h.b16 %v3512
  %v3811 = vunpack.c.l.b16 %v3513
  %v3812 = vunpack.c.h.b16 %v3513
  %v3813 = vunpack.c.l.b16 %v3514
  %v3814 = vunpack.c.h.b16 %v3514
  %v3815 = vpack.c.b16 %v3625, %v3623
  %v3816 = vpack.c.b16 %v3626, %v3624
  %v3817 = vpack.c.b16 %v3629, %v3627
  %v3818 = vpack.c.b16 %v3630, %v3628
  %v3819 = vpack.c.b16 %v3633, %v3631
  %v3820 = vpack.c.b16 %v3634, %v3632
  %v3821 = vpack.c.b16 %v3637, %v3635
  %v3822 = vpack.c.b16 %v3638, %v3636
  %v3823 = vpack.c.b16 %v3641, %v3639
  %v3824 = vpack.c.b16 %v3642, %v3640
  %v3825 = vpack.c.b16 %v3645, %v3643
  %v3826 = vpack.c.b16 %v3646, %v3644
  %v3827 = vpack.c.b16 %v3649, %v3647
  %v3828 = vpack.c.b16 %v3650, %v3648
  %v3829 = vpack.c.b16 %v3653, %v3651
  %v3830 = vpack.c.b16 %v3654, %v3652
  %v3831 = vpack.c.b16 %v3657, %v3655
  %v3832 = vpack.c.b16 %v3658, %v3656
  %v3833 = vpack.c.b16 %v3661, %v3659
  %v3834 = vpack.c.b16 %v3662, %v3660
  %v3835 = vpack.c.b16 %v3665, %v3663
  %v3836 = vpack.c.b16 %v3666, %v3664
  %v3837 = vpack.c.b16 %v3669, %v3667
  %v3838 = vpack.c.b16 %v3670, %v3668
  %v3839 = vpack.c.b16 %v3673, %v3671
  %v3840 = vpack.c.b16 %v3674, %v3672
  %v3841 = vpack.c.b16 %v3677, %v3675
  %v3842 = vpack.c.b16 %v3678, %v3676
  %v3843 = vpack.c.b16 %v3681, %v3679
  %v3844 = vpack.c.b16 %v3682, %v3680
  %v3845 = vpack.c.b16 %v3685, %v3683
  %v3846 = vpack.c.b16 %v3686, %v3684
  %v3847 = vpack.c.b16 %v3689, %v3687
  %v3848 = vpack.c.b16 %v3690, %v3688
  %v3849 = vpack.c.b16 %v3693, %v3691
  %v3850 = vpack.c.b16 %v3694, %v3692
  %v3851 = vpack.c.b16 %v3697, %v3695
  %v3852 = vpack.c.b16 %v3698, %v3696
  %v3853 = vpack.c.b16 %v3701, %v3699
  %v3854 = vpack.c.b16 %v3702, %v3700
  %v3855 = vpack.c.b16 %v3705, %v3703
  %v3856 = vpack.c.b16 %v3706, %v3704
  %v3857 = vpack.c.b16 %v3709, %v3707
  %v3858 = vpack.c.b16 %v3710, %v3708
  %v3859 = vpack.c.b16 %v3713, %v3711
  %v3860 = vpack.c.b16 %v3714, %v3712
  %v3861 = vpack.c.b16 %v3717, %v3715
  %v3862 = vpack.c.b16 %v3718, %v3716
  %v3863 = vpack.c.b16 %v3721, %v3719
  %v3864 = vpack.c.b16 %v3722, %v3720
  %v3865 = vpack.c.b16 %v3725, %v3723
  %v3866 = vpack.c.b16 %v3726, %v3724
  %v3867 = vpack.c.b16 %v3729, %v3727
  %v3868 = vpack.c.b16 %v3730, %v3728
  %v3869 = vpack.c.b16 %v3733, %v3731
  %v3870 = vpack.c.b16 %v3734, %v3732
  %v3871 = vpack.c.b16 %v3737, %v3735
  %v3872 = vpack.c.b16 %v3738, %v3736
  %v3873 = vpack.c.b16 %v3741, %v3739
  %v3874 = vpack.c.b16 %v3742, %v3740
  %v3875 = vpack.c.b16 %v3745, %v3743
  %v3876 = vpack.c.b16 %v3746, %v3744
  %v3877 = vpack.c.b16 %v3749, %v3747
  %v3878 = vpack.c.b16 %v3750, %v3748
  %v3879 = vpack.c.b16 %v3753, %v3751
  %v3880 = vpack.c.b16 %v3754, %v3752
  %v3881 = vpack.c.b16 %v3757, %v3755
  %v3882 = vpack.c.b16 %v3758, %v3756
  %v3883 = vpack.c.b16 %v3761, %v3759
  %v3884 = vpack.c.b16 %v3762, %v3760
  %v3885 = vpack.c.b16 %v3765, %v3763
  %v3886 = vpack.c.b16 %v3766, %v3764
  %v3887 = vpack.c.b16 %v3769, %v3767
  %v3888 = vpack.c.b16 %v3770, %v3768
  %v3889 = vpack.c.b16 %v3773, %v3771
  %v3890 = vpack.c.b16 %v3774, %v3772
  %v3891 = vpack.c.b16 %v3777, %v3775
  %v3892 = vpack.c.b16 %v3778, %v3776
  %v3893 = vpack.c.b16 %v3781, %v3779
  %v3894 = vpack.c.b16 %v3782, %v3780
  %v3895 = vpack.c.b16 %v3785, %v3783
  %v3896 = vpack.c.b16 %v3786, %v3784
  %v3897 = vpack.c.b16 %v3789, %v3787
  %v3898 = vpack.c.b16 %v3790, %v3788
  %v3899 = vpack.c.b16 %v3793, %v3791
  %v3900 = vpack.c.b16 %v3794, %v3792
  %v3901 = vpack.c.b16 %v3797, %v3795
  %v3902 = vpack.c.b16 %v3798, %v3796
  %v3903 = vpack.c.b16 %v3801, %v3799
  %v3904 = vpack.c.b16 %v3802, %v3800
  %v3905 = vpack.c.b16 %v3805, %v3803
  %v3906 = vpack.c.b16 %v3806, %v3804
  %v3907 = vpack.c.b16 %v3809, %v3807
  %v3908 = vpack.c.b16 %v3810, %v3808
  %v3909 = vpack.c.b16 %v3813, %v3811
  %v3910 = vpack.c.b16 %v3814, %v3812
  %4007 = vmatprep.subr.bf16.mxu0 %v3816
  %4008 = vmatpush1.bf16.msra.mxu0 %v3815
  %4009 = vmatprep.subr.bf16.mxu0 %v3818
  %4010 = vmatpush1.bf16.msra.mxu0 %v3817
  %4011 = vmatprep.subr.bf16.mxu0 %v3820
  %4012 = vmatpush1.bf16.msra.mxu0 %v3819
  %4013 = vmatprep.subr.bf16.mxu0 %v3822
  %4014 = vmatpush1.bf16.msra.mxu0 %v3821
  %4015 = vmatprep.subr.bf16.mxu0 %v3824
  %4016 = vmatpush1.bf16.msra.mxu0 %v3823
  %4017 = vmatprep.subr.bf16.mxu0 %v3826
  %4018 = vmatpush1.bf16.msra.mxu0 %v3825
  %4019 = vmatprep.subr.bf16.mxu0 %v3828
  %4020 = vmatpush1.bf16.msra.mxu0 %v3827
  %4021 = vmatprep.subr.bf16.mxu0 %v3830
  %4022 = vmatpush1.bf16.msra.mxu0 %v3829
  %4023 = vmatprep.subr.bf16.mxu0 %v3832
  %4024 = vmatpush1.bf16.msra.mxu0 %v3831
  %4025 = vmatprep.subr.bf16.mxu0 %v3834
  %4026 = vmatpush1.bf16.msra.mxu0 %v3833
  %4027 = vmatprep.subr.bf16.mxu0 %v3836
  %4028 = vmatpush1.bf16.msra.mxu0 %v3835
  %4029 = vmatprep.subr.bf16.mxu0 %v3838
  %4030 = vmatpush1.bf16.msra.mxu0 %v3837
  %4031 = vmatprep.subr.bf16.mxu0 %v3840
  %4032 = vmatpush1.bf16.msra.mxu0 %v3839
  %4033 = vmatprep.subr.bf16.mxu0 %v3842
  %4034 = vmatpush1.bf16.msra.mxu0 %v3841
  %4035 = vmatprep.subr.bf16.mxu0 %v3844
  %4036 = vmatpush1.bf16.msra.mxu0 %v3843
  %4037 = vmatprep.subr.bf16.mxu0 %v3846
  %4038 = vmatpush1.bf16.msra.mxu0 %v3845
  %4039 = vmatprep.mubr.bf16.mxu0 %v3356
  %4040 = vmatmul.mubr.bf16.gmra.mrb[0].mxu0 %v3355
  %v4041 = vpop.f32.mrb[0].mxu0
  %v4042 = vadd.f32 %v3520, %v4041
  %v4043 = vpop.f32.mrb[0].mxu0
  %v4044 = vadd.f32 %v3524, %v4043
  %v4045 = vpop.f32.mrb[0].mxu0
  %v4046 = vadd.f32 %v3520, %v4045
  %v4047 = vpop.f32.mrb[0].mxu0
  %v4048 = vadd.f32 %v3524, %v4047
  %4049 = vmatprep.mubr.bf16.mxu0 %v3358
  %4050 = vmatmul.mubr.bf16.gmra.mrb[0].mxu0 %v3357
  %v4051 = vpop.f32.mrb[0].mxu0
  %v4052 = vadd.f32 %v3520, %v4051
  %v4053 = vpop.f32.mrb[0].mxu0
  %v4054 = vadd.f32 %v3524, %v4053
  %v4055 = vpop.f32.mrb[0].mxu0
  %v4056 = vadd.f32 %v3520, %v4055
  %v4057 = vpop.f32.mrb[0].mxu0
  %v4058 = vadd.f32 %v3524, %v4057
  %4059 = vmatprep.mubr.bf16.mxu0 %v3360
  %4060 = vmatmul.mubr.bf16.gmra.mrb[0].mxu0 %v3359
  %v4061 = vpop.f32.mrb[0].mxu0
  %v4062 = vadd.f32 %v3520, %v4061
  %v4063 = vpop.f32.mrb[0].mxu0
  %v4064 = vadd.f32 %v3524, %v4063
  %v4065 = vpop.f32.mrb[0].mxu0
  %v4066 = vadd.f32 %v3520, %v4065
  %v4067 = vpop.f32.mrb[0].mxu0
  %v4068 = vadd.f32 %v3524, %v4067
  %4069 = vmatprep.mubr.bf16.mxu0 %v3362
  %4070 = vmatmul.mubr.bf16.gmra.mrb[0].mxu0 %v3361
  %v4071 = vpop.f32.mrb[0].mxu0
  %v4072 = vadd.f32 %v3520, %v4071
  %v4073 = vpop.f32.mrb[0].mxu0
  %v4074 = vadd.f32 %v3524, %v4073
  %v4075 = vpop.f32.mrb[0].mxu0
  %v4076 = vadd.f32 %v3520, %v4075
  %v4077 = vpop.f32.mrb[0].mxu0
  %v4078 = vadd.f32 %v3524, %v4077
  %4079 = vmatprep.mubr.bf16.mxu0 %v3364
  %4080 = vmatmul.mubr.bf16.gmra.mrb[0].mxu0 %v3363
  %v4081 = vpop.f32.mrb[0].mxu0
  %v4082 = vadd.f32 %v3520, %v4081
  %v4083 = vpop.f32.mrb[0].mxu0
  %v4084 = vadd.f32 %v3524, %v4083
  %v4085 = vpop.f32.mrb[0].mxu0
  %v4086 = vadd.f32 %v3520, %v4085
  %v4087 = vpop.f32.mrb[0].mxu0
  %v4088 = vadd.f32 %v3524, %v4087
  %4089 = vmatprep.mubr.bf16.mxu0 %v3366
  %4090 = vmatmul.mubr.bf16.gmra.mrb[0].mxu0 %v3365
  %v4091 = vpop.f32.mrb[0].mxu0
  %v4092 = vadd.f32 %v3520, %v4091
  %v4093 = vpop.f32.mrb[0].mxu0
  %v4094 = vadd.f32 %v3524, %v4093
  %v4095 = vpop.f32.mrb[0].mxu0
  %v4096 = vadd.f32 %v3520, %v4095
  %v4097 = vpop.f32.mrb[0].mxu0
  %v4098 = vadd.f32 %v3524, %v4097
  %4099 = vmatprep.mubr.bf16.mxu0 %v3368
  %4100 = vmatmul.mubr.bf16.gmra.mrb[0].mxu0 %v3367
  %v4101 = vpop.f32.mrb[0].mxu0
  %v4102 = vadd.f32 %v3520, %v4101
  %v4103 = vpop.f32.mrb[0].mxu0
  %v4104 = vadd.f32 %v3524, %v4103
  %v4105 = vpop.f32.mrb[0].mxu0
  %v4106 = vadd.f32 %v3520, %v4105
  %v4107 = vpop.f32.mrb[0].mxu0
  %v4108 = vadd.f32 %v3524, %v4107
  %4109 = vmatprep.mubr.bf16.mxu0 %v3370
  %4110 = vmatmul.mubr.bf16.gmra.mrb[0].mxu0 %v3369
  %v4111 = vpop.f32.mrb[0].mxu0
  %v4112 = vadd.f32 %v3520, %v4111
  %v4113 = vpop.f32.mrb[0].mxu0
  %v4114 = vadd.f32 %v3524, %v4113
  %v4115 = vpop.f32.mrb[0].mxu0
  %v4116 = vadd.f32 %v3520, %v4115
  %v4117 = vpop.f32.mrb[0].mxu0
  %v4118 = vadd.f32 %v3524, %v4117
  %4119 = vmatprep.mubr.bf16.mxu0 %v3372
  %4120 = vmatmul.mubr.bf16.gmra.mrb[0].mxu0 %v3371
  %v4121 = vpop.f32.mrb[0].mxu0
  %v4122 = vadd.f32 %v3520, %v4121
  %v4123 = vpop.f32.mrb[0].mxu0
  %v4124 = vadd.f32 %v3524, %v4123
  %v4125 = vpop.f32.mrb[0].mxu0
  %v4126 = vadd.f32 %v3520, %v4125
  %v4127 = vpop.f32.mrb[0].mxu0
  %v4128 = vadd.f32 %v3524, %v4127
  %4129 = vmatprep.mubr.bf16.mxu0 %v3374
  %4130 = vmatmul.mubr.bf16.gmra.mrb[0].mxu0 %v3373
  %v4131 = vpop.f32.mrb[0].mxu0
  %v4132 = vadd.f32 %v3520, %v4131
  %v4133 = vpop.f32.mrb[0].mxu0
  %v4134 = vadd.f32 %v3524, %v4133
  %v4135 = vpop.f32.mrb[0].mxu0
  %v4136 = vadd.f32 %v3520, %v4135
  %v4137 = vpop.f32.mrb[0].mxu0
  %v4138 = vadd.f32 %v3524, %v4137
  %4139 = vmatprep.mubr.bf16.mxu0 %v3376
  %4140 = vmatmul.mubr.bf16.gmra.mrb[0].mxu0 %v3375
  %v4141 = vpop.f32.mrb[0].mxu0
  %v4142 = vadd.f32 %v3520, %v4141
  %v4143 = vpop.f32.mrb[0].mxu0
  %v4144 = vadd.f32 %v3524, %v4143
  %v4145 = vpop.f32.mrb[0].mxu0
  %v4146 = vadd.f32 %v3520, %v4145
  %v4147 = vpop.f32.mrb[0].mxu0
  %v4148 = vadd.f32 %v3524, %v4147
  %4149 = vmatprep.mubr.bf16.mxu0 %v3378
  %4150 = vmatmul.mubr.bf16.gmra.mrb[0].mxu0 %v3377
  %v4151 = vpop.f32.mrb[0].mxu0
  %v4152 = vadd.f32 %v3520, %v4151
  %v4153 = vpop.f32.mrb[0].mxu0
  %v4154 = vadd.f32 %v3524, %v4153
  %v4155 = vpop.f32.mrb[0].mxu0
  %v4156 = vadd.f32 %v3520, %v4155
  %v4157 = vpop.f32.mrb[0].mxu0
  %v4158 = vadd.f32 %v3524, %v4157
  %4159 = vmatprep.mubr.bf16.mxu0 %v3380
  %4160 = vmatmul.mubr.bf16.gmra.mrb[0].mxu0 %v3379
  %v4161 = vpop.f32.mrb[0].mxu0
  %v4162 = vadd.f32 %v3520, %v4161
  %v4163 = vpop.f32.mrb[0].mxu0
  %v4164 = vadd.f32 %v3524, %v4163
  %v4165 = vpop.f32.mrb[0].mxu0
  %v4166 = vadd.f32 %v3520, %v4165
  %v4167 = vpop.f32.mrb[0].mxu0
  %v4168 = vadd.f32 %v3524, %v4167
  %4169 = vmatprep.mubr.bf16.mxu0 %v3382
  %4170 = vmatmul.mubr.bf16.gmra.mrb[0].mxu0 %v3381
  %v4171 = vpop.f32.mrb[0].mxu0
  %v4172 = vadd.f32 %v3520, %v4171
  %v4173 = vpop.f32.mrb[0].mxu0
  %v4174 = vadd.f32 %v3524, %v4173
  %v4175 = vpop.f32.mrb[0].mxu0
  %v4176 = vadd.f32 %v3520, %v4175
  %v4177 = vpop.f32.mrb[0].mxu0
  %v4178 = vadd.f32 %v3524, %v4177
  %4179 = vmatprep.mubr.bf16.mxu0 %v3384
  %4180 = vmatmul.mubr.bf16.gmra.mrb[0].mxu0 %v3383
  %v4181 = vpop.f32.mrb[0].mxu0
  %v4182 = vadd.f32 %v3520, %v4181
  %v4183 = vpop.f32.mrb[0].mxu0
  %v4184 = vadd.f32 %v3524, %v4183
  %v4185 = vpop.f32.mrb[0].mxu0
  %v4186 = vadd.f32 %v3520, %v4185
  %v4187 = vpop.f32.mrb[0].mxu0
  %v4188 = vadd.f32 %v3524, %v4187
  %4189 = vmatprep.mubr.bf16.mxu0 %v3386
  %4190 = vmatmul.mubr.bf16.gmra.mrb[0].mxu0 %v3385
  %v4191 = vpop.f32.mrb[0].mxu0
  %v4192 = vadd.f32 %v3520, %v4191
  %v4193 = vpop.f32.mrb[0].mxu0
  %v4194 = vadd.f32 %v3524, %v4193
  %v4195 = vpop.f32.mrb[0].mxu0
  %v4196 = vadd.f32 %v3520, %v4195
  %v4197 = vpop.f32.mrb[0].mxu0
  %v4198 = vadd.f32 %v3524, %v4197
  %4199 = vdwg.mxu0
  %4200 = vmatprep.subr.bf16.mxu0 %v3848
  %4201 = vmatpush1.bf16.msra.mxu0 %v3847
  %4202 = vmatprep.subr.bf16.mxu0 %v3850
  %4203 = vmatpush1.bf16.msra.mxu0 %v3849
  %4204 = vmatprep.subr.bf16.mxu0 %v3852
  %4205 = vmatpush1.bf16.msra.mxu0 %v3851
  %4206 = vmatprep.subr.bf16.mxu0 %v3854
  %4207 = vmatpush1.bf16.msra.mxu0 %v3853
  %4208 = vmatprep.subr.bf16.mxu0 %v3856
  %4209 = vmatpush1.bf16.msra.mxu0 %v3855
  %4210 = vmatprep.subr.bf16.mxu0 %v3858
  %4211 = vmatpush1.bf16.msra.mxu0 %v3857
  %4212 = vmatprep.subr.bf16.mxu0 %v3860
  %4213 = vmatpush1.bf16.msra.mxu0 %v3859
  %4214 = vmatprep.subr.bf16.mxu0 %v3862
  %4215 = vmatpush1.bf16.msra.mxu0 %v3861
  %4216 = vmatprep.subr.bf16.mxu0 %v3864
  %4217 = vmatpush1.bf16.msra.mxu0 %v3863
  %4218 = vmatprep.subr.bf16.mxu0 %v3866
  %4219 = vmatpush1.bf16.msra.mxu0 %v3865
  %4220 = vmatprep.subr.bf16.mxu0 %v3868
  %4221 = vmatpush1.bf16.msra.mxu0 %v3867
  %4222 = vmatprep.subr.bf16.mxu0 %v3870
  %4223 = vmatpush1.bf16.msra.mxu0 %v3869
  %4224 = vmatprep.subr.bf16.mxu0 %v3872
  %4225 = vmatpush1.bf16.msra.mxu0 %v3871
  %4226 = vmatprep.subr.bf16.mxu0 %v3874
  %4227 = vmatpush1.bf16.msra.mxu0 %v3873
  %4228 = vmatprep.subr.bf16.mxu0 %v3876
  %4229 = vmatpush1.bf16.msra.mxu0 %v3875
  %4230 = vmatprep.subr.bf16.mxu0 %v3878
  %4231 = vmatpush1.bf16.msra.mxu0 %v3877
  %4232 = vmatprep.mubr.bf16.mxu0 %v3324
  %4233 = vmatmul.mubr.bf16.gmra.mrb[0].mxu0 %v3323
  %v4234 = vpop.f32.mrb[0].mxu0
  %v4235 = vadd.f32 %v4042, %v4234
  %v4236 = vpop.f32.mrb[0].mxu0
  %v4237 = vadd.f32 %v4044, %v4236
  %v4238 = vpop.f32.mrb[0].mxu0
  %v4239 = vadd.f32 %v4046, %v4238
  %v4240 = vpop.f32.mrb[0].mxu0
  %v4241 = vadd.f32 %v4048, %v4240
  %4242 = vmatprep.mubr.bf16.mxu0 %v3326
  %4243 = vmatmul.mubr.bf16.gmra.mrb[0].mxu0 %v3325
  %v4244 = vpop.f32.mrb[0].mxu0
  %v4245 = vadd.f32 %v4052, %v4244
  %v4246 = vpop.f32.mrb[0].mxu0
  %v4247 = vadd.f32 %v4054, %v4246
  %v4248 = vpop.f32.mrb[0].mxu0
  %v4249 = vadd.f32 %v4056, %v4248
  %v4250 = vpop.f32.mrb[0].mxu0
  %v4251 = vadd.f32 %v4058, %v4250
  %4252 = vmatprep.mubr.bf16.mxu0 %v3328
  %4253 = vmatmul.mubr.bf16.gmra.mrb[0].mxu0 %v3327
  %v4254 = vpop.f32.mrb[0].mxu0
  %v4255 = vadd.f32 %v4062, %v4254
  %v4256 = vpop.f32.mrb[0].mxu0
  %v4257 = vadd.f32 %v4064, %v4256
  %v4258 = vpop.f32.mrb[0].mxu0
  %v4259 = vadd.f32 %v4066, %v4258
  %v4260 = vpop.f32.mrb[0].mxu0
  %v4261 = vadd.f32 %v4068, %v4260
  %4262 = vmatprep.mubr.bf16.mxu0 %v3330
  %4263 = vmatmul.mubr.bf16.gmra.mrb[0].mxu0 %v3329
  %v4264 = vpop.f32.mrb[0].mxu0
  %v4265 = vadd.f32 %v4072, %v4264
  %v4266 = vpop.f32.mrb[0].mxu0
  %v4267 = vadd.f32 %v4074, %v4266
  %v4268 = vpop.f32.mrb[0].mxu0
  %v4269 = vadd.f32 %v4076, %v4268
  %v4270 = vpop.f32.mrb[0].mxu0
  %v4271 = vadd.f32 %v4078, %v4270
  %4272 = vmatprep.mubr.bf16.mxu0 %v3332
  %4273 = vmatmul.mubr.bf16.gmra.mrb[0].mxu0 %v3331
  %v4274 = vpop.f32.mrb[0].mxu0
  %v4275 = vadd.f32 %v4082, %v4274
  %v4276 = vpop.f32.mrb[0].mxu0
  %v4277 = vadd.f32 %v4084, %v4276
  %v4278 = vpop.f32.mrb[0].mxu0
  %v4279 = vadd.f32 %v4086, %v4278
  %v4280 = vpop.f32.mrb[0].mxu0
  %v4281 = vadd.f32 %v4088, %v4280
  %4282 = vmatprep.mubr.bf16.mxu0 %v3334
  %4283 = vmatmul.mubr.bf16.gmra.mrb[0].mxu0 %v3333
  %v4284 = vpop.f32.mrb[0].mxu0
  %v4285 = vadd.f32 %v4092, %v4284
  %v4286 = vpop.f32.mrb[0].mxu0
  %v4287 = vadd.f32 %v4094, %v4286
  %v4288 = vpop.f32.mrb[0].mxu0
  %v4289 = vadd.f32 %v4096, %v4288
  %v4290 = vpop.f32.mrb[0].mxu0
  %v4291 = vadd.f32 %v4098, %v4290
  %4292 = vmatprep.mubr.bf16.mxu0 %v3336
  %4293 = vmatmul.mubr.bf16.gmra.mrb[0].mxu0 %v3335
  %v4294 = vpop.f32.mrb[0].mxu0
  %v4295 = vadd.f32 %v4102, %v4294
  %v4296 = vpop.f32.mrb[0].mxu0
  %v4297 = vadd.f32 %v4104, %v4296
  %v4298 = vpop.f32.mrb[0].mxu0
  %v4299 = vadd.f32 %v4106, %v4298
  %v4300 = vpop.f32.mrb[0].mxu0
  %v4301 = vadd.f32 %v4108, %v4300
  %4302 = vmatprep.mubr.bf16.mxu0 %v3338
  %4303 = vmatmul.mubr.bf16.gmra.mrb[0].mxu0 %v3337
  %v4304 = vpop.f32.mrb[0].mxu0
  %v4305 = vadd.f32 %v4112, %v4304
  %v4306 = vpop.f32.mrb[0].mxu0
  %v4307 = vadd.f32 %v4114, %v4306
  %v4308 = vpop.f32.mrb[0].mxu0
  %v4309 = vadd.f32 %v4116, %v4308
  %v4310 = vpop.f32.mrb[0].mxu0
  %v4311 = vadd.f32 %v4118, %v4310
  %4312 = vmatprep.mubr.bf16.mxu0 %v3340
  %4313 = vmatmul.mubr.bf16.gmra.mrb[0].mxu0 %v3339
  %v4314 = vpop.f32.mrb[0].mxu0
  %v4315 = vadd.f32 %v4122, %v4314
  %v4316 = vpop.f32.mrb[0].mxu0
  %v4317 = vadd.f32 %v4124, %v4316
  %v4318 = vpop.f32.mrb[0].mxu0
  %v4319 = vadd.f32 %v4126, %v4318
  %v4320 = vpop.f32.mrb[0].mxu0
  %v4321 = vadd.f32 %v4128, %v4320
  %4322 = vmatprep.mubr.bf16.mxu0 %v3342
  %4323 = vmatmul.mubr.bf16.gmra.mrb[0].mxu0 %v3341
  %v4324 = vpop.f32.mrb[0].mxu0
  %v4325 = vadd.f32 %v4132, %v4324
  %v4326 = vpop.f32.mrb[0].mxu0
  %v4327 = vadd.f32 %v4134, %v4326
  %v4328 = vpop.f32.mrb[0].mxu0
  %v4329 = vadd.f32 %v4136, %v4328
  %v4330 = vpop.f32.mrb[0].mxu0
  %v4331 = vadd.f32 %v4138, %v4330
  %4332 = vmatprep.mubr.bf16.mxu0 %v3344
  %4333 = vmatmul.mubr.bf16.gmra.mrb[0].mxu0 %v3343
  %v4334 = vpop.f32.mrb[0].mxu0
  %v4335 = vadd.f32 %v4142, %v4334
  %v4336 = vpop.f32.mrb[0].mxu0
  %v4337 = vadd.f32 %v4144, %v4336
  %v4338 = vpop.f32.mrb[0].mxu0
  %v4339 = vadd.f32 %v4146, %v4338
  %v4340 = vpop.f32.mrb[0].mxu0
  %v4341 = vadd.f32 %v4148, %v4340
  %4342 = vmatprep.mubr.bf16.mxu0 %v3346
  %4343 = vmatmul.mubr.bf16.gmra.mrb[0].mxu0 %v3345
  %v4344 = vpop.f32.mrb[0].mxu0
  %v4345 = vadd.f32 %v4152, %v4344
  %v4346 = vpop.f32.mrb[0].mxu0
  %v4347 = vadd.f32 %v4154, %v4346
  %v4348 = vpop.f32.mrb[0].mxu0
  %v4349 = vadd.f32 %v4156, %v4348
  %v4350 = vpop.f32.mrb[0].mxu0
  %v4351 = vadd.f32 %v4158, %v4350
  %4352 = vmatprep.mubr.bf16.mxu0 %v3348
  %4353 = vmatmul.mubr.bf16.gmra.mrb[0].mxu0 %v3347
  %v4354 = vpop.f32.mrb[0].mxu0
  %v4355 = vadd.f32 %v4162, %v4354
  %v4356 = vpop.f32.mrb[0].mxu0
  %v4357 = vadd.f32 %v4164, %v4356
  %v4358 = vpop.f32.mrb[0].mxu0
  %v4359 = vadd.f32 %v4166, %v4358
  %v4360 = vpop.f32.mrb[0].mxu0
  %v4361 = vadd.f32 %v4168, %v4360
  %4362 = vmatprep.mubr.bf16.mxu0 %v3350
  %4363 = vmatmul.mubr.bf16.gmra.mrb[0].mxu0 %v3349
  %v4364 = vpop.f32.mrb[0].mxu0
  %v4365 = vadd.f32 %v4172, %v4364
  %v4366 = vpop.f32.mrb[0].mxu0
  %v4367 = vadd.f32 %v4174, %v4366
  %v4368 = vpop.f32.mrb[0].mxu0
  %v4369 = vadd.f32 %v4176, %v4368
  %v4370 = vpop.f32.mrb[0].mxu0
  %v4371 = vadd.f32 %v4178, %v4370
  %4372 = vmatprep.mubr.bf16.mxu0 %v3352
  %4373 = vmatmul.mubr.bf16.gmra.mrb[0].mxu0 %v3351
  %v4374 = vpop.f32.mrb[0].mxu0
  %v4375 = vadd.f32 %v4182, %v4374
  %v4376 = vpop.f32.mrb[0].mxu0
  %v4377 = vadd.f32 %v4184, %v4376
  %v4378 = vpop.f32.mrb[0].mxu0
  %v4379 = vadd.f32 %v4186, %v4378
  %v4380 = vpop.f32.mrb[0].mxu0
  %v4381 = vadd.f32 %v4188, %v4380
  %4382 = vmatprep.mubr.bf16.mxu0 %v3354
  %4383 = vmatmul.mubr.bf16.gmra.mrb[0].mxu0 %v3353
  %v4384 = vpop.f32.mrb[0].mxu0
  %v4385 = vadd.f32 %v4192, %v4384
  %v4386 = vpop.f32.mrb[0].mxu0
  %v4387 = vadd.f32 %v4194, %v4386
  %v4388 = vpop.f32.mrb[0].mxu0
  %v4389 = vadd.f32 %v4196, %v4388
  %v4390 = vpop.f32.mrb[0].mxu0
  %v4391 = vadd.f32 %v4198, %v4390
  %4392 = vdwg.mxu0
  %4393 = vmatprep.subr.bf16.mxu0 %v3880
  %4394 = vmatpush1.bf16.msra.mxu0 %v3879
  %4395 = vmatprep.subr.bf16.mxu0 %v3882
  %4396 = vmatpush1.bf16.msra.mxu0 %v3881
  %4397 = vmatprep.subr.bf16.mxu0 %v3884
  %4398 = vmatpush1.bf16.msra.mxu0 %v3883
  %4399 = vmatprep.subr.bf16.mxu0 %v3886
  %4400 = vmatpush1.bf16.msra.mxu0 %v3885
  %4401 = vmatprep.subr.bf16.mxu0 %v3888
  %4402 = vmatpush1.bf16.msra.mxu0 %v3887
  %4403 = vmatprep.subr.bf16.mxu0 %v3890
  %4404 = vmatpush1.bf16.msra.mxu0 %v3889
  %4405 = vmatprep.subr.bf16.mxu0 %v3892
  %4406 = vmatpush1.bf16.msra.mxu0 %v3891
  %4407 = vmatprep.subr.bf16.mxu0 %v3894
  %4408 = vmatpush1.bf16.msra.mxu0 %v3893
  %4409 = vmatprep.subr.bf16.mxu0 %v3896
  %4410 = vmatpush1.bf16.msra.mxu0 %v3895
  %4411 = vmatprep.subr.bf16.mxu0 %v3898
  %4412 = vmatpush1.bf16.msra.mxu0 %v3897
  %4413 = vmatprep.subr.bf16.mxu0 %v3900
  %4414 = vmatpush1.bf16.msra.mxu0 %v3899
  %4415 = vmatprep.subr.bf16.mxu0 %v3902
  %4416 = vmatpush1.bf16.msra.mxu0 %v3901
  %4417 = vmatprep.subr.bf16.mxu0 %v3904
  %4418 = vmatpush1.bf16.msra.mxu0 %v3903
  %4419 = vmatprep.subr.bf16.mxu0 %v3906
  %4420 = vmatpush1.bf16.msra.mxu0 %v3905
  %4421 = vmatprep.subr.bf16.mxu0 %v3908
  %4422 = vmatpush1.bf16.msra.mxu0 %v3907
  %4423 = vmatprep.subr.bf16.mxu0 %v3910
  %4424 = vmatpush1.bf16.msra.mxu0 %v3909
  %4425 = vmatprep.mubr.bf16.mxu0 %v3388
  %4426 = vmatmul.mubr.bf16.gmra.mrb[0].mxu0 %v3387
  %v4427 = vpop.f32.mrb[0].mxu0
  %v4428 = vadd.f32 %v4235, %v4427
  %v4429 = vpop.f32.mrb[0].mxu0
  %v4430 = vadd.f32 %v4237, %v4429
  %v4431 = vpop.f32.mrb[0].mxu0
  %v4432 = vadd.f32 %v4239, %v4431
  %v4433 = vpop.f32.mrb[0].mxu0
  %v4434 = vadd.f32 %v4241, %v4433
  %4435 = vmatprep.mubr.bf16.mxu0 %v3390
  %4436 = vmatmul.mubr.bf16.gmra.mrb[0].mxu0 %v3389
  %v4437 = vpop.f32.mrb[0].mxu0
  %v4438 = vadd.f32 %v4245, %v4437
  %v4439 = vpop.f32.mrb[0].mxu0
  %v4440 = vadd.f32 %v4247, %v4439
  %v4441 = vpop.f32.mrb[0].mxu0
  %v4442 = vadd.f32 %v4249, %v4441
  %v4443 = vpop.f32.mrb[0].mxu0
  %v4444 = vadd.f32 %v4251, %v4443
  %4445 = vmatprep.mubr.bf16.mxu0 %v3392
  %4446 = vmatmul.mubr.bf16.gmra.mrb[0].mxu0 %v3391
  %v4447 = vpop.f32.mrb[0].mxu0
  %v4448 = vadd.f32 %v4255, %v4447
  %v4449 = vpop.f32.mrb[0].mxu0
  %v4450 = vadd.f32 %v4257, %v4449
  %v4451 = vpop.f32.mrb[0].mxu0
  %v4452 = vadd.f32 %v4259, %v4451
  %v4453 = vpop.f32.mrb[0].mxu0
  %v4454 = vadd.f32 %v4261, %v4453
  %4455 = vmatprep.mubr.bf16.mxu0 %v3394
  %4456 = vmatmul.mubr.bf16.gmra.mrb[0].mxu0 %v3393
  %v4457 = vpop.f32.mrb[0].mxu0
  %v4458 = vadd.f32 %v4265, %v4457
  %v4459 = vpop.f32.mrb[0].mxu0
  %v4460 = vadd.f32 %v4267, %v4459
  %v4461 = vpop.f32.mrb[0].mxu0
  %v4462 = vadd.f32 %v4269, %v4461
  %v4463 = vpop.f32.mrb[0].mxu0
  %v4464 = vadd.f32 %v4271, %v4463
  %4465 = vmatprep.mubr.bf16.mxu0 %v3396
  %4466 = vmatmul.mubr.bf16.gmra.mrb[0].mxu0 %v3395
  %v4467 = vpop.f32.mrb[0].mxu0
  %v4468 = vadd.f32 %v4275, %v4467
  %v4469 = vpop.f32.mrb[0].mxu0
  %v4470 = vadd.f32 %v4277, %v4469
  %v4471 = vpop.f32.mrb[0].mxu0
  %v4472 = vadd.f32 %v4279, %v4471
  %v4473 = vpop.f32.mrb[0].mxu0
  %v4474 = vadd.f32 %v4281, %v4473
  %4475 = vmatprep.mubr.bf16.mxu0 %v3398
  %4476 = vmatmul.mubr.bf16.gmra.mrb[0].mxu0 %v3397
  %v4477 = vpop.f32.mrb[0].mxu0
  %v4478 = vadd.f32 %v4285, %v4477
  %v4479 = vpop.f32.mrb[0].mxu0
  %v4480 = vadd.f32 %v4287, %v4479
  %v4481 = vpop.f32.mrb[0].mxu0
  %v4482 = vadd.f32 %v4289, %v4481
  %v4483 = vpop.f32.mrb[0].mxu0
  %v4484 = vadd.f32 %v4291, %v4483
  %4485 = vmatprep.mubr.bf16.mxu0 %v3400
  %4486 = vmatmul.mubr.bf16.gmra.mrb[0].mxu0 %v3399
  %v4487 = vpop.f32.mrb[0].mxu0
  %v4488 = vadd.f32 %v4295, %v4487
  %v4489 = vpop.f32.mrb[0].mxu0
  %v4490 = vadd.f32 %v4297, %v4489
  %v4491 = vpop.f32.mrb[0].mxu0
  %v4492 = vadd.f32 %v4299, %v4491
  %v4493 = vpop.f32.mrb[0].mxu0
  %v4494 = vadd.f32 %v4301, %v4493
  %4495 = vmatprep.mubr.bf16.mxu0 %v3402
  %4496 = vmatmul.mubr.bf16.gmra.mrb[0].mxu0 %v3401
  %v4497 = vpop.f32.mrb[0].mxu0
  %v4498 = vadd.f32 %v4305, %v4497
  %v4499 = vpop.f32.mrb[0].mxu0
  %v4500 = vadd.f32 %v4307, %v4499
  %v4501 = vpop.f32.mrb[0].mxu0
  %v4502 = vadd.f32 %v4309, %v4501
  %v4503 = vpop.f32.mrb[0].mxu0
  %v4504 = vadd.f32 %v4311, %v4503
  %4505 = vmatprep.mubr.bf16.mxu0 %v3404
  %4506 = vmatmul.mubr.bf16.gmra.mrb[0].mxu0 %v3403
  %v4507 = vpop.f32.mrb[0].mxu0
  %v4508 = vadd.f32 %v4315, %v4507
  %v4509 = vpop.f32.mrb[0].mxu0
  %v4510 = vadd.f32 %v4317, %v4509
  %v4511 = vpop.f32.mrb[0].mxu0
  %v4512 = vadd.f32 %v4319, %v4511
  %v4513 = vpop.f32.mrb[0].mxu0
  %v4514 = vadd.f32 %v4321, %v4513
  %4515 = vmatprep.mubr.bf16.mxu0 %v3406
  %4516 = vmatmul.mubr.bf16.gmra.mrb[0].mxu0 %v3405
  %v4517 = vpop.f32.mrb[0].mxu0
  %v4518 = vadd.f32 %v4325, %v4517
  %v4519 = vpop.f32.mrb[0].mxu0
  %v4520 = vadd.f32 %v4327, %v4519
  %v4521 = vpop.f32.mrb[0].mxu0
  %v4522 = vadd.f32 %v4329, %v4521
  %v4523 = vpop.f32.mrb[0].mxu0
  %v4524 = vadd.f32 %v4331, %v4523
  %4525 = vmatprep.mubr.bf16.mxu0 %v3408
  %4526 = vmatmul.mubr.bf16.gmra.mrb[0].mxu0 %v3407
  %v4527 = vpop.f32.mrb[0].mxu0
  %v4528 = vadd.f32 %v4335, %v4527
  %v4529 = vpop.f32.mrb[0].mxu0
  %v4530 = vadd.f32 %v4337, %v4529
  %v4531 = vpop.f32.mrb[0].mxu0
  %v4532 = vadd.f32 %v4339, %v4531
  %v4533 = vpop.f32.mrb[0].mxu0
  %v4534 = vadd.f32 %v4341, %v4533
  %4535 = vmatprep.mubr.bf16.mxu0 %v3410
  %4536 = vmatmul.mubr.bf16.gmra.mrb[0].mxu0 %v3409
  %v4537 = vpop.f32.mrb[0].mxu0
  %v4538 = vadd.f32 %v4345, %v4537
  %v4539 = vpop.f32.mrb[0].mxu0
  %v4540 = vadd.f32 %v4347, %v4539
  %v4541 = vpop.f32.mrb[0].mxu0
  %v4542 = vadd.f32 %v4349, %v4541
  %v4543 = vpop.f32.mrb[0].mxu0
  %v4544 = vadd.f32 %v4351, %v4543
  %4545 = vmatprep.mubr.bf16.mxu0 %v3412
  %4546 = vmatmul.mubr.bf16.gmra.mrb[0].mxu0 %v3411
  %v4547 = vpop.f32.mrb[0].mxu0
  %v4548 = vadd.f32 %v4355, %v4547
  %v4549 = vpop.f32.mrb[0].mxu0
  %v4550 = vadd.f32 %v4357, %v4549
  %v4551 = vpop.f32.mrb[0].mxu0
  %v4552 = vadd.f32 %v4359, %v4551
  %v4553 = vpop.f32.mrb[0].mxu0
  %v4554 = vadd.f32 %v4361, %v4553
  %4555 = vmatprep.mubr.bf16.mxu0 %v3414
  %4556 = vmatmul.mubr.bf16.gmra.mrb[0].mxu0 %v3413
  %v4557 = vpop.f32.mrb[0].mxu0
  %v4558 = vadd.f32 %v4365, %v4557
  %v4559 = vpop.f32.mrb[0].mxu0
  %v4560 = vadd.f32 %v4367, %v4559
  %v4561 = vpop.f32.mrb[0].mxu0
  %v4562 = vadd.f32 %v4369, %v4561
  %v4563 = vpop.f32.mrb[0].mxu0
  %v4564 = vadd.f32 %v4371, %v4563
  %4565 = vmatprep.mubr.bf16.mxu0 %v3416
  %4566 = vmatmul.mubr.bf16.gmra.mrb[0].mxu0 %v3415
  %v4567 = vpop.f32.mrb[0].mxu0
  %v4568 = vadd.f32 %v4375, %v4567
  %v4569 = vpop.f32.mrb[0].mxu0
  %v4570 = vadd.f32 %v4377, %v4569
  %v4571 = vpop.f32.mrb[0].mxu0
  %v4572 = vadd.f32 %v4379, %v4571
  %v4573 = vpop.f32.mrb[0].mxu0
  %v4574 = vadd.f32 %v4381, %v4573
  %4575 = vmatprep.mubr.bf16.mxu0 %v3418
  %4576 = vmatmul.mubr.bf16.gmra.mrb[0].mxu0 %v3417
  %v4577 = vpop.f32.mrb[0].mxu0
  %v4578 = vadd.f32 %v4385, %v4577
  %v4579 = vpop.f32.mrb[0].mxu0
  %v4580 = vadd.f32 %v4387, %v4579
  %v4581 = vpop.f32.mrb[0].mxu0
  %v4582 = vadd.f32 %v4389, %v4581
  %v4583 = vpop.f32.mrb[0].mxu0
  %v4584 = vadd.f32 %v4391, %v4583
  %4585 = vdwg.mxu0
  %v4586 = vmax.f32 %v4428, 0.0
  %v4587 = vmax.f32 %v4430, 0.0
  %v4588 = vmax.f32 %v4432, 0.0
  %v4589 = vmax.f32 %v4434, 0.0
  %v4590 = vmax.f32 %v4438, 0.0
  %v4591 = vmax.f32 %v4440, 0.0
  %v4592 = vmax.f32 %v4442, 0.0
  %v4593 = vmax.f32 %v4444, 0.0
  %v4594 = vmax.f32 %v4448, 0.0
  %v4595 = vmax.f32 %v4450, 0.0
  %v4596 = vmax.f32 %v4452, 0.0
  %v4597 = vmax.f32 %v4454, 0.0
  %v4598 = vmax.f32 %v4458, 0.0
  %v4599 = vmax.f32 %v4460, 0.0
  %v4600 = vmax.f32 %v4462, 0.0
  %v4601 = vmax.f32 %v4464, 0.0
  %v4602 = vmax.f32 %v4468, 0.0
  %v4603 = vmax.f32 %v4470, 0.0
  %v4604 = vmax.f32 %v4472, 0.0
  %v4605 = vmax.f32 %v4474, 0.0
  %v4606 = vmax.f32 %v4478, 0.0
  %v4607 = vmax.f32 %v4480, 0.0
  %v4608 = vmax.f32 %v4482, 0.0
  %v4609 = vmax.f32 %v4484, 0.0
  %v4610 = vmax.f32 %v4488, 0.0
  %v4611 = vmax.f32 %v4490, 0.0
  %v4612 = vmax.f32 %v4492, 0.0
  %v4613 = vmax.f32 %v4494, 0.0
  %v4614 = vmax.f32 %v4498, 0.0
  %v4615 = vmax.f32 %v4500, 0.0
  %v4616 = vmax.f32 %v4502, 0.0
  %v4617 = vmax.f32 %v4504, 0.0
  %v4618 = vmax.f32 %v4508, 0.0
  %v4619 = vmax.f32 %v4510, 0.0
  %v4620 = vmax.f32 %v4512, 0.0
  %v4621 = vmax.f32 %v4514, 0.0
  %v4622 = vmax.f32 %v4518, 0.0
  %v4623 = vmax.f32 %v4520, 0.0
  %v4624 = vmax.f32 %v4522, 0.0
  %v4625 = vmax.f32 %v4524, 0.0
  %v4626 = vmax.f32 %v4528, 0.0
  %v4627 = vmax.f32 %v4530, 0.0
  %v4628 = vmax.f32 %v4532, 0.0
  %v4629 = vmax.f32 %v4534, 0.0
  %v4630 = vmax.f32 %v4538, 0.0
  %v4631 = vmax.f32 %v4540, 0.0
  %v4632 = vmax.f32 %v4542, 0.0
  %v4633 = vmax.f32 %v4544, 0.0
  %v4634 = vmax.f32 %v4548, 0.0
  %v4635 = vmax.f32 %v4550, 0.0
  %v4636 = vmax.f32 %v4552, 0.0
  %v4637 = vmax.f32 %v4554, 0.0
  %v4638 = vmax.f32 %v4558, 0.0
  %v4639 = vmax.f32 %v4560, 0.0
  %v4640 = vmax.f32 %v4562, 0.0
  %v4641 = vmax.f32 %v4564, 0.0
  %v4642 = vmax.f32 %v4568, 0.0
  %v4643 = vmax.f32 %v4570, 0.0
  %v4644 = vmax.f32 %v4572, 0.0
  %v4645 = vmax.f32 %v4574, 0.0
  %v4646 = vmax.f32 %v4578, 0.0
  %v4647 = vmax.f32 %v4580, 0.0
  %v4648 = vmax.f32 %v4582, 0.0
  %v4649 = vmax.f32 %v4584, 0.0
  %v4650 = vadd.f32 %v4586, %v4590
  %v4651 = vadd.f32 %v4650, %v4594
  %v4652 = vadd.f32 %v4651, %v4598
  %v4653 = vadd.f32 %v4652, %v4602
  %v4654 = vadd.f32 %v4653, %v4606
  %v4655 = vadd.f32 %v4654, %v4610
  %v4656 = vadd.f32 %v4655, %v4614
  %v4657 = vadd.f32 %v4587, %v4591
  %v4658 = vadd.f32 %v4657, %v4595
  %v4659 = vadd.f32 %v4658, %v4599
  %v4660 = vadd.f32 %v4659, %v4603
  %v4661 = vadd.f32 %v4660, %v4607
  %v4662 = vadd.f32 %v4661, %v4611
  %v4663 = vadd.f32 %v4662, %v4615
  %v4664 = vadd.f32 %v4588, %v4592
  %v4665 = vadd.f32 %v4664, %v4596
  %v4666 = vadd.f32 %v4665, %v4600
  %v4667 = vadd.f32 %v4666, %v4604
  %v4668 = vadd.f32 %v4667, %v4608
  %v4669 = vadd.f32 %v4668, %v4612
  %v4670 = vadd.f32 %v4669, %v4616
  %v4671 = vadd.f32 %v4589, %v4593
  %v4672 = vadd.f32 %v4671, %v4597
  %v4673 = vadd.f32 %v4672, %v4601
  %v4674 = vadd.f32 %v4673, %v4605
  %v4675 = vadd.f32 %v4674, %v4609
  %v4676 = vadd.f32 %v4675, %v4613
  %v4677 = vadd.f32 %v4676, %v4617
  %v4678 = vadd.f32 %v4618, %v4622
  %v4679 = vadd.f32 %v4678, %v4626
  %v4680 = vadd.f32 %v4679, %v4630
  %v4681 = vadd.f32 %v4680, %v4634
  %v4682 = vadd.f32 %v4681, %v4638
  %v4683 = vadd.f32 %v4682, %v4642
  %v4684 = vadd.f32 %v4683, %v4646
  %v4685 = vadd.f32 %v4619, %v4623
  %v4686 = vadd.f32 %v4685, %v4627
  %v4687 = vadd.f32 %v4686, %v4631
  %v4688 = vadd.f32 %v4687, %v4635
  %v4689 = vadd.f32 %v4688, %v4639
  %v4690 = vadd.f32 %v4689, %v4643
  %v4691 = vadd.f32 %v4690, %v4647
  %v4692 = vadd.f32 %v4620, %v4624
  %v4693 = vadd.f32 %v4692, %v4628
  %v4694 = vadd.f32 %v4693, %v4632
  %v4695 = vadd.f32 %v4694, %v4636
  %v4696 = vadd.f32 %v4695, %v4640
  %v4697 = vadd.f32 %v4696, %v4644
  %v4698 = vadd.f32 %v4697, %v4648
  %v4699 = vadd.f32 %v4621, %v4625
  %v4700 = vadd.f32 %v4699, %v4629
  %v4701 = vadd.f32 %v4700, %v4633
  %v4702 = vadd.f32 %v4701, %v4637
  %v4703 = vadd.f32 %v4702, %v4641
  %v4704 = vadd.f32 %v4703, %v4645
  %v4705 = vadd.f32 %v4704, %v4649
  %4706 = vst [vmem:[%s16] sm:$0xff] %v4656
  %4707 = vst [vmem:[%s16 + $0x8] sm:$0xff] %v4663
  %4708 = vst [vmem:[%s16 + $0x10] sm:$0xff] %v4670
  %4709 = vst [vmem:[%s16 + $0x18] sm:$0xff] %v4677
  %4710 = vst [vmem:[%s16 + $0x20] sm:$0xff] %v4684
  %4711 = vst [vmem:[%s16 + $0x28] sm:$0xff] %v4691
  %4712 = vst [vmem:[%s16 + $0x30] sm:$0xff] %v4698
  %4713 = vst [vmem:[%s16 + $0x38] sm:$0xff] %v4705
  // Predicated region
  $region66: #{stgcn_pallas.1} parent=0 // pred_check
    _
  $region67: #{stgcn_pallas.1} parent=0 // pred_check_branch
    %4715 = sbr.rel (0) target = $region69
  $region68: #{stgcn_pallas.1} parent=0 // pred_region
    _
  $region69: #{stgcn_pallas.1} parent=0 // pred_fallthru
    _
  // Predicated region
  $region70: #{stgcn_pallas.1} parent=0 // pred_check
    _
  $region71: #{stgcn_pallas.1} parent=0 // pred_check_branch
    %4717 = sbr.rel (0) target = $region73
  $region72: #{stgcn_pallas.1} parent=0 // pred_region
    _
  $region73: #{stgcn_pallas.1} parent=0 // pred_fallthru
    _

</llo_original>
